<compile_context>
chip_gen: v7x
topology: tpu7x:2x2x1
jax: 0.10.0
libtpu: 0.0.40
codegen_flags: <defaults>
</compile_context>

<pallas_src>
import math
import functools

import jax
import jax.numpy as jnp
from jax import lax
from jax.experimental import pallas as pl
from jax.experimental.pallas import tpu as pltpu

NUM_MIND_STATES = 25

# ---------------- small GPT-2-style config ----------------
BASE_VOCAB = 100
VOCAB = BASE_VOCAB + NUM_MIND_STATES        # resize_token_embeddings(len(tokenizer))
VOCAB_PAD = 128                             # lane-dense logits; sliced back in glue
N_EMBD = 32
N_HEAD = 4
HEAD_DIM = N_EMBD // N_HEAD
N_LAYER = 2
N_POS = 16
BATCH = 2
SEQ = 8
LN_EPS = 1e-5

_VMEM = pl.BlockSpec(memory_space=pltpu.MemorySpace.VMEM)
_PARAMS_PER_BLOCK = 12


# ---------------- the single fused kernel ----------------
def _fused_gpt2_kernel(*refs, B, S):
    """refs = (ids, wte_pad, wte_T_pad, wpe, lnf_g, lnf_b, *block_params, logits_out)."""
    ids_ref, wte_ref, wteT_ref, wpe_ref, lnf_g_ref, lnf_b_ref = refs[:6]
    out_ref = refs[-1]
    blk_refs = refs[6:-1]

    BS = B * S
    f32 = jnp.float32
    bf16 = jnp.bfloat16

    def ln(x, g_ref, b_ref):
        mu = jnp.mean(x, axis=-1, keepdims=True)
        var = jnp.mean((x - mu) ** 2, axis=-1, keepdims=True)
        return (x - mu) * lax.rsqrt(var + LN_EPS) * g_ref[...] + b_ref[...]

    # ---- embeddings: in-kernel gather via one-hot @ wte (MXU), no HBM gather ----
    ids = ids_ref[...]                                              # (BS, 1) int32
    vocab_iota = lax.broadcasted_iota(jnp.int32, (BS, VOCAB_PAD), 1)
    one_hot = (vocab_iota == ids).astype(f32)                       # (BS, VOCAB_PAD)
    h = jnp.dot(one_hot, wte_ref[...], preferred_element_type=f32)  # (BS, E)
    pos = wpe_ref[0:S, :]                                           # (S, E)
    h = h + jnp.concatenate([pos] * B, axis=0)                      # broadcast over batch

    # hoisted constants (built once, reused by every layer)
    scale = f32(1.0 / math.sqrt(HEAD_DIM))
    qi = lax.broadcasted_iota(jnp.int32, (S, S), 0)
    ki = lax.broadcasted_iota(jnp.int32, (S, S), 1)
    causal = ki <= qi
    gelu_c = f32(math.sqrt(2.0 / math.pi))

    for l in range(N_LAYER):
        (ln1_g, ln1_b, attn_w, attn_b, proj_w, proj_b,
         ln2_g, ln2_b, fc_w, fc_b, fcp_w, fcp_b) = \
            blk_refs[l * _PARAMS_PER_BLOCK:(l + 1) * _PARAMS_PER_BLOCK]

        # ---- attention sub-block ----
        x = ln(h, ln1_g, ln1_b)
        qkv = jnp.dot(x.astype(bf16), attn_w[...],
                      preferred_element_type=f32) + attn_b[...]      # (BS, 3E) f32
        ctx_rows = []
        for b in range(B):
            r0 = b * S
            heads = []
            for hd in range(N_HEAD):
                c0 = hd * HEAD_DIM
                q = (qkv[r0:r0 + S, c0:c0 + HEAD_DIM] * scale).astype(bf16)
                k = qkv[r0:r0 + S, N_EMBD + c0:N_EMBD + c0 + HEAD_DIM].astype(bf16)
                v = qkv[r0:r0 + S, 2 * N_EMBD + c0:2 * N_EMBD + c0 + HEAD_DIM].astype(bf16)
                # q @ k^T with f32 accumulation (scores / mask / softmax stay f32)
                s_bh = lax.dot_general(q, k, (((1,), (1,)), ((), ())),
                                       preferred_element_type=f32)    # (S, S)
                s_bh = jnp.where(causal, s_bh, f32(-1e9))
                s_bh = s_bh - jnp.max(s_bh, axis=-1, keepdims=True)
                p = jnp.exp(s_bh)
                inv = pl.reciprocal(jnp.sum(p, axis=-1, keepdims=True), approx=True)
                p = p * inv
                heads.append(jnp.dot(p.astype(bf16), v,
                                     preferred_element_type=f32))     # (S, Dh)
            ctx_rows.append(jnp.concatenate(heads, axis=1))            # (S, E)
        ctx = jnp.concatenate(ctx_rows, axis=0)                        # (BS, E)
        h = h + (jnp.dot(ctx.astype(bf16), proj_w[...],
                         preferred_element_type=f32) + proj_b[...])

        # ---- MLP sub-block ----
        x2 = ln(h, ln2_g, ln2_b)
        ff = jnp.dot(x2.astype(bf16), fc_w[...],
                     preferred_element_type=f32) + fc_b[...]           # (BS, 4E)
        # GPT-2 "gelu_new" (tanh approximation), f32 on the EUP
        ff = 0.5 * ff * (1.0 + jnp.tanh(gelu_c * (ff + 0.044715 * ff * ff * ff)))
        h = h + (jnp.dot(ff.astype(bf16), fcp_w[...],
                         preferred_element_type=f32) + fcp_b[...])

    hf = ln(h, lnf_g_ref, lnf_b_ref)
    # weight-tied lm_head: logits = hf @ wte^T, lane-padded to 128 (unmasked vst)
    out_ref[...] = jnp.dot(hf.astype(bf16), wteT_ref[...],
                           preferred_element_type=f32)


# ---------------- forward (thin glue around the single pallas_call) ----------------
def gpt2_forward(params, input_ids):
    B, S = input_ids.shape
    ids = input_ids.astype(jnp.int32).reshape(B * S, 1)
    fused = params["fused"]
    logits_pad = pl.pallas_call(
        functools.partial(_fused_gpt2_kernel, B=B, S=S),
        out_shape=jax.ShapeDtypeStruct((B * S, VOCAB_PAD), jnp.float32),
        in_specs=[_VMEM] * (1 + len(fused)),
        out_specs=_VMEM,
    )(ids, *fused)
    # drop the 3 padded logit lanes before anything downstream sees them
    return logits_pad[:, :VOCAB].reshape(B, S, VOCAB)


# ---------------- parameter init (deterministic, synthetic) ----------------
def _build_fused_inputs(params):
    """Pack params once into kernel-ready layout: 128-lane-padded (pre-transposed)
    wte, bf16 matmul weights, (1, E) gains/biases.  Built at init, not per call."""
    def row(v):
        return v.reshape(1, -1)

    wte_pad = jnp.zeros((VOCAB_PAD, N_EMBD), jnp.float32).at[:VOCAB].set(params["wte"])
    fused = [
        wte_pad,                                  # f32 for the embedding one-hot matmul
        wte_pad.T.astype(jnp.bfloat16),           # (E, VOCAB_PAD) tied lm_head weight
        params["wpe"],
        row(params["lnf_g"]), row(params["lnf_b"]),
    ]
    for blk in params["blocks"]:
        fused += [
            row(blk["ln1_g"]), row(blk["ln1_b"]),
            blk["attn_w"].astype(jnp.bfloat16), row(blk["attn_b"]),
            blk["proj_w"].astype(jnp.bfloat16), row(blk["proj_b"]),
            row(blk["ln2_g"]), row(blk["ln2_b"]),
            blk["fc_w"].astype(jnp.bfloat16), row(blk["fc_b"]),
            blk["fcp_w"].astype(jnp.bfloat16), row(blk["fcp_b"]),
        ]
    return tuple(fused)


def init_params(key):
    keys = iter(jax.random.split(key, 4 + N_LAYER * 4))

    def nrm(k, shape, std=0.02):
        return jax.random.normal(k, shape, jnp.float32) * std

    params = {}
    wte = nrm(next(keys), (VOCAB, N_EMBD))
    # Mimic: wte.weight.data[mind_state_token_ids] = randn(25, n_embd) * 0.02
    mind_ids = jnp.arange(BASE_VOCAB, BASE_VOCAB + NUM_MIND_STATES)
    wte = wte.at[mind_ids].set(nrm(next(keys), (NUM_MIND_STATES, N_EMBD)))
    params["wte"] = wte
    params["wpe"] = nrm(next(keys), (N_POS, N_EMBD), std=0.01)

    blocks = []
    for _ in range(N_LAYER):
        blocks.append(dict(
            ln1_g=jnp.ones((N_EMBD,), jnp.float32),
            ln1_b=jnp.zeros((N_EMBD,), jnp.float32),
            attn_w=nrm(next(keys), (N_EMBD, 3 * N_EMBD)),      # GPT-2 Conv1D: (in, out)
            attn_b=jnp.zeros((3 * N_EMBD,), jnp.float32),
            proj_w=nrm(next(keys), (N_EMBD, N_EMBD)),
            proj_b=jnp.zeros((N_EMBD,), jnp.float32),
            ln2_g=jnp.ones((N_EMBD,), jnp.float32),
            ln2_b=jnp.zeros((N_EMBD,), jnp.float32),
            fc_w=nrm(next(keys), (N_EMBD, 4 * N_EMBD)),
            fc_b=jnp.zeros((4 * N_EMBD,), jnp.float32),
            fcp_w=nrm(next(keys), (4 * N_EMBD, N_EMBD)),
            fcp_b=jnp.zeros((N_EMBD,), jnp.float32),
        ))
    params["blocks"] = blocks
    params["lnf_g"] = jnp.ones((N_EMBD,), jnp.float32)
    params["lnf_b"] = jnp.zeros((N_EMBD,), jnp.float32)
    params["mind_state_token_ids"] = mind_ids
    params["fused"] = _build_fused_inputs(params)
    return params


def get_mind_state_embedding(params, mind_state_idx):
    token_id = params["mind_state_token_ids"][mind_state_idx]
    return params["wte"][token_id]


if __name__ == "__main__":
    key = jax.random.PRNGKey(0)
    pkey, dkey = jax.random.split(key)
    params = init_params(pkey)

    input_ids = jax.random.randint(dkey, (BATCH, SEQ), 0, VOCAB, dtype=jnp.int32)

    logits = jax.jit(gpt2_forward)(params, input_ids)
    logits = jax.block_until_ready(logits)

    assert logits.shape == (BATCH, SEQ, VOCAB), logits.shape
    assert bool(jnp.all(jnp.isfinite(logits)))

    ms_emb = jax.block_until_ready(get_mind_state_embedding(params, 3))
    assert ms_emb.shape == (N_EMBD,)

    print("KERNEL_OK")
</pallas_src>

<mosaic_0001>
module attributes {stable_mosaic.version = 11 : i64} {
  func.func @_fused_gpt2_kernel(%arg0: memref<16x1xi32, #tpu.memory_space<vmem>>, %arg1: memref<128x32xf32, #tpu.memory_space<vmem>>, %arg2: memref<32x128xbf16, #tpu.memory_space<vmem>>, %arg3: memref<16x32xf32, #tpu.memory_space<vmem>>, %arg4: memref<1x32xf32, #tpu.memory_space<vmem>>, %arg5: memref<1x32xf32, #tpu.memory_space<vmem>>, %arg6: memref<1x32xf32, #tpu.memory_space<vmem>>, %arg7: memref<1x32xf32, #tpu.memory_space<vmem>>, %arg8: memref<32x96xbf16, #tpu.memory_space<vmem>>, %arg9: memref<1x96xf32, #tpu.memory_space<vmem>>, %arg10: memref<32x32xbf16, #tpu.memory_space<vmem>>, %arg11: memref<1x32xf32, #tpu.memory_space<vmem>>, %arg12: memref<1x32xf32, #tpu.memory_space<vmem>>, %arg13: memref<1x32xf32, #tpu.memory_space<vmem>>, %arg14: memref<32x128xbf16, #tpu.memory_space<vmem>>, %arg15: memref<1x128xf32, #tpu.memory_space<vmem>>, %arg16: memref<128x32xbf16, #tpu.memory_space<vmem>>, %arg17: memref<1x32xf32, #tpu.memory_space<vmem>>, %arg18: memref<1x32xf32, #tpu.memory_space<vmem>>, %arg19: memref<1x32xf32, #tpu.memory_space<vmem>>, %arg20: memref<32x96xbf16, #tpu.memory_space<vmem>>, %arg21: memref<1x96xf32, #tpu.memory_space<vmem>>, %arg22: memref<32x32xbf16, #tpu.memory_space<vmem>>, %arg23: memref<1x32xf32, #tpu.memory_space<vmem>>, %arg24: memref<1x32xf32, #tpu.memory_space<vmem>>, %arg25: memref<1x32xf32, #tpu.memory_space<vmem>>, %arg26: memref<32x128xbf16, #tpu.memory_space<vmem>>, %arg27: memref<1x128xf32, #tpu.memory_space<vmem>>, %arg28: memref<128x32xbf16, #tpu.memory_space<vmem>>, %arg29: memref<1x32xf32, #tpu.memory_space<vmem>>, %arg30: memref<16x128xf32, #tpu.memory_space<vmem>>) attributes {dimension_semantics = [], scalar_prefetch = 0 : i64, scratch_operands = 0 : i64, tpu.core_type = #tpu.core_type<tc>} {
    %c0 = arith.constant 0 : index
    %c0_0 = arith.constant 0 : index
    %0 = vector.load %arg0[%c0, %c0_0] : memref<16x1xi32, #tpu.memory_space<vmem>>, vector<16x1xi32>
    %1 = tpu.iota {dimensions = array<i32: 1>} : vector<16x128xi32>
    %2 = vector.broadcast %0 : vector<16x1xi32> to vector<16x128xi32>
    %3 = arith.cmpi eq, %1, %2 : vector<16x128xi32>
    %4 = arith.extui %3 : vector<16x128xi1> to vector<16x128xi32>
    %5 = arith.sitofp %4 : vector<16x128xi32> to vector<16x128xf32>
    %c0_1 = arith.constant 0 : index
    %c0_2 = arith.constant 0 : index
    %6 = vector.load %arg1[%c0_1, %c0_2] : memref<128x32xf32, #tpu.memory_space<vmem>>, vector<128x32xf32>
    %cst = arith.constant dense<0.000000e+00> : vector<16x32xf32>
    %7 = tpu.matmul %5, %6, %cst {dimension_numbers = #tpu.dot_dimension_numbers<[1], [0], [0], [1], [0, 0, 1, 1], [], []>} : vector<16x128xf32>, vector<128x32xf32>, vector<16x32xf32> -> vector<16x32xf32>
    %c0_3 = arith.constant 0 : index
    %c0_4 = arith.constant 0 : index
    %8 = vector.load %arg3[%c0_3, %c0_4] : memref<16x32xf32, #tpu.memory_space<vmem>>, vector<8x32xf32>
    %9 = tpu.concatenate %8, %8 in 0 : vector<8x32xf32>, vector<8x32xf32> -> vector<16x32xf32>
    %10 = arith.addf %7, %9 : vector<16x32xf32>
    %11 = tpu.iota {dimensions = array<i32: 0>} : vector<8x8xi32>
    %12 = tpu.iota {dimensions = array<i32: 1>} : vector<8x8xi32>
    %13 = arith.cmpi sle, %12, %11 : vector<8x8xi32>
    %cst_5 = arith.constant dense<0.000000e+00> : vector<16xf32>
    %14 = vector.multi_reduction <add>, %10, %cst_5 [1] : vector<16x32xf32> to vector<16xf32>
    %15 = vector.shape_cast %14 : vector<16xf32> to vector<16x1xf32>
    %cst_6 = arith.constant 3.200000e+01 : f32
    %16 = vector.broadcast %cst_6 : f32 to vector<16x1xf32>
    %17 = arith.divf %15, %16 : vector<16x1xf32>
    %18 = vector.broadcast %17 : vector<16x1xf32> to vector<16x32xf32>
    %19 = arith.subf %10, %18 : vector<16x32xf32>
    %20 = arith.mulf %19, %19 : vector<16x32xf32>
    %cst_7 = arith.constant dense<0.000000e+00> : vector<16xf32>
    %21 = vector.multi_reduction <add>, %20, %cst_7 [1] : vector<16x32xf32> to vector<16xf32>
    %22 = vector.shape_cast %21 : vector<16xf32> to vector<16x1xf32>
    %cst_8 = arith.constant 3.200000e+01 : f32
    %23 = vector.broadcast %cst_8 : f32 to vector<16x1xf32>
    %24 = arith.divf %22, %23 : vector<16x1xf32>
    %25 = vector.broadcast %17 : vector<16x1xf32> to vector<16x32xf32>
    %26 = arith.subf %10, %25 : vector<16x32xf32>
    %cst_9 = arith.constant 9.99999974E-6 : f32
    %27 = vector.broadcast %cst_9 : f32 to vector<16x1xf32>
    %28 = arith.addf %24, %27 : vector<16x1xf32>
    %29 = math.rsqrt %28 : vector<16x1xf32>
    %30 = vector.broadcast %29 : vector<16x1xf32> to vector<16x32xf32>
    %31 = arith.mulf %26, %30 : vector<16x32xf32>
    %c0_10 = arith.constant 0 : index
    %c0_11 = arith.constant 0 : index
    %32 = vector.load %arg6[%c0_10, %c0_11] : memref<1x32xf32, #tpu.memory_space<vmem>>, vector<1x32xf32>
    %33 = vector.broadcast %32 : vector<1x32xf32> to vector<16x32xf32>
    %34 = arith.mulf %31, %33 : vector<16x32xf32>
    %c0_12 = arith.constant 0 : index
    %c0_13 = arith.constant 0 : index
    %35 = vector.load %arg7[%c0_12, %c0_13] : memref<1x32xf32, #tpu.memory_space<vmem>>, vector<1x32xf32>
    %36 = vector.broadcast %35 : vector<1x32xf32> to vector<16x32xf32>
    %37 = arith.addf %34, %36 : vector<16x32xf32>
    %38 = arith.truncf %37 : vector<16x32xf32> to vector<16x32xbf16>
    %c0_14 = arith.constant 0 : index
    %c0_15 = arith.constant 0 : index
    %39 = vector.load %arg8[%c0_14, %c0_15] : memref<32x96xbf16, #tpu.memory_space<vmem>>, vector<32x96xbf16>
    %cst_16 = arith.constant dense<0.000000e+00> : vector<16x96xf32>
    %40 = tpu.matmul %38, %39, %cst_16 {dimension_numbers = #tpu.dot_dimension_numbers<[1], [0], [0], [1], [0, 0, 1, 1], [], []>} : vector<16x32xbf16>, vector<32x96xbf16>, vector<16x96xf32> -> vector<16x96xf32>
    %c0_17 = arith.constant 0 : index
    %c0_18 = arith.constant 0 : index
    %41 = vector.load %arg9[%c0_17, %c0_18] : memref<1x96xf32, #tpu.memory_space<vmem>>, vector<1x96xf32>
    %42 = vector.broadcast %41 : vector<1x96xf32> to vector<16x96xf32>
    %43 = arith.addf %40, %42 : vector<16x96xf32>
    %44 = vector.extract_strided_slice %43 {offsets = [0, 0], sizes = [8, 8], strides = [1, 1]} : vector<16x96xf32> to vector<8x8xf32>
    %cst_19 = arith.constant 0.353553385 : f32
    %45 = vector.broadcast %cst_19 : f32 to vector<8x8xf32>
    %46 = arith.mulf %44, %45 : vector<8x8xf32>
    %47 = arith.truncf %46 : vector<8x8xf32> to vector<8x8xbf16>
    %48 = vector.extract_strided_slice %43 {offsets = [0, 32], sizes = [8, 8], strides = [1, 1]} : vector<16x96xf32> to vector<8x8xf32>
    %49 = arith.truncf %48 : vector<8x8xf32> to vector<8x8xbf16>
    %50 = vector.extract_strided_slice %43 {offsets = [0, 64], sizes = [8, 8], strides = [1, 1]} : vector<16x96xf32> to vector<8x8xf32>
    %51 = arith.truncf %50 : vector<8x8xf32> to vector<8x8xbf16>
    %cst_20 = arith.constant dense<0.000000e+00> : vector<8x8xf32>
    %52 = tpu.matmul %47, %49, %cst_20 {dimension_numbers = #tpu.dot_dimension_numbers<[1], [1], [0], [0], [0, 0, 1, 0], [], []>} : vector<8x8xbf16>, vector<8x8xbf16>, vector<8x8xf32> -> vector<8x8xf32>
    %cst_21 = arith.constant -1.000000e+09 : f32
    %53 = vector.broadcast %cst_21 : f32 to vector<8x8xf32>
    %54 = arith.select %13, %52, %53 : vector<8x8xi1>, vector<8x8xf32>
    %cst_22 = arith.constant dense<0xFF800000> : vector<8xf32>
    %55 = vector.multi_reduction <maximumf>, %54, %cst_22 [1] : vector<8x8xf32> to vector<8xf32>
    %56 = vector.shape_cast %55 : vector<8xf32> to vector<8x1xf32>
    %57 = vector.broadcast %56 : vector<8x1xf32> to vector<8x8xf32>
    %58 = arith.subf %54, %57 : vector<8x8xf32>
    %59 = math.exp %58 : vector<8x8xf32>
    %cst_23 = arith.constant dense<0.000000e+00> : vector<8xf32>
    %60 = vector.multi_reduction <add>, %59, %cst_23 [1] : vector<8x8xf32> to vector<8xf32>
    %61 = vector.shape_cast %60 : vector<8xf32> to vector<8x1xf32>
    %62 = tpu.reciprocal %61 {approx = true} : vector<8x1xf32> -> vector<8x1xf32>
    %63 = vector.broadcast %62 : vector<8x1xf32> to vector<8x8xf32>
    %64 = arith.mulf %59, %63 : vector<8x8xf32>
    %65 = arith.truncf %64 : vector<8x8xf32> to vector<8x8xbf16>
    %cst_24 = arith.constant dense<0.000000e+00> : vector<8x8xf32>
    %66 = tpu.matmul %65, %51, %cst_24 {dimension_numbers = #tpu.dot_dimension_numbers<[1], [0], [0], [1], [0, 0, 1, 1], [], []>} : vector<8x8xbf16>, vector<8x8xbf16>, vector<8x8xf32> -> vector<8x8xf32>
    %67 = vector.extract_strided_slice %43 {offsets = [0, 8], sizes = [8, 8], strides = [1, 1]} : vector<16x96xf32> to vector<8x8xf32>
    %cst_25 = arith.constant 0.353553385 : f32
    %68 = vector.broadcast %cst_25 : f32 to vector<8x8xf32>
    %69 = arith.mulf %67, %68 : vector<8x8xf32>
    %70 = arith.truncf %69 : vector<8x8xf32> to vector<8x8xbf16>
    %71 = vector.extract_strided_slice %43 {offsets = [0, 40], sizes = [8, 8], strides = [1, 1]} : vector<16x96xf32> to vector<8x8xf32>
    %72 = arith.truncf %71 : vector<8x8xf32> to vector<8x8xbf16>
    %73 = vector.extract_strided_slice %43 {offsets = [0, 72], sizes = [8, 8], strides = [1, 1]} : vector<16x96xf32> to vector<8x8xf32>
    %74 = arith.truncf %73 : vector<8x8xf32> to vector<8x8xbf16>
    %cst_26 = arith.constant dense<0.000000e+00> : vector<8x8xf32>
    %75 = tpu.matmul %70, %72, %cst_26 {dimension_numbers = #tpu.dot_dimension_numbers<[1], [1], [0], [0], [0, 0, 1, 0], [], []>} : vector<8x8xbf16>, vector<8x8xbf16>, vector<8x8xf32> -> vector<8x8xf32>
    %cst_27 = arith.constant -1.000000e+09 : f32
    %76 = vector.broadcast %cst_27 : f32 to vector<8x8xf32>
    %77 = arith.select %13, %75, %76 : vector<8x8xi1>, vector<8x8xf32>
    %cst_28 = arith.constant dense<0xFF800000> : vector<8xf32>
    %78 = vector.multi_reduction <maximumf>, %77, %cst_28 [1] : vector<8x8xf32> to vector<8xf32>
    %79 = vector.shape_cast %78 : vector<8xf32> to vector<8x1xf32>
    %80 = vector.broadcast %79 : vector<8x1xf32> to vector<8x8xf32>
    %81 = arith.subf %77, %80 : vector<8x8xf32>
    %82 = math.exp %81 : vector<8x8xf32>
    %cst_29 = arith.constant dense<0.000000e+00> : vector<8xf32>
    %83 = vector.multi_reduction <add>, %82, %cst_29 [1] : vector<8x8xf32> to vector<8xf32>
    %84 = vector.shape_cast %83 : vector<8xf32> to vector<8x1xf32>
    %85 = tpu.reciprocal %84 {approx = true} : vector<8x1xf32> -> vector<8x1xf32>
    %86 = vector.broadcast %85 : vector<8x1xf32> to vector<8x8xf32>
    %87 = arith.mulf %82, %86 : vector<8x8xf32>
    %88 = arith.truncf %87 : vector<8x8xf32> to vector<8x8xbf16>
    %cst_30 = arith.constant dense<0.000000e+00> : vector<8x8xf32>
    %89 = tpu.matmul %88, %74, %cst_30 {dimension_numbers = #tpu.dot_dimension_numbers<[1], [0], [0], [1], [0, 0, 1, 1], [], []>} : vector<8x8xbf16>, vector<8x8xbf16>, vector<8x8xf32> -> vector<8x8xf32>
    %90 = vector.extract_strided_slice %43 {offsets = [0, 16], sizes = [8, 8], strides = [1, 1]} : vector<16x96xf32> to vector<8x8xf32>
    %cst_31 = arith.constant 0.353553385 : f32
    %91 = vector.broadcast %cst_31 : f32 to vector<8x8xf32>
    %92 = arith.mulf %90, %91 : vector<8x8xf32>
    %93 = arith.truncf %92 : vector<8x8xf32> to vector<8x8xbf16>
    %94 = vector.extract_strided_slice %43 {offsets = [0, 48], sizes = [8, 8], strides = [1, 1]} : vector<16x96xf32> to vector<8x8xf32>
    %95 = arith.truncf %94 : vector<8x8xf32> to vector<8x8xbf16>
    %96 = vector.extract_strided_slice %43 {offsets = [0, 80], sizes = [8, 8], strides = [1, 1]} : vector<16x96xf32> to vector<8x8xf32>
    %97 = arith.truncf %96 : vector<8x8xf32> to vector<8x8xbf16>
    %cst_32 = arith.constant dense<0.000000e+00> : vector<8x8xf32>
    %98 = tpu.matmul %93, %95, %cst_32 {dimension_numbers = #tpu.dot_dimension_numbers<[1], [1], [0], [0], [0, 0, 1, 0], [], []>} : vector<8x8xbf16>, vector<8x8xbf16>, vector<8x8xf32> -> vector<8x8xf32>
    %cst_33 = arith.constant -1.000000e+09 : f32
    %99 = vector.broadcast %cst_33 : f32 to vector<8x8xf32>
    %100 = arith.select %13, %98, %99 : vector<8x8xi1>, vector<8x8xf32>
    %cst_34 = arith.constant dense<0xFF800000> : vector<8xf32>
    %101 = vector.multi_reduction <maximumf>, %100, %cst_34 [1] : vector<8x8xf32> to vector<8xf32>
    %102 = vector.shape_cast %101 : vector<8xf32> to vector<8x1xf32>
    %103 = vector.broadcast %102 : vector<8x1xf32> to vector<8x8xf32>
    %104 = arith.subf %100, %103 : vector<8x8xf32>
    %105 = math.exp %104 : vector<8x8xf32>
    %cst_35 = arith.constant dense<0.000000e+00> : vector<8xf32>
    %106 = vector.multi_reduction <add>, %105, %cst_35 [1] : vector<8x8xf32> to vector<8xf32>
    %107 = vector.shape_cast %106 : vector<8xf32> to vector<8x1xf32>
    %108 = tpu.reciprocal %107 {approx = true} : vector<8x1xf32> -> vector<8x1xf32>
    %109 = vector.broadcast %108 : vector<8x1xf32> to vector<8x8xf32>
    %110 = arith.mulf %105, %109 : vector<8x8xf32>
    %111 = arith.truncf %110 : vector<8x8xf32> to vector<8x8xbf16>
    %cst_36 = arith.constant dense<0.000000e+00> : vector<8x8xf32>
    %112 = tpu.matmul %111, %97, %cst_36 {dimension_numbers = #tpu.dot_dimension_numbers<[1], [0], [0], [1], [0, 0, 1, 1], [], []>} : vector<8x8xbf16>, vector<8x8xbf16>, vector<8x8xf32> -> vector<8x8xf32>
    %113 = vector.extract_strided_slice %43 {offsets = [0, 24], sizes = [8, 8], strides = [1, 1]} : vector<16x96xf32> to vector<8x8xf32>
    %cst_37 = arith.constant 0.353553385 : f32
    %114 = vector.broadcast %cst_37 : f32 to vector<8x8xf32>
    %115 = arith.mulf %113, %114 : vector<8x8xf32>
    %116 = arith.truncf %115 : vector<8x8xf32> to vector<8x8xbf16>
    %117 = vector.extract_strided_slice %43 {offsets = [0, 56], sizes = [8, 8], strides = [1, 1]} : vector<16x96xf32> to vector<8x8xf32>
    %118 = arith.truncf %117 : vector<8x8xf32> to vector<8x8xbf16>
    %119 = vector.extract_strided_slice %43 {offsets = [0, 88], sizes = [8, 8], strides = [1, 1]} : vector<16x96xf32> to vector<8x8xf32>
    %120 = arith.truncf %119 : vector<8x8xf32> to vector<8x8xbf16>
    %cst_38 = arith.constant dense<0.000000e+00> : vector<8x8xf32>
    %121 = tpu.matmul %116, %118, %cst_38 {dimension_numbers = #tpu.dot_dimension_numbers<[1], [1], [0], [0], [0, 0, 1, 0], [], []>} : vector<8x8xbf16>, vector<8x8xbf16>, vector<8x8xf32> -> vector<8x8xf32>
    %cst_39 = arith.constant -1.000000e+09 : f32
    %122 = vector.broadcast %cst_39 : f32 to vector<8x8xf32>
    %123 = arith.select %13, %121, %122 : vector<8x8xi1>, vector<8x8xf32>
    %cst_40 = arith.constant dense<0xFF800000> : vector<8xf32>
    %124 = vector.multi_reduction <maximumf>, %123, %cst_40 [1] : vector<8x8xf32> to vector<8xf32>
    %125 = vector.shape_cast %124 : vector<8xf32> to vector<8x1xf32>
    %126 = vector.broadcast %125 : vector<8x1xf32> to vector<8x8xf32>
    %127 = arith.subf %123, %126 : vector<8x8xf32>
    %128 = math.exp %127 : vector<8x8xf32>
    %cst_41 = arith.constant dense<0.000000e+00> : vector<8xf32>
    %129 = vector.multi_reduction <add>, %128, %cst_41 [1] : vector<8x8xf32> to vector<8xf32>
    %130 = vector.shape_cast %129 : vector<8xf32> to vector<8x1xf32>
    %131 = tpu.reciprocal %130 {approx = true} : vector<8x1xf32> -> vector<8x1xf32>
    %132 = vector.broadcast %131 : vector<8x1xf32> to vector<8x8xf32>
    %133 = arith.mulf %128, %132 : vector<8x8xf32>
    %134 = arith.truncf %133 : vector<8x8xf32> to vector<8x8xbf16>
    %cst_42 = arith.constant dense<0.000000e+00> : vector<8x8xf32>
    %135 = tpu.matmul %134, %120, %cst_42 {dimension_numbers = #tpu.dot_dimension_numbers<[1], [0], [0], [1], [0, 0, 1, 1], [], []>} : vector<8x8xbf16>, vector<8x8xbf16>, vector<8x8xf32> -> vector<8x8xf32>
    %136 = tpu.concatenate %66, %89, %112, %135 in 1 : vector<8x8xf32>, vector<8x8xf32>, vector<8x8xf32>, vector<8x8xf32> -> vector<8x32xf32>
    %137 = vector.extract_strided_slice %43 {offsets = [8, 0], sizes = [8, 8], strides = [1, 1]} : vector<16x96xf32> to vector<8x8xf32>
    %cst_43 = arith.constant 0.353553385 : f32
    %138 = vector.broadcast %cst_43 : f32 to vector<8x8xf32>
    %139 = arith.mulf %137, %138 : vector<8x8xf32>
    %140 = arith.truncf %139 : vector<8x8xf32> to vector<8x8xbf16>
    %141 = vector.extract_strided_slice %43 {offsets = [8, 32], sizes = [8, 8], strides = [1, 1]} : vector<16x96xf32> to vector<8x8xf32>
    %142 = arith.truncf %141 : vector<8x8xf32> to vector<8x8xbf16>
    %143 = vector.extract_strided_slice %43 {offsets = [8, 64], sizes = [8, 8], strides = [1, 1]} : vector<16x96xf32> to vector<8x8xf32>
    %144 = arith.truncf %143 : vector<8x8xf32> to vector<8x8xbf16>
    %cst_44 = arith.constant dense<0.000000e+00> : vector<8x8xf32>
    %145 = tpu.matmul %140, %142, %cst_44 {dimension_numbers = #tpu.dot_dimension_numbers<[1], [1], [0], [0], [0, 0, 1, 0], [], []>} : vector<8x8xbf16>, vector<8x8xbf16>, vector<8x8xf32> -> vector<8x8xf32>
    %cst_45 = arith.constant -1.000000e+09 : f32
    %146 = vector.broadcast %cst_45 : f32 to vector<8x8xf32>
    %147 = arith.select %13, %145, %146 : vector<8x8xi1>, vector<8x8xf32>
    %cst_46 = arith.constant dense<0xFF800000> : vector<8xf32>
    %148 = vector.multi_reduction <maximumf>, %147, %cst_46 [1] : vector<8x8xf32> to vector<8xf32>
    %149 = vector.shape_cast %148 : vector<8xf32> to vector<8x1xf32>
    %150 = vector.broadcast %149 : vector<8x1xf32> to vector<8x8xf32>
    %151 = arith.subf %147, %150 : vector<8x8xf32>
    %152 = math.exp %151 : vector<8x8xf32>
    %cst_47 = arith.constant dense<0.000000e+00> : vector<8xf32>
    %153 = vector.multi_reduction <add>, %152, %cst_47 [1] : vector<8x8xf32> to vector<8xf32>
    %154 = vector.shape_cast %153 : vector<8xf32> to vector<8x1xf32>
    %155 = tpu.reciprocal %154 {approx = true} : vector<8x1xf32> -> vector<8x1xf32>
    %156 = vector.broadcast %155 : vector<8x1xf32> to vector<8x8xf32>
    %157 = arith.mulf %152, %156 : vector<8x8xf32>
    %158 = arith.truncf %157 : vector<8x8xf32> to vector<8x8xbf16>
    %cst_48 = arith.constant dense<0.000000e+00> : vector<8x8xf32>
    %159 = tpu.matmul %158, %144, %cst_48 {dimension_numbers = #tpu.dot_dimension_numbers<[1], [0], [0], [1], [0, 0, 1, 1], [], []>} : vector<8x8xbf16>, vector<8x8xbf16>, vector<8x8xf32> -> vector<8x8xf32>
    %160 = vector.extract_strided_slice %43 {offsets = [8, 8], sizes = [8, 8], strides = [1, 1]} : vector<16x96xf32> to vector<8x8xf32>
    %cst_49 = arith.constant 0.353553385 : f32
    %161 = vector.broadcast %cst_49 : f32 to vector<8x8xf32>
    %162 = arith.mulf %160, %161 : vector<8x8xf32>
    %163 = arith.truncf %162 : vector<8x8xf32> to vector<8x8xbf16>
    %164 = vector.extract_strided_slice %43 {offsets = [8, 40], sizes = [8, 8], strides = [1, 1]} : vector<16x96xf32> to vector<8x8xf32>
    %165 = arith.truncf %164 : vector<8x8xf32> to vector<8x8xbf16>
    %166 = vector.extract_strided_slice %43 {offsets = [8, 72], sizes = [8, 8], strides = [1, 1]} : vector<16x96xf32> to vector<8x8xf32>
    %167 = arith.truncf %166 : vector<8x8xf32> to vector<8x8xbf16>
    %cst_50 = arith.constant dense<0.000000e+00> : vector<8x8xf32>
    %168 = tpu.matmul %163, %165, %cst_50 {dimension_numbers = #tpu.dot_dimension_numbers<[1], [1], [0], [0], [0, 0, 1, 0], [], []>} : vector<8x8xbf16>, vector<8x8xbf16>, vector<8x8xf32> -> vector<8x8xf32>
    %cst_51 = arith.constant -1.000000e+09 : f32
    %169 = vector.broadcast %cst_51 : f32 to vector<8x8xf32>
    %170 = arith.select %13, %168, %169 : vector<8x8xi1>, vector<8x8xf32>
    %cst_52 = arith.constant dense<0xFF800000> : vector<8xf32>
    %171 = vector.multi_reduction <maximumf>, %170, %cst_52 [1] : vector<8x8xf32> to vector<8xf32>
    %172 = vector.shape_cast %171 : vector<8xf32> to vector<8x1xf32>
    %173 = vector.broadcast %172 : vector<8x1xf32> to vector<8x8xf32>
    %174 = arith.subf %170, %173 : vector<8x8xf32>
    %175 = math.exp %174 : vector<8x8xf32>
    %cst_53 = arith.constant dense<0.000000e+00> : vector<8xf32>
    %176 = vector.multi_reduction <add>, %175, %cst_53 [1] : vector<8x8xf32> to vector<8xf32>
    %177 = vector.shape_cast %176 : vector<8xf32> to vector<8x1xf32>
    %178 = tpu.reciprocal %177 {approx = true} : vector<8x1xf32> -> vector<8x1xf32>
    %179 = vector.broadcast %178 : vector<8x1xf32> to vector<8x8xf32>
    %180 = arith.mulf %175, %179 : vector<8x8xf32>
    %181 = arith.truncf %180 : vector<8x8xf32> to vector<8x8xbf16>
    %cst_54 = arith.constant dense<0.000000e+00> : vector<8x8xf32>
    %182 = tpu.matmul %181, %167, %cst_54 {dimension_numbers = #tpu.dot_dimension_numbers<[1], [0], [0], [1], [0, 0, 1, 1], [], []>} : vector<8x8xbf16>, vector<8x8xbf16>, vector<8x8xf32> -> vector<8x8xf32>
    %183 = vector.extract_strided_slice %43 {offsets = [8, 16], sizes = [8, 8], strides = [1, 1]} : vector<16x96xf32> to vector<8x8xf32>
    %cst_55 = arith.constant 0.353553385 : f32
    %184 = vector.broadcast %cst_55 : f32 to vector<8x8xf32>
    %185 = arith.mulf %183, %184 : vector<8x8xf32>
    %186 = arith.truncf %185 : vector<8x8xf32> to vector<8x8xbf16>
    %187 = vector.extract_strided_slice %43 {offsets = [8, 48], sizes = [8, 8], strides = [1, 1]} : vector<16x96xf32> to vector<8x8xf32>
    %188 = arith.truncf %187 : vector<8x8xf32> to vector<8x8xbf16>
    %189 = vector.extract_strided_slice %43 {offsets = [8, 80], sizes = [8, 8], strides = [1, 1]} : vector<16x96xf32> to vector<8x8xf32>
    %190 = arith.truncf %189 : vector<8x8xf32> to vector<8x8xbf16>
    %cst_56 = arith.constant dense<0.000000e+00> : vector<8x8xf32>
    %191 = tpu.matmul %186, %188, %cst_56 {dimension_numbers = #tpu.dot_dimension_numbers<[1], [1], [0], [0], [0, 0, 1, 0], [], []>} : vector<8x8xbf16>, vector<8x8xbf16>, vector<8x8xf32> -> vector<8x8xf32>
    %cst_57 = arith.constant -1.000000e+09 : f32
    %192 = vector.broadcast %cst_57 : f32 to vector<8x8xf32>
    %193 = arith.select %13, %191, %192 : vector<8x8xi1>, vector<8x8xf32>
    %cst_58 = arith.constant dense<0xFF800000> : vector<8xf32>
    %194 = vector.multi_reduction <maximumf>, %193, %cst_58 [1] : vector<8x8xf32> to vector<8xf32>
    %195 = vector.shape_cast %194 : vector<8xf32> to vector<8x1xf32>
    %196 = vector.broadcast %195 : vector<8x1xf32> to vector<8x8xf32>
    %197 = arith.subf %193, %196 : vector<8x8xf32>
    %198 = math.exp %197 : vector<8x8xf32>
    %cst_59 = arith.constant dense<0.000000e+00> : vector<8xf32>
    %199 = vector.multi_reduction <add>, %198, %cst_59 [1] : vector<8x8xf32> to vector<8xf32>
    %200 = vector.shape_cast %199 : vector<8xf32> to vector<8x1xf32>
    %201 = tpu.reciprocal %200 {approx = true} : vector<8x1xf32> -> vector<8x1xf32>
    %202 = vector.broadcast %201 : vector<8x1xf32> to vector<8x8xf32>
    %203 = arith.mulf %198, %202 : vector<8x8xf32>
    %204 = arith.truncf %203 : vector<8x8xf32> to vector<8x8xbf16>
    %cst_60 = arith.constant dense<0.000000e+00> : vector<8x8xf32>
    %205 = tpu.matmul %204, %190, %cst_60 {dimension_numbers = #tpu.dot_dimension_numbers<[1], [0], [0], [1], [0, 0, 1, 1], [], []>} : vector<8x8xbf16>, vector<8x8xbf16>, vector<8x8xf32> -> vector<8x8xf32>
    %206 = vector.extract_strided_slice %43 {offsets = [8, 24], sizes = [8, 8], strides = [1, 1]} : vector<16x96xf32> to vector<8x8xf32>
    %cst_61 = arith.constant 0.353553385 : f32
    %207 = vector.broadcast %cst_61 : f32 to vector<8x8xf32>
    %208 = arith.mulf %206, %207 : vector<8x8xf32>
    %209 = arith.truncf %208 : vector<8x8xf32> to vector<8x8xbf16>
    %210 = vector.extract_strided_slice %43 {offsets = [8, 56], sizes = [8, 8], strides = [1, 1]} : vector<16x96xf32> to vector<8x8xf32>
    %211 = arith.truncf %210 : vector<8x8xf32> to vector<8x8xbf16>
    %212 = vector.extract_strided_slice %43 {offsets = [8, 88], sizes = [8, 8], strides = [1, 1]} : vector<16x96xf32> to vector<8x8xf32>
    %213 = arith.truncf %212 : vector<8x8xf32> to vector<8x8xbf16>
    %cst_62 = arith.constant dense<0.000000e+00> : vector<8x8xf32>
    %214 = tpu.matmul %209, %211, %cst_62 {dimension_numbers = #tpu.dot_dimension_numbers<[1], [1], [0], [0], [0, 0, 1, 0], [], []>} : vector<8x8xbf16>, vector<8x8xbf16>, vector<8x8xf32> -> vector<8x8xf32>
    %cst_63 = arith.constant -1.000000e+09 : f32
    %215 = vector.broadcast %cst_63 : f32 to vector<8x8xf32>
    %216 = arith.select %13, %214, %215 : vector<8x8xi1>, vector<8x8xf32>
    %cst_64 = arith.constant dense<0xFF800000> : vector<8xf32>
    %217 = vector.multi_reduction <maximumf>, %216, %cst_64 [1] : vector<8x8xf32> to vector<8xf32>
    %218 = vector.shape_cast %217 : vector<8xf32> to vector<8x1xf32>
    %219 = vector.broadcast %218 : vector<8x1xf32> to vector<8x8xf32>
    %220 = arith.subf %216, %219 : vector<8x8xf32>
    %221 = math.exp %220 : vector<8x8xf32>
    %cst_65 = arith.constant dense<0.000000e+00> : vector<8xf32>
    %222 = vector.multi_reduction <add>, %221, %cst_65 [1] : vector<8x8xf32> to vector<8xf32>
    %223 = vector.shape_cast %222 : vector<8xf32> to vector<8x1xf32>
    %224 = tpu.reciprocal %223 {approx = true} : vector<8x1xf32> -> vector<8x1xf32>
    %225 = vector.broadcast %224 : vector<8x1xf32> to vector<8x8xf32>
    %226 = arith.mulf %221, %225 : vector<8x8xf32>
    %227 = arith.truncf %226 : vector<8x8xf32> to vector<8x8xbf16>
    %cst_66 = arith.constant dense<0.000000e+00> : vector<8x8xf32>
    %228 = tpu.matmul %227, %213, %cst_66 {dimension_numbers = #tpu.dot_dimension_numbers<[1], [0], [0], [1], [0, 0, 1, 1], [], []>} : vector<8x8xbf16>, vector<8x8xbf16>, vector<8x8xf32> -> vector<8x8xf32>
    %229 = tpu.concatenate %159, %182, %205, %228 in 1 : vector<8x8xf32>, vector<8x8xf32>, vector<8x8xf32>, vector<8x8xf32> -> vector<8x32xf32>
    %230 = tpu.concatenate %136, %229 in 0 : vector<8x32xf32>, vector<8x32xf32> -> vector<16x32xf32>
    %231 = arith.truncf %230 : vector<16x32xf32> to vector<16x32xbf16>
    %c0_67 = arith.constant 0 : index
    %c0_68 = arith.constant 0 : index
    %232 = vector.load %arg10[%c0_67, %c0_68] : memref<32x32xbf16, #tpu.memory_space<vmem>>, vector<32x32xbf16>
    %cst_69 = arith.constant dense<0.000000e+00> : vector<16x32xf32>
    %233 = tpu.matmul %231, %232, %cst_69 {dimension_numbers = #tpu.dot_dimension_numbers<[1], [0], [0], [1], [0, 0, 1, 1], [], []>} : vector<16x32xbf16>, vector<32x32xbf16>, vector<16x32xf32> -> vector<16x32xf32>
    %c0_70 = arith.constant 0 : index
    %c0_71 = arith.constant 0 : index
    %234 = vector.load %arg11[%c0_70, %c0_71] : memref<1x32xf32, #tpu.memory_space<vmem>>, vector<1x32xf32>
    %235 = vector.broadcast %234 : vector<1x32xf32> to vector<16x32xf32>
    %236 = arith.addf %233, %235 : vector<16x32xf32>
    %237 = arith.addf %10, %236 : vector<16x32xf32>
    %cst_72 = arith.constant dense<0.000000e+00> : vector<16xf32>
    %238 = vector.multi_reduction <add>, %237, %cst_72 [1] : vector<16x32xf32> to vector<16xf32>
    %239 = vector.shape_cast %238 : vector<16xf32> to vector<16x1xf32>
    %cst_73 = arith.constant 3.200000e+01 : f32
    %240 = vector.broadcast %cst_73 : f32 to vector<16x1xf32>
    %241 = arith.divf %239, %240 : vector<16x1xf32>
    %242 = vector.broadcast %241 : vector<16x1xf32> to vector<16x32xf32>
    %243 = arith.subf %237, %242 : vector<16x32xf32>
    %244 = arith.mulf %243, %243 : vector<16x32xf32>
    %cst_74 = arith.constant dense<0.000000e+00> : vector<16xf32>
    %245 = vector.multi_reduction <add>, %244, %cst_74 [1] : vector<16x32xf32> to vector<16xf32>
    %246 = vector.shape_cast %245 : vector<16xf32> to vector<16x1xf32>
    %cst_75 = arith.constant 3.200000e+01 : f32
    %247 = vector.broadcast %cst_75 : f32 to vector<16x1xf32>
    %248 = arith.divf %246, %247 : vector<16x1xf32>
    %249 = vector.broadcast %241 : vector<16x1xf32> to vector<16x32xf32>
    %250 = arith.subf %237, %249 : vector<16x32xf32>
    %cst_76 = arith.constant 9.99999974E-6 : f32
    %251 = vector.broadcast %cst_76 : f32 to vector<16x1xf32>
    %252 = arith.addf %248, %251 : vector<16x1xf32>
    %253 = math.rsqrt %252 : vector<16x1xf32>
    %254 = vector.broadcast %253 : vector<16x1xf32> to vector<16x32xf32>
    %255 = arith.mulf %250, %254 : vector<16x32xf32>
    %c0_77 = arith.constant 0 : index
    %c0_78 = arith.constant 0 : index
    %256 = vector.load %arg12[%c0_77, %c0_78] : memref<1x32xf32, #tpu.memory_space<vmem>>, vector<1x32xf32>
    %257 = vector.broadcast %256 : vector<1x32xf32> to vector<16x32xf32>
    %258 = arith.mulf %255, %257 : vector<16x32xf32>
    %c0_79 = arith.constant 0 : index
    %c0_80 = arith.constant 0 : index
    %259 = vector.load %arg13[%c0_79, %c0_80] : memref<1x32xf32, #tpu.memory_space<vmem>>, vector<1x32xf32>
    %260 = vector.broadcast %259 : vector<1x32xf32> to vector<16x32xf32>
    %261 = arith.addf %258, %260 : vector<16x32xf32>
    %262 = arith.truncf %261 : vector<16x32xf32> to vector<16x32xbf16>
    %c0_81 = arith.constant 0 : index
    %c0_82 = arith.constant 0 : index
    %263 = vector.load %arg14[%c0_81, %c0_82] : memref<32x128xbf16, #tpu.memory_space<vmem>>, vector<32x128xbf16>
    %cst_83 = arith.constant dense<0.000000e+00> : vector<16x128xf32>
    %264 = tpu.matmul %262, %263, %cst_83 {dimension_numbers = #tpu.dot_dimension_numbers<[1], [0], [0], [1], [0, 0, 1, 1], [], []>} : vector<16x32xbf16>, vector<32x128xbf16>, vector<16x128xf32> -> vector<16x128xf32>
    %c0_84 = arith.constant 0 : index
    %c0_85 = arith.constant 0 : index
    %265 = vector.load %arg15[%c0_84, %c0_85] : memref<1x128xf32, #tpu.memory_space<vmem>>, vector<1x128xf32>
    %266 = vector.broadcast %265 : vector<1x128xf32> to vector<16x128xf32>
    %267 = arith.addf %264, %266 : vector<16x128xf32>
    %cst_86 = arith.constant 5.000000e-01 : f32
    %268 = vector.broadcast %cst_86 : f32 to vector<16x128xf32>
    %269 = arith.mulf %268, %267 : vector<16x128xf32>
    %cst_87 = arith.constant 4.471500e-02 : f32
    %270 = vector.broadcast %cst_87 : f32 to vector<16x128xf32>
    %271 = arith.mulf %270, %267 : vector<16x128xf32>
    %272 = arith.mulf %271, %267 : vector<16x128xf32>
    %273 = arith.mulf %272, %267 : vector<16x128xf32>
    %274 = arith.addf %267, %273 : vector<16x128xf32>
    %cst_88 = arith.constant 0.797884583 : f32
    %275 = vector.broadcast %cst_88 : f32 to vector<16x128xf32>
    %276 = arith.mulf %275, %274 : vector<16x128xf32>
    %277 = math.tanh %276 : vector<16x128xf32>
    %cst_89 = arith.constant 1.000000e+00 : f32
    %278 = vector.broadcast %cst_89 : f32 to vector<16x128xf32>
    %279 = arith.addf %278, %277 : vector<16x128xf32>
    %280 = arith.mulf %269, %279 : vector<16x128xf32>
    %281 = arith.truncf %280 : vector<16x128xf32> to vector<16x128xbf16>
    %c0_90 = arith.constant 0 : index
    %c0_91 = arith.constant 0 : index
    %282 = vector.load %arg16[%c0_90, %c0_91] : memref<128x32xbf16, #tpu.memory_space<vmem>>, vector<128x32xbf16>
    %cst_92 = arith.constant dense<0.000000e+00> : vector<16x32xf32>
    %283 = tpu.matmul %281, %282, %cst_92 {dimension_numbers = #tpu.dot_dimension_numbers<[1], [0], [0], [1], [0, 0, 1, 1], [], []>} : vector<16x128xbf16>, vector<128x32xbf16>, vector<16x32xf32> -> vector<16x32xf32>
    %c0_93 = arith.constant 0 : index
    %c0_94 = arith.constant 0 : index
    %284 = vector.load %arg17[%c0_93, %c0_94] : memref<1x32xf32, #tpu.memory_space<vmem>>, vector<1x32xf32>
    %285 = vector.broadcast %284 : vector<1x32xf32> to vector<16x32xf32>
    %286 = arith.addf %283, %285 : vector<16x32xf32>
    %287 = arith.addf %237, %286 : vector<16x32xf32>
    %cst_95 = arith.constant dense<0.000000e+00> : vector<16xf32>
    %288 = vector.multi_reduction <add>, %287, %cst_95 [1] : vector<16x32xf32> to vector<16xf32>
    %289 = vector.shape_cast %288 : vector<16xf32> to vector<16x1xf32>
    %cst_96 = arith.constant 3.200000e+01 : f32
    %290 = vector.broadcast %cst_96 : f32 to vector<16x1xf32>
    %291 = arith.divf %289, %290 : vector<16x1xf32>
    %292 = vector.broadcast %291 : vector<16x1xf32> to vector<16x32xf32>
    %293 = arith.subf %287, %292 : vector<16x32xf32>
    %294 = arith.mulf %293, %293 : vector<16x32xf32>
    %cst_97 = arith.constant dense<0.000000e+00> : vector<16xf32>
    %295 = vector.multi_reduction <add>, %294, %cst_97 [1] : vector<16x32xf32> to vector<16xf32>
    %296 = vector.shape_cast %295 : vector<16xf32> to vector<16x1xf32>
    %cst_98 = arith.constant 3.200000e+01 : f32
    %297 = vector.broadcast %cst_98 : f32 to vector<16x1xf32>
    %298 = arith.divf %296, %297 : vector<16x1xf32>
    %299 = vector.broadcast %291 : vector<16x1xf32> to vector<16x32xf32>
    %300 = arith.subf %287, %299 : vector<16x32xf32>
    %cst_99 = arith.constant 9.99999974E-6 : f32
    %301 = vector.broadcast %cst_99 : f32 to vector<16x1xf32>
    %302 = arith.addf %298, %301 : vector<16x1xf32>
    %303 = math.rsqrt %302 : vector<16x1xf32>
    %304 = vector.broadcast %303 : vector<16x1xf32> to vector<16x32xf32>
    %305 = arith.mulf %300, %304 : vector<16x32xf32>
    %c0_100 = arith.constant 0 : index
    %c0_101 = arith.constant 0 : index
    %306 = vector.load %arg18[%c0_100, %c0_101] : memref<1x32xf32, #tpu.memory_space<vmem>>, vector<1x32xf32>
    %307 = vector.broadcast %306 : vector<1x32xf32> to vector<16x32xf32>
    %308 = arith.mulf %305, %307 : vector<16x32xf32>
    %c0_102 = arith.constant 0 : index
    %c0_103 = arith.constant 0 : index
    %309 = vector.load %arg19[%c0_102, %c0_103] : memref<1x32xf32, #tpu.memory_space<vmem>>, vector<1x32xf32>
    %310 = vector.broadcast %309 : vector<1x32xf32> to vector<16x32xf32>
    %311 = arith.addf %308, %310 : vector<16x32xf32>
    %312 = arith.truncf %311 : vector<16x32xf32> to vector<16x32xbf16>
    %c0_104 = arith.constant 0 : index
    %c0_105 = arith.constant 0 : index
    %313 = vector.load %arg20[%c0_104, %c0_105] : memref<32x96xbf16, #tpu.memory_space<vmem>>, vector<32x96xbf16>
    %cst_106 = arith.constant dense<0.000000e+00> : vector<16x96xf32>
    %314 = tpu.matmul %312, %313, %cst_106 {dimension_numbers = #tpu.dot_dimension_numbers<[1], [0], [0], [1], [0, 0, 1, 1], [], []>} : vector<16x32xbf16>, vector<32x96xbf16>, vector<16x96xf32> -> vector<16x96xf32>
    %c0_107 = arith.constant 0 : index
    %c0_108 = arith.constant 0 : index
    %315 = vector.load %arg21[%c0_107, %c0_108] : memref<1x96xf32, #tpu.memory_space<vmem>>, vector<1x96xf32>
    %316 = vector.broadcast %315 : vector<1x96xf32> to vector<16x96xf32>
    %317 = arith.addf %314, %316 : vector<16x96xf32>
    %318 = vector.extract_strided_slice %317 {offsets = [0, 0], sizes = [8, 8], strides = [1, 1]} : vector<16x96xf32> to vector<8x8xf32>
    %cst_109 = arith.constant 0.353553385 : f32
    %319 = vector.broadcast %cst_109 : f32 to vector<8x8xf32>
    %320 = arith.mulf %318, %319 : vector<8x8xf32>
    %321 = arith.truncf %320 : vector<8x8xf32> to vector<8x8xbf16>
    %322 = vector.extract_strided_slice %317 {offsets = [0, 32], sizes = [8, 8], strides = [1, 1]} : vector<16x96xf32> to vector<8x8xf32>
    %323 = arith.truncf %322 : vector<8x8xf32> to vector<8x8xbf16>
    %324 = vector.extract_strided_slice %317 {offsets = [0, 64], sizes = [8, 8], strides = [1, 1]} : vector<16x96xf32> to vector<8x8xf32>
    %325 = arith.truncf %324 : vector<8x8xf32> to vector<8x8xbf16>
    %cst_110 = arith.constant dense<0.000000e+00> : vector<8x8xf32>
    %326 = tpu.matmul %321, %323, %cst_110 {dimension_numbers = #tpu.dot_dimension_numbers<[1], [1], [0], [0], [0, 0, 1, 0], [], []>} : vector<8x8xbf16>, vector<8x8xbf16>, vector<8x8xf32> -> vector<8x8xf32>
    %cst_111 = arith.constant -1.000000e+09 : f32
    %327 = vector.broadcast %cst_111 : f32 to vector<8x8xf32>
    %328 = arith.select %13, %326, %327 : vector<8x8xi1>, vector<8x8xf32>
    %cst_112 = arith.constant dense<0xFF800000> : vector<8xf32>
    %329 = vector.multi_reduction <maximumf>, %328, %cst_112 [1] : vector<8x8xf32> to vector<8xf32>
    %330 = vector.shape_cast %329 : vector<8xf32> to vector<8x1xf32>
    %331 = vector.broadcast %330 : vector<8x1xf32> to vector<8x8xf32>
    %332 = arith.subf %328, %331 : vector<8x8xf32>
    %333 = math.exp %332 : vector<8x8xf32>
    %cst_113 = arith.constant dense<0.000000e+00> : vector<8xf32>
    %334 = vector.multi_reduction <add>, %333, %cst_113 [1] : vector<8x8xf32> to vector<8xf32>
    %335 = vector.shape_cast %334 : vector<8xf32> to vector<8x1xf32>
    %336 = tpu.reciprocal %335 {approx = true} : vector<8x1xf32> -> vector<8x1xf32>
    %337 = vector.broadcast %336 : vector<8x1xf32> to vector<8x8xf32>
    %338 = arith.mulf %333, %337 : vector<8x8xf32>
    %339 = arith.truncf %338 : vector<8x8xf32> to vector<8x8xbf16>
    %cst_114 = arith.constant dense<0.000000e+00> : vector<8x8xf32>
    %340 = tpu.matmul %339, %325, %cst_114 {dimension_numbers = #tpu.dot_dimension_numbers<[1], [0], [0], [1], [0, 0, 1, 1], [], []>} : vector<8x8xbf16>, vector<8x8xbf16>, vector<8x8xf32> -> vector<8x8xf32>
    %341 = vector.extract_strided_slice %317 {offsets = [0, 8], sizes = [8, 8], strides = [1, 1]} : vector<16x96xf32> to vector<8x8xf32>
    %cst_115 = arith.constant 0.353553385 : f32
    %342 = vector.broadcast %cst_115 : f32 to vector<8x8xf32>
    %343 = arith.mulf %341, %342 : vector<8x8xf32>
    %344 = arith.truncf %343 : vector<8x8xf32> to vector<8x8xbf16>
    %345 = vector.extract_strided_slice %317 {offsets = [0, 40], sizes = [8, 8], strides = [1, 1]} : vector<16x96xf32> to vector<8x8xf32>
    %346 = arith.truncf %345 : vector<8x8xf32> to vector<8x8xbf16>
    %347 = vector.extract_strided_slice %317 {offsets = [0, 72], sizes = [8, 8], strides = [1, 1]} : vector<16x96xf32> to vector<8x8xf32>
    %348 = arith.truncf %347 : vector<8x8xf32> to vector<8x8xbf16>
    %cst_116 = arith.constant dense<0.000000e+00> : vector<8x8xf32>
    %349 = tpu.matmul %344, %346, %cst_116 {dimension_numbers = #tpu.dot_dimension_numbers<[1], [1], [0], [0], [0, 0, 1, 0], [], []>} : vector<8x8xbf16>, vector<8x8xbf16>, vector<8x8xf32> -> vector<8x8xf32>
    %cst_117 = arith.constant -1.000000e+09 : f32
    %350 = vector.broadcast %cst_117 : f32 to vector<8x8xf32>
    %351 = arith.select %13, %349, %350 : vector<8x8xi1>, vector<8x8xf32>
    %cst_118 = arith.constant dense<0xFF800000> : vector<8xf32>
    %352 = vector.multi_reduction <maximumf>, %351, %cst_118 [1] : vector<8x8xf32> to vector<8xf32>
    %353 = vector.shape_cast %352 : vector<8xf32> to vector<8x1xf32>
    %354 = vector.broadcast %353 : vector<8x1xf32> to vector<8x8xf32>
    %355 = arith.subf %351, %354 : vector<8x8xf32>
    %356 = math.exp %355 : vector<8x8xf32>
    %cst_119 = arith.constant dense<0.000000e+00> : vector<8xf32>
    %357 = vector.multi_reduction <add>, %356, %cst_119 [1] : vector<8x8xf32> to vector<8xf32>
    %358 = vector.shape_cast %357 : vector<8xf32> to vector<8x1xf32>
    %359 = tpu.reciprocal %358 {approx = true} : vector<8x1xf32> -> vector<8x1xf32>
    %360 = vector.broadcast %359 : vector<8x1xf32> to vector<8x8xf32>
    %361 = arith.mulf %356, %360 : vector<8x8xf32>
    %362 = arith.truncf %361 : vector<8x8xf32> to vector<8x8xbf16>
    %cst_120 = arith.constant dense<0.000000e+00> : vector<8x8xf32>
    %363 = tpu.matmul %362, %348, %cst_120 {dimension_numbers = #tpu.dot_dimension_numbers<[1], [0], [0], [1], [0, 0, 1, 1], [], []>} : vector<8x8xbf16>, vector<8x8xbf16>, vector<8x8xf32> -> vector<8x8xf32>
    %364 = vector.extract_strided_slice %317 {offsets = [0, 16], sizes = [8, 8], strides = [1, 1]} : vector<16x96xf32> to vector<8x8xf32>
    %cst_121 = arith.constant 0.353553385 : f32
    %365 = vector.broadcast %cst_121 : f32 to vector<8x8xf32>
    %366 = arith.mulf %364, %365 : vector<8x8xf32>
    %367 = arith.truncf %366 : vector<8x8xf32> to vector<8x8xbf16>
    %368 = vector.extract_strided_slice %317 {offsets = [0, 48], sizes = [8, 8], strides = [1, 1]} : vector<16x96xf32> to vector<8x8xf32>
    %369 = arith.truncf %368 : vector<8x8xf32> to vector<8x8xbf16>
    %370 = vector.extract_strided_slice %317 {offsets = [0, 80], sizes = [8, 8], strides = [1, 1]} : vector<16x96xf32> to vector<8x8xf32>
    %371 = arith.truncf %370 : vector<8x8xf32> to vector<8x8xbf16>
    %cst_122 = arith.constant dense<0.000000e+00> : vector<8x8xf32>
    %372 = tpu.matmul %367, %369, %cst_122 {dimension_numbers = #tpu.dot_dimension_numbers<[1], [1], [0], [0], [0, 0, 1, 0], [], []>} : vector<8x8xbf16>, vector<8x8xbf16>, vector<8x8xf32> -> vector<8x8xf32>
    %cst_123 = arith.constant -1.000000e+09 : f32
    %373 = vector.broadcast %cst_123 : f32 to vector<8x8xf32>
    %374 = arith.select %13, %372, %373 : vector<8x8xi1>, vector<8x8xf32>
    %cst_124 = arith.constant dense<0xFF800000> : vector<8xf32>
    %375 = vector.multi_reduction <maximumf>, %374, %cst_124 [1] : vector<8x8xf32> to vector<8xf32>
    %376 = vector.shape_cast %375 : vector<8xf32> to vector<8x1xf32>
    %377 = vector.broadcast %376 : vector<8x1xf32> to vector<8x8xf32>
    %378 = arith.subf %374, %377 : vector<8x8xf32>
    %379 = math.exp %378 : vector<8x8xf32>
    %cst_125 = arith.constant dense<0.000000e+00> : vector<8xf32>
    %380 = vector.multi_reduction <add>, %379, %cst_125 [1] : vector<8x8xf32> to vector<8xf32>
    %381 = vector.shape_cast %380 : vector<8xf32> to vector<8x1xf32>
    %382 = tpu.reciprocal %381 {approx = true} : vector<8x1xf32> -> vector<8x1xf32>
    %383 = vector.broadcast %382 : vector<8x1xf32> to vector<8x8xf32>
    %384 = arith.mulf %379, %383 : vector<8x8xf32>
    %385 = arith.truncf %384 : vector<8x8xf32> to vector<8x8xbf16>
    %cst_126 = arith.constant dense<0.000000e+00> : vector<8x8xf32>
    %386 = tpu.matmul %385, %371, %cst_126 {dimension_numbers = #tpu.dot_dimension_numbers<[1], [0], [0], [1], [0, 0, 1, 1], [], []>} : vector<8x8xbf16>, vector<8x8xbf16>, vector<8x8xf32> -> vector<8x8xf32>
    %387 = vector.extract_strided_slice %317 {offsets = [0, 24], sizes = [8, 8], strides = [1, 1]} : vector<16x96xf32> to vector<8x8xf32>
    %cst_127 = arith.constant 0.353553385 : f32
    %388 = vector.broadcast %cst_127 : f32 to vector<8x8xf32>
    %389 = arith.mulf %387, %388 : vector<8x8xf32>
    %390 = arith.truncf %389 : vector<8x8xf32> to vector<8x8xbf16>
    %391 = vector.extract_strided_slice %317 {offsets = [0, 56], sizes = [8, 8], strides = [1, 1]} : vector<16x96xf32> to vector<8x8xf32>
    %392 = arith.truncf %391 : vector<8x8xf32> to vector<8x8xbf16>
    %393 = vector.extract_strided_slice %317 {offsets = [0, 88], sizes = [8, 8], strides = [1, 1]} : vector<16x96xf32> to vector<8x8xf32>
    %394 = arith.truncf %393 : vector<8x8xf32> to vector<8x8xbf16>
    %cst_128 = arith.constant dense<0.000000e+00> : vector<8x8xf32>
    %395 = tpu.matmul %390, %392, %cst_128 {dimension_numbers = #tpu.dot_dimension_numbers<[1], [1], [0], [0], [0, 0, 1, 0], [], []>} : vector<8x8xbf16>, vector<8x8xbf16>, vector<8x8xf32> -> vector<8x8xf32>
    %cst_129 = arith.constant -1.000000e+09 : f32
    %396 = vector.broadcast %cst_129 : f32 to vector<8x8xf32>
    %397 = arith.select %13, %395, %396 : vector<8x8xi1>, vector<8x8xf32>
    %cst_130 = arith.constant dense<0xFF800000> : vector<8xf32>
    %398 = vector.multi_reduction <maximumf>, %397, %cst_130 [1] : vector<8x8xf32> to vector<8xf32>
    %399 = vector.shape_cast %398 : vector<8xf32> to vector<8x1xf32>
    %400 = vector.broadcast %399 : vector<8x1xf32> to vector<8x8xf32>
    %401 = arith.subf %397, %400 : vector<8x8xf32>
    %402 = math.exp %401 : vector<8x8xf32>
    %cst_131 = arith.constant dense<0.000000e+00> : vector<8xf32>
    %403 = vector.multi_reduction <add>, %402, %cst_131 [1] : vector<8x8xf32> to vector<8xf32>
    %404 = vector.shape_cast %403 : vector<8xf32> to vector<8x1xf32>
    %405 = tpu.reciprocal %404 {approx = true} : vector<8x1xf32> -> vector<8x1xf32>
    %406 = vector.broadcast %405 : vector<8x1xf32> to vector<8x8xf32>
    %407 = arith.mulf %402, %406 : vector<8x8xf32>
    %408 = arith.truncf %407 : vector<8x8xf32> to vector<8x8xbf16>
    %cst_132 = arith.constant dense<0.000000e+00> : vector<8x8xf32>
    %409 = tpu.matmul %408, %394, %cst_132 {dimension_numbers = #tpu.dot_dimension_numbers<[1], [0], [0], [1], [0, 0, 1, 1], [], []>} : vector<8x8xbf16>, vector<8x8xbf16>, vector<8x8xf32> -> vector<8x8xf32>
    %410 = tpu.concatenate %340, %363, %386, %409 in 1 : vector<8x8xf32>, vector<8x8xf32>, vector<8x8xf32>, vector<8x8xf32> -> vector<8x32xf32>
    %411 = vector.extract_strided_slice %317 {offsets = [8, 0], sizes = [8, 8], strides = [1, 1]} : vector<16x96xf32> to vector<8x8xf32>
    %cst_133 = arith.constant 0.353553385 : f32
    %412 = vector.broadcast %cst_133 : f32 to vector<8x8xf32>
    %413 = arith.mulf %411, %412 : vector<8x8xf32>
    %414 = arith.truncf %413 : vector<8x8xf32> to vector<8x8xbf16>
    %415 = vector.extract_strided_slice %317 {offsets = [8, 32], sizes = [8, 8], strides = [1, 1]} : vector<16x96xf32> to vector<8x8xf32>
    %416 = arith.truncf %415 : vector<8x8xf32> to vector<8x8xbf16>
    %417 = vector.extract_strided_slice %317 {offsets = [8, 64], sizes = [8, 8], strides = [1, 1]} : vector<16x96xf32> to vector<8x8xf32>
    %418 = arith.truncf %417 : vector<8x8xf32> to vector<8x8xbf16>
    %cst_134 = arith.constant dense<0.000000e+00> : vector<8x8xf32>
    %419 = tpu.matmul %414, %416, %cst_134 {dimension_numbers = #tpu.dot_dimension_numbers<[1], [1], [0], [0], [0, 0, 1, 0], [], []>} : vector<8x8xbf16>, vector<8x8xbf16>, vector<8x8xf32> -> vector<8x8xf32>
    %cst_135 = arith.constant -1.000000e+09 : f32
    %420 = vector.broadcast %cst_135 : f32 to vector<8x8xf32>
    %421 = arith.select %13, %419, %420 : vector<8x8xi1>, vector<8x8xf32>
    %cst_136 = arith.constant dense<0xFF800000> : vector<8xf32>
    %422 = vector.multi_reduction <maximumf>, %421, %cst_136 [1] : vector<8x8xf32> to vector<8xf32>
    %423 = vector.shape_cast %422 : vector<8xf32> to vector<8x1xf32>
    %424 = vector.broadcast %423 : vector<8x1xf32> to vector<8x8xf32>
    %425 = arith.subf %421, %424 : vector<8x8xf32>
    %426 = math.exp %425 : vector<8x8xf32>
    %cst_137 = arith.constant dense<0.000000e+00> : vector<8xf32>
    %427 = vector.multi_reduction <add>, %426, %cst_137 [1] : vector<8x8xf32> to vector<8xf32>
    %428 = vector.shape_cast %427 : vector<8xf32> to vector<8x1xf32>
    %429 = tpu.reciprocal %428 {approx = true} : vector<8x1xf32> -> vector<8x1xf32>
    %430 = vector.broadcast %429 : vector<8x1xf32> to vector<8x8xf32>
    %431 = arith.mulf %426, %430 : vector<8x8xf32>
    %432 = arith.truncf %431 : vector<8x8xf32> to vector<8x8xbf16>
    %cst_138 = arith.constant dense<0.000000e+00> : vector<8x8xf32>
    %433 = tpu.matmul %432, %418, %cst_138 {dimension_numbers = #tpu.dot_dimension_numbers<[1], [0], [0], [1], [0, 0, 1, 1], [], []>} : vector<8x8xbf16>, vector<8x8xbf16>, vector<8x8xf32> -> vector<8x8xf32>
    %434 = vector.extract_strided_slice %317 {offsets = [8, 8], sizes = [8, 8], strides = [1, 1]} : vector<16x96xf32> to vector<8x8xf32>
    %cst_139 = arith.constant 0.353553385 : f32
    %435 = vector.broadcast %cst_139 : f32 to vector<8x8xf32>
    %436 = arith.mulf %434, %435 : vector<8x8xf32>
    %437 = arith.truncf %436 : vector<8x8xf32> to vector<8x8xbf16>
    %438 = vector.extract_strided_slice %317 {offsets = [8, 40], sizes = [8, 8], strides = [1, 1]} : vector<16x96xf32> to vector<8x8xf32>
    %439 = arith.truncf %438 : vector<8x8xf32> to vector<8x8xbf16>
    %440 = vector.extract_strided_slice %317 {offsets = [8, 72], sizes = [8, 8], strides = [1, 1]} : vector<16x96xf32> to vector<8x8xf32>
    %441 = arith.truncf %440 : vector<8x8xf32> to vector<8x8xbf16>
    %cst_140 = arith.constant dense<0.000000e+00> : vector<8x8xf32>
    %442 = tpu.matmul %437, %439, %cst_140 {dimension_numbers = #tpu.dot_dimension_numbers<[1], [1], [0], [0], [0, 0, 1, 0], [], []>} : vector<8x8xbf16>, vector<8x8xbf16>, vector<8x8xf32> -> vector<8x8xf32>
    %cst_141 = arith.constant -1.000000e+09 : f32
    %443 = vector.broadcast %cst_141 : f32 to vector<8x8xf32>
    %444 = arith.select %13, %442, %443 : vector<8x8xi1>, vector<8x8xf32>
    %cst_142 = arith.constant dense<0xFF800000> : vector<8xf32>
    %445 = vector.multi_reduction <maximumf>, %444, %cst_142 [1] : vector<8x8xf32> to vector<8xf32>
    %446 = vector.shape_cast %445 : vector<8xf32> to vector<8x1xf32>
    %447 = vector.broadcast %446 : vector<8x1xf32> to vector<8x8xf32>
    %448 = arith.subf %444, %447 : vector<8x8xf32>
    %449 = math.exp %448 : vector<8x8xf32>
    %cst_143 = arith.constant dense<0.000000e+00> : vector<8xf32>
    %450 = vector.multi_reduction <add>, %449, %cst_143 [1] : vector<8x8xf32> to vector<8xf32>
    %451 = vector.shape_cast %450 : vector<8xf32> to vector<8x1xf32>
    %452 = tpu.reciprocal %451 {approx = true} : vector<8x1xf32> -> vector<8x1xf32>
    %453 = vector.broadcast %452 : vector<8x1xf32> to vector<8x8xf32>
    %454 = arith.mulf %449, %453 : vector<8x8xf32>
    %455 = arith.truncf %454 : vector<8x8xf32> to vector<8x8xbf16>
    %cst_144 = arith.constant dense<0.000000e+00> : vector<8x8xf32>
    %456 = tpu.matmul %455, %441, %cst_144 {dimension_numbers = #tpu.dot_dimension_numbers<[1], [0], [0], [1], [0, 0, 1, 1], [], []>} : vector<8x8xbf16>, vector<8x8xbf16>, vector<8x8xf32> -> vector<8x8xf32>
    %457 = vector.extract_strided_slice %317 {offsets = [8, 16], sizes = [8, 8], strides = [1, 1]} : vector<16x96xf32> to vector<8x8xf32>
    %cst_145 = arith.constant 0.353553385 : f32
    %458 = vector.broadcast %cst_145 : f32 to vector<8x8xf32>
    %459 = arith.mulf %457, %458 : vector<8x8xf32>
    %460 = arith.truncf %459 : vector<8x8xf32> to vector<8x8xbf16>
    %461 = vector.extract_strided_slice %317 {offsets = [8, 48], sizes = [8, 8], strides = [1, 1]} : vector<16x96xf32> to vector<8x8xf32>
    %462 = arith.truncf %461 : vector<8x8xf32> to vector<8x8xbf16>
    %463 = vector.extract_strided_slice %317 {offsets = [8, 80], sizes = [8, 8], strides = [1, 1]} : vector<16x96xf32> to vector<8x8xf32>
    %464 = arith.truncf %463 : vector<8x8xf32> to vector<8x8xbf16>
    %cst_146 = arith.constant dense<0.000000e+00> : vector<8x8xf32>
    %465 = tpu.matmul %460, %462, %cst_146 {dimension_numbers = #tpu.dot_dimension_numbers<[1], [1], [0], [0], [0, 0, 1, 0], [], []>} : vector<8x8xbf16>, vector<8x8xbf16>, vector<8x8xf32> -> vector<8x8xf32>
    %cst_147 = arith.constant -1.000000e+09 : f32
    %466 = vector.broadcast %cst_147 : f32 to vector<8x8xf32>
    %467 = arith.select %13, %465, %466 : vector<8x8xi1>, vector<8x8xf32>
    %cst_148 = arith.constant dense<0xFF800000> : vector<8xf32>
    %468 = vector.multi_reduction <maximumf>, %467, %cst_148 [1] : vector<8x8xf32> to vector<8xf32>
    %469 = vector.shape_cast %468 : vector<8xf32> to vector<8x1xf32>
    %470 = vector.broadcast %469 : vector<8x1xf32> to vector<8x8xf32>
    %471 = arith.subf %467, %470 : vector<8x8xf32>
    %472 = math.exp %471 : vector<8x8xf32>
    %cst_149 = arith.constant dense<0.000000e+00> : vector<8xf32>
    %473 = vector.multi_reduction <add>, %472, %cst_149 [1] : vector<8x8xf32> to vector<8xf32>
    %474 = vector.shape_cast %473 : vector<8xf32> to vector<8x1xf32>
    %475 = tpu.reciprocal %474 {approx = true} : vector<8x1xf32> -> vector<8x1xf32>
    %476 = vector.broadcast %475 : vector<8x1xf32> to vector<8x8xf32>
    %477 = arith.mulf %472, %476 : vector<8x8xf32>
    %478 = arith.truncf %477 : vector<8x8xf32> to vector<8x8xbf16>
    %cst_150 = arith.constant dense<0.000000e+00> : vector<8x8xf32>
    %479 = tpu.matmul %478, %464, %cst_150 {dimension_numbers = #tpu.dot_dimension_numbers<[1], [0], [0], [1], [0, 0, 1, 1], [], []>} : vector<8x8xbf16>, vector<8x8xbf16>, vector<8x8xf32> -> vector<8x8xf32>
    %480 = vector.extract_strided_slice %317 {offsets = [8, 24], sizes = [8, 8], strides = [1, 1]} : vector<16x96xf32> to vector<8x8xf32>
    %cst_151 = arith.constant 0.353553385 : f32
    %481 = vector.broadcast %cst_151 : f32 to vector<8x8xf32>
    %482 = arith.mulf %480, %481 : vector<8x8xf32>
    %483 = arith.truncf %482 : vector<8x8xf32> to vector<8x8xbf16>
    %484 = vector.extract_strided_slice %317 {offsets = [8, 56], sizes = [8, 8], strides = [1, 1]} : vector<16x96xf32> to vector<8x8xf32>
    %485 = arith.truncf %484 : vector<8x8xf32> to vector<8x8xbf16>
    %486 = vector.extract_strided_slice %317 {offsets = [8, 88], sizes = [8, 8], strides = [1, 1]} : vector<16x96xf32> to vector<8x8xf32>
    %487 = arith.truncf %486 : vector<8x8xf32> to vector<8x8xbf16>
    %cst_152 = arith.constant dense<0.000000e+00> : vector<8x8xf32>
    %488 = tpu.matmul %483, %485, %cst_152 {dimension_numbers = #tpu.dot_dimension_numbers<[1], [1], [0], [0], [0, 0, 1, 0], [], []>} : vector<8x8xbf16>, vector<8x8xbf16>, vector<8x8xf32> -> vector<8x8xf32>
    %cst_153 = arith.constant -1.000000e+09 : f32
    %489 = vector.broadcast %cst_153 : f32 to vector<8x8xf32>
    %490 = arith.select %13, %488, %489 : vector<8x8xi1>, vector<8x8xf32>
    %cst_154 = arith.constant dense<0xFF800000> : vector<8xf32>
    %491 = vector.multi_reduction <maximumf>, %490, %cst_154 [1] : vector<8x8xf32> to vector<8xf32>
    %492 = vector.shape_cast %491 : vector<8xf32> to vector<8x1xf32>
    %493 = vector.broadcast %492 : vector<8x1xf32> to vector<8x8xf32>
    %494 = arith.subf %490, %493 : vector<8x8xf32>
    %495 = math.exp %494 : vector<8x8xf32>
    %cst_155 = arith.constant dense<0.000000e+00> : vector<8xf32>
    %496 = vector.multi_reduction <add>, %495, %cst_155 [1] : vector<8x8xf32> to vector<8xf32>
    %497 = vector.shape_cast %496 : vector<8xf32> to vector<8x1xf32>
    %498 = tpu.reciprocal %497 {approx = true} : vector<8x1xf32> -> vector<8x1xf32>
    %499 = vector.broadcast %498 : vector<8x1xf32> to vector<8x8xf32>
    %500 = arith.mulf %495, %499 : vector<8x8xf32>
    %501 = arith.truncf %500 : vector<8x8xf32> to vector<8x8xbf16>
    %cst_156 = arith.constant dense<0.000000e+00> : vector<8x8xf32>
    %502 = tpu.matmul %501, %487, %cst_156 {dimension_numbers = #tpu.dot_dimension_numbers<[1], [0], [0], [1], [0, 0, 1, 1], [], []>} : vector<8x8xbf16>, vector<8x8xbf16>, vector<8x8xf32> -> vector<8x8xf32>
    %503 = tpu.concatenate %433, %456, %479, %502 in 1 : vector<8x8xf32>, vector<8x8xf32>, vector<8x8xf32>, vector<8x8xf32> -> vector<8x32xf32>
    %504 = tpu.concatenate %410, %503 in 0 : vector<8x32xf32>, vector<8x32xf32> -> vector<16x32xf32>
    %505 = arith.truncf %504 : vector<16x32xf32> to vector<16x32xbf16>
    %c0_157 = arith.constant 0 : index
    %c0_158 = arith.constant 0 : index
    %506 = vector.load %arg22[%c0_157, %c0_158] : memref<32x32xbf16, #tpu.memory_space<vmem>>, vector<32x32xbf16>
    %cst_159 = arith.constant dense<0.000000e+00> : vector<16x32xf32>
    %507 = tpu.matmul %505, %506, %cst_159 {dimension_numbers = #tpu.dot_dimension_numbers<[1], [0], [0], [1], [0, 0, 1, 1], [], []>} : vector<16x32xbf16>, vector<32x32xbf16>, vector<16x32xf32> -> vector<16x32xf32>
    %c0_160 = arith.constant 0 : index
    %c0_161 = arith.constant 0 : index
    %508 = vector.load %arg23[%c0_160, %c0_161] : memref<1x32xf32, #tpu.memory_space<vmem>>, vector<1x32xf32>
    %509 = vector.broadcast %508 : vector<1x32xf32> to vector<16x32xf32>
    %510 = arith.addf %507, %509 : vector<16x32xf32>
    %511 = arith.addf %287, %510 : vector<16x32xf32>
    %cst_162 = arith.constant dense<0.000000e+00> : vector<16xf32>
    %512 = vector.multi_reduction <add>, %511, %cst_162 [1] : vector<16x32xf32> to vector<16xf32>
    %513 = vector.shape_cast %512 : vector<16xf32> to vector<16x1xf32>
    %cst_163 = arith.constant 3.200000e+01 : f32
    %514 = vector.broadcast %cst_163 : f32 to vector<16x1xf32>
    %515 = arith.divf %513, %514 : vector<16x1xf32>
    %516 = vector.broadcast %515 : vector<16x1xf32> to vector<16x32xf32>
    %517 = arith.subf %511, %516 : vector<16x32xf32>
    %518 = arith.mulf %517, %517 : vector<16x32xf32>
    %cst_164 = arith.constant dense<0.000000e+00> : vector<16xf32>
    %519 = vector.multi_reduction <add>, %518, %cst_164 [1] : vector<16x32xf32> to vector<16xf32>
    %520 = vector.shape_cast %519 : vector<16xf32> to vector<16x1xf32>
    %cst_165 = arith.constant 3.200000e+01 : f32
    %521 = vector.broadcast %cst_165 : f32 to vector<16x1xf32>
    %522 = arith.divf %520, %521 : vector<16x1xf32>
    %523 = vector.broadcast %515 : vector<16x1xf32> to vector<16x32xf32>
    %524 = arith.subf %511, %523 : vector<16x32xf32>
    %cst_166 = arith.constant 9.99999974E-6 : f32
    %525 = vector.broadcast %cst_166 : f32 to vector<16x1xf32>
    %526 = arith.addf %522, %525 : vector<16x1xf32>
    %527 = math.rsqrt %526 : vector<16x1xf32>
    %528 = vector.broadcast %527 : vector<16x1xf32> to vector<16x32xf32>
    %529 = arith.mulf %524, %528 : vector<16x32xf32>
    %c0_167 = arith.constant 0 : index
    %c0_168 = arith.constant 0 : index
    %530 = vector.load %arg24[%c0_167, %c0_168] : memref<1x32xf32, #tpu.memory_space<vmem>>, vector<1x32xf32>
    %531 = vector.broadcast %530 : vector<1x32xf32> to vector<16x32xf32>
    %532 = arith.mulf %529, %531 : vector<16x32xf32>
    %c0_169 = arith.constant 0 : index
    %c0_170 = arith.constant 0 : index
    %533 = vector.load %arg25[%c0_169, %c0_170] : memref<1x32xf32, #tpu.memory_space<vmem>>, vector<1x32xf32>
    %534 = vector.broadcast %533 : vector<1x32xf32> to vector<16x32xf32>
    %535 = arith.addf %532, %534 : vector<16x32xf32>
    %536 = arith.truncf %535 : vector<16x32xf32> to vector<16x32xbf16>
    %c0_171 = arith.constant 0 : index
    %c0_172 = arith.constant 0 : index
    %537 = vector.load %arg26[%c0_171, %c0_172] : memref<32x128xbf16, #tpu.memory_space<vmem>>, vector<32x128xbf16>
    %cst_173 = arith.constant dense<0.000000e+00> : vector<16x128xf32>
    %538 = tpu.matmul %536, %537, %cst_173 {dimension_numbers = #tpu.dot_dimension_numbers<[1], [0], [0], [1], [0, 0, 1, 1], [], []>} : vector<16x32xbf16>, vector<32x128xbf16>, vector<16x128xf32> -> vector<16x128xf32>
    %c0_174 = arith.constant 0 : index
    %c0_175 = arith.constant 0 : index
    %539 = vector.load %arg27[%c0_174, %c0_175] : memref<1x128xf32, #tpu.memory_space<vmem>>, vector<1x128xf32>
    %540 = vector.broadcast %539 : vector<1x128xf32> to vector<16x128xf32>
    %541 = arith.addf %538, %540 : vector<16x128xf32>
    %cst_176 = arith.constant 5.000000e-01 : f32
    %542 = vector.broadcast %cst_176 : f32 to vector<16x128xf32>
    %543 = arith.mulf %542, %541 : vector<16x128xf32>
    %cst_177 = arith.constant 4.471500e-02 : f32
    %544 = vector.broadcast %cst_177 : f32 to vector<16x128xf32>
    %545 = arith.mulf %544, %541 : vector<16x128xf32>
    %546 = arith.mulf %545, %541 : vector<16x128xf32>
    %547 = arith.mulf %546, %541 : vector<16x128xf32>
    %548 = arith.addf %541, %547 : vector<16x128xf32>
    %cst_178 = arith.constant 0.797884583 : f32
    %549 = vector.broadcast %cst_178 : f32 to vector<16x128xf32>
    %550 = arith.mulf %549, %548 : vector<16x128xf32>
    %551 = math.tanh %550 : vector<16x128xf32>
    %cst_179 = arith.constant 1.000000e+00 : f32
    %552 = vector.broadcast %cst_179 : f32 to vector<16x128xf32>
    %553 = arith.addf %552, %551 : vector<16x128xf32>
    %554 = arith.mulf %543, %553 : vector<16x128xf32>
    %555 = arith.truncf %554 : vector<16x128xf32> to vector<16x128xbf16>
    %c0_180 = arith.constant 0 : index
    %c0_181 = arith.constant 0 : index
    %556 = vector.load %arg28[%c0_180, %c0_181] : memref<128x32xbf16, #tpu.memory_space<vmem>>, vector<128x32xbf16>
    %cst_182 = arith.constant dense<0.000000e+00> : vector<16x32xf32>
    %557 = tpu.matmul %555, %556, %cst_182 {dimension_numbers = #tpu.dot_dimension_numbers<[1], [0], [0], [1], [0, 0, 1, 1], [], []>} : vector<16x128xbf16>, vector<128x32xbf16>, vector<16x32xf32> -> vector<16x32xf32>
    %c0_183 = arith.constant 0 : index
    %c0_184 = arith.constant 0 : index
    %558 = vector.load %arg29[%c0_183, %c0_184] : memref<1x32xf32, #tpu.memory_space<vmem>>, vector<1x32xf32>
    %559 = vector.broadcast %558 : vector<1x32xf32> to vector<16x32xf32>
    %560 = arith.addf %557, %559 : vector<16x32xf32>
    %561 = arith.addf %511, %560 : vector<16x32xf32>
    %cst_185 = arith.constant dense<0.000000e+00> : vector<16xf32>
    %562 = vector.multi_reduction <add>, %561, %cst_185 [1] : vector<16x32xf32> to vector<16xf32>
    %563 = vector.shape_cast %562 : vector<16xf32> to vector<16x1xf32>
    %cst_186 = arith.constant 3.200000e+01 : f32
    %564 = vector.broadcast %cst_186 : f32 to vector<16x1xf32>
    %565 = arith.divf %563, %564 : vector<16x1xf32>
    %566 = vector.broadcast %565 : vector<16x1xf32> to vector<16x32xf32>
    %567 = arith.subf %561, %566 : vector<16x32xf32>
    %568 = arith.mulf %567, %567 : vector<16x32xf32>
    %cst_187 = arith.constant dense<0.000000e+00> : vector<16xf32>
    %569 = vector.multi_reduction <add>, %568, %cst_187 [1] : vector<16x32xf32> to vector<16xf32>
    %570 = vector.shape_cast %569 : vector<16xf32> to vector<16x1xf32>
    %cst_188 = arith.constant 3.200000e+01 : f32
    %571 = vector.broadcast %cst_188 : f32 to vector<16x1xf32>
    %572 = arith.divf %570, %571 : vector<16x1xf32>
    %573 = vector.broadcast %565 : vector<16x1xf32> to vector<16x32xf32>
    %574 = arith.subf %561, %573 : vector<16x32xf32>
    %cst_189 = arith.constant 9.99999974E-6 : f32
    %575 = vector.broadcast %cst_189 : f32 to vector<16x1xf32>
    %576 = arith.addf %572, %575 : vector<16x1xf32>
    %577 = math.rsqrt %576 : vector<16x1xf32>
    %578 = vector.broadcast %577 : vector<16x1xf32> to vector<16x32xf32>
    %579 = arith.mulf %574, %578 : vector<16x32xf32>
    %c0_190 = arith.constant 0 : index
    %c0_191 = arith.constant 0 : index
    %580 = vector.load %arg4[%c0_190, %c0_191] : memref<1x32xf32, #tpu.memory_space<vmem>>, vector<1x32xf32>
    %581 = vector.broadcast %580 : vector<1x32xf32> to vector<16x32xf32>
    %582 = arith.mulf %579, %581 : vector<16x32xf32>
    %c0_192 = arith.constant 0 : index
    %c0_193 = arith.constant 0 : index
    %583 = vector.load %arg5[%c0_192, %c0_193] : memref<1x32xf32, #tpu.memory_space<vmem>>, vector<1x32xf32>
    %584 = vector.broadcast %583 : vector<1x32xf32> to vector<16x32xf32>
    %585 = arith.addf %582, %584 : vector<16x32xf32>
    %586 = arith.truncf %585 : vector<16x32xf32> to vector<16x32xbf16>
    %c0_194 = arith.constant 0 : index
    %c0_195 = arith.constant 0 : index
    %587 = vector.load %arg2[%c0_194, %c0_195] : memref<32x128xbf16, #tpu.memory_space<vmem>>, vector<32x128xbf16>
    %cst_196 = arith.constant dense<0.000000e+00> : vector<16x128xf32>
    %588 = tpu.matmul %586, %587, %cst_196 {dimension_numbers = #tpu.dot_dimension_numbers<[1], [0], [0], [1], [0, 0, 1, 1], [], []>} : vector<16x32xbf16>, vector<32x128xbf16>, vector<16x128xf32> -> vector<16x128xf32>
    %c0_197 = arith.constant 0 : index
    %c0_198 = arith.constant 0 : index
    %589 = vector.load %arg30[%c0_197, %c0_198] : memref<16x128xf32, #tpu.memory_space<vmem>>, vector<16x128xf32>
    tpu.vector_store %arg30[%c0_197, %c0_198], %588 {strides = array<i32>} : memref<16x128xf32, #tpu.memory_space<vmem>>, vector<16x128xf32>,
    return
  }
}

</mosaic_0001>

<llo_original>
// kernel: gpt2_forward.1
$region0: #{gpt2_forward.1}
  #allocation0 [shape = 'u32[]', space=smem, size = 0x4, offset = 0x4, fixed_abs, tag = 'smem constant byte address 0x4 - core index']
  #allocation1 [shape = 'u32[144,128]{1,0:T(1,128)}', space=vmem, size = 0x12000, scoped, tag = 'internal scratch']
  %s0 = inlined_call_operand.smem [shape: u32[31], index: -1, kind: input, shape index: {}]
  %s1 = sld [smem:[%s0]]
  %s2 = scalar_lea.smem %s0, 1
  %s3 = sld [smem:[%s2]]
  %s4 = scalar_lea.smem %s0, 2
  %s5 = sld [smem:[%s4]]
  %s6 = scalar_lea.smem %s0, 3
  %s7 = sld [smem:[%s6]]
  %s8 = scalar_lea.smem %s0, 4
  %s9 = sld [smem:[%s8]]
  %s10 = scalar_lea.smem %s0, 5
  %s11 = sld [smem:[%s10]]
  %s12 = scalar_lea.smem %s0, 6
  %s13 = sld [smem:[%s12]]
  %s14 = scalar_lea.smem %s0, 7
  %s15 = sld [smem:[%s14]]
  %s16 = scalar_lea.smem %s0, 8
  %s17 = sld [smem:[%s16]]
  %s18 = scalar_lea.smem %s0, 9
  %s19 = sld [smem:[%s18]]
  %s20 = scalar_lea.smem %s0, 10
  %s21 = sld [smem:[%s20]]
  %s22 = scalar_lea.smem %s0, 11
  %s23 = sld [smem:[%s22]]
  %s24 = scalar_lea.smem %s0, 12
  %s25 = sld [smem:[%s24]]
  %s26 = scalar_lea.smem %s0, 13
  %s27 = sld [smem:[%s26]]
  %s28 = scalar_lea.smem %s0, 14
  %s29 = sld [smem:[%s28]]
  %s30 = scalar_lea.smem %s0, 15
  %s31 = sld [smem:[%s30]]
  %s32 = scalar_lea.smem %s0, 16
  %s33 = sld [smem:[%s32]]
  %s34 = scalar_lea.smem %s0, 17
  %s35 = sld [smem:[%s34]]
  %s36 = scalar_lea.smem %s0, 18
  %s37 = sld [smem:[%s36]]
  %s38 = scalar_lea.smem %s0, 19
  %s39 = sld [smem:[%s38]]
  %s40 = scalar_lea.smem %s0, 20
  %s41 = sld [smem:[%s40]]
  %s42 = scalar_lea.smem %s0, 21
  %s43 = sld [smem:[%s42]]
  %s44 = scalar_lea.smem %s0, 22
  %s45 = sld [smem:[%s44]]
  %s46 = scalar_lea.smem %s0, 23
  %s47 = sld [smem:[%s46]]
  %s48 = scalar_lea.smem %s0, 24
  %s49 = sld [smem:[%s48]]
  %s50 = scalar_lea.smem %s0, 25
  %s51 = sld [smem:[%s50]]
  %s52 = scalar_lea.smem %s0, 26
  %s53 = sld [smem:[%s52]]
  %s54 = scalar_lea.smem %s0, 27
  %s55 = sld [smem:[%s54]]
  %s56 = scalar_lea.smem %s0, 28
  %s57 = sld [smem:[%s56]]
  %s58 = scalar_lea.smem %s0, 29
  %s59 = sld [smem:[%s58]]
  %s60 = scalar_lea.smem %s0, 30
  %s61 = sld [smem:[%s60]]
  %s62 = sld [smem:[#allocation0]]
  $region130: #{gpt2_forward.1} parent=0
    _
  %s64 = ssub.s32 1, %s62
  %s65 = scalar_select 0, %s64, %s62
  // Predicated region
  $region2: #{gpt2_forward.1} parent=0 // pred_check
    _
  $region3: #{gpt2_forward.1} parent=0 // pred_check_branch
    %67 = sbr.rel (0) target = $region5
  $region4: #{gpt2_forward.1} parent=0 // pred_region
    _
  $region5: #{gpt2_forward.1} parent=0 // pred_fallthru
    _
  // Predicated region
  $region6: #{gpt2_forward.1} parent=0 // pred_check
    _
  $region7: #{gpt2_forward.1} parent=0 // pred_check_branch
    %69 = sbr.rel (0) target = $region9
  $region8: #{gpt2_forward.1} parent=0 // pred_region
    _
  $region9: #{gpt2_forward.1} parent=0 // pred_fallthru
    _
  // Predicated region
  $region10: #{gpt2_forward.1} parent=0 // pred_check
    _
  $region11: #{gpt2_forward.1} parent=0 // pred_check_branch
    %71 = sbr.rel (0) target = $region13
  $region12: #{gpt2_forward.1} parent=0 // pred_region
    _
  $region13: #{gpt2_forward.1} parent=0 // pred_fallthru
    _
  // Predicated region
  $region14: #{gpt2_forward.1} parent=0 // pred_check
    _
  $region15: #{gpt2_forward.1} parent=0 // pred_check_branch
    %73 = sbr.rel (0) target = $region17
  $region16: #{gpt2_forward.1} parent=0 // pred_region
    _
  $region17: #{gpt2_forward.1} parent=0 // pred_fallthru
    _
  // Predicated region
  $region18: #{gpt2_forward.1} parent=0 // pred_check
    _
  $region19: #{gpt2_forward.1} parent=0 // pred_check_branch
    %75 = sbr.rel (0) target = $region21
  $region20: #{gpt2_forward.1} parent=0 // pred_region
    _
  $region21: #{gpt2_forward.1} parent=0 // pred_fallthru
    _
  // Predicated region
  $region22: #{gpt2_forward.1} parent=0 // pred_check
    _
  $region23: #{gpt2_forward.1} parent=0 // pred_check_branch
    %77 = sbr.rel (0) target = $region25
  $region24: #{gpt2_forward.1} parent=0 // pred_region
    _
  $region25: #{gpt2_forward.1} parent=0 // pred_fallthru
    _
  // Predicated region
  $region26: #{gpt2_forward.1} parent=0 // pred_check
    _
  $region27: #{gpt2_forward.1} parent=0 // pred_check_branch
    %79 = sbr.rel (0) target = $region29
  $region28: #{gpt2_forward.1} parent=0 // pred_region
    _
  $region29: #{gpt2_forward.1} parent=0 // pred_fallthru
    _
  // Predicated region
  $region30: #{gpt2_forward.1} parent=0 // pred_check
    _
  $region31: #{gpt2_forward.1} parent=0 // pred_check_branch
    %81 = sbr.rel (0) target = $region33
  $region32: #{gpt2_forward.1} parent=0 // pred_region
    _
  $region33: #{gpt2_forward.1} parent=0 // pred_fallthru
    _
  // Predicated region
  $region34: #{gpt2_forward.1} parent=0 // pred_check
    _
  $region35: #{gpt2_forward.1} parent=0 // pred_check_branch
    %83 = sbr.rel (0) target = $region37
  $region36: #{gpt2_forward.1} parent=0 // pred_region
    _
  $region37: #{gpt2_forward.1} parent=0 // pred_fallthru
    _
  // Predicated region
  $region38: #{gpt2_forward.1} parent=0 // pred_check
    _
  $region39: #{gpt2_forward.1} parent=0 // pred_check_branch
    %85 = sbr.rel (0) target = $region41
  $region40: #{gpt2_forward.1} parent=0 // pred_region
    _
  $region41: #{gpt2_forward.1} parent=0 // pred_fallthru
    _
  // Predicated region
  $region42: #{gpt2_forward.1} parent=0 // pred_check
    _
  $region43: #{gpt2_forward.1} parent=0 // pred_check_branch
    %87 = sbr.rel (0) target = $region45
  $region44: #{gpt2_forward.1} parent=0 // pred_region
    _
  $region45: #{gpt2_forward.1} parent=0 // pred_fallthru
    _
  // Predicated region
  $region46: #{gpt2_forward.1} parent=0 // pred_check
    _
  $region47: #{gpt2_forward.1} parent=0 // pred_check_branch
    %89 = sbr.rel (0) target = $region49
  $region48: #{gpt2_forward.1} parent=0 // pred_region
    _
  $region49: #{gpt2_forward.1} parent=0 // pred_fallthru
    _
  // Predicated region
  $region50: #{gpt2_forward.1} parent=0 // pred_check
    _
  $region51: #{gpt2_forward.1} parent=0 // pred_check_branch
    %91 = sbr.rel (0) target = $region53
  $region52: #{gpt2_forward.1} parent=0 // pred_region
    _
  $region53: #{gpt2_forward.1} parent=0 // pred_fallthru
    _
  // Predicated region
  $region54: #{gpt2_forward.1} parent=0 // pred_check
    _
  $region55: #{gpt2_forward.1} parent=0 // pred_check_branch
    %93 = sbr.rel (0) target = $region57
  $region56: #{gpt2_forward.1} parent=0 // pred_region
    _
  $region57: #{gpt2_forward.1} parent=0 // pred_fallthru
    _
  // Predicated region
  $region58: #{gpt2_forward.1} parent=0 // pred_check
    _
  $region59: #{gpt2_forward.1} parent=0 // pred_check_branch
    %95 = sbr.rel (0) target = $region61
  $region60: #{gpt2_forward.1} parent=0 // pred_region
    _
  $region61: #{gpt2_forward.1} parent=0 // pred_fallthru
    _
  // Predicated region
  $region62: #{gpt2_forward.1} parent=0 // pred_check
    _
  $region63: #{gpt2_forward.1} parent=0 // pred_check_branch
    %97 = sbr.rel (0) target = $region65
  $region64: #{gpt2_forward.1} parent=0 // pred_region
    _
  $region65: #{gpt2_forward.1} parent=0 // pred_fallthru
    _
  // Predicated region
  $region66: #{gpt2_forward.1} parent=0 // pred_check
    _
  $region67: #{gpt2_forward.1} parent=0 // pred_check_branch
    %99 = sbr.rel (0) target = $region69
  $region68: #{gpt2_forward.1} parent=0 // pred_region
    _
  $region69: #{gpt2_forward.1} parent=0 // pred_fallthru
    _
  // Predicated region
  $region70: #{gpt2_forward.1} parent=0 // pred_check
    _
  $region71: #{gpt2_forward.1} parent=0 // pred_check_branch
    %101 = sbr.rel (0) target = $region73
  $region72: #{gpt2_forward.1} parent=0 // pred_region
    _
  $region73: #{gpt2_forward.1} parent=0 // pred_fallthru
    _
  // Predicated region
  $region74: #{gpt2_forward.1} parent=0 // pred_check
    _
  $region75: #{gpt2_forward.1} parent=0 // pred_check_branch
    %103 = sbr.rel (0) target = $region77
  $region76: #{gpt2_forward.1} parent=0 // pred_region
    _
  $region77: #{gpt2_forward.1} parent=0 // pred_fallthru
    _
  // Predicated region
  $region78: #{gpt2_forward.1} parent=0 // pred_check
    _
  $region79: #{gpt2_forward.1} parent=0 // pred_check_branch
    %105 = sbr.rel (0) target = $region81
  $region80: #{gpt2_forward.1} parent=0 // pred_region
    _
  $region81: #{gpt2_forward.1} parent=0 // pred_fallthru
    _
  // Predicated region
  $region82: #{gpt2_forward.1} parent=0 // pred_check
    _
  $region83: #{gpt2_forward.1} parent=0 // pred_check_branch
    %107 = sbr.rel (0) target = $region85
  $region84: #{gpt2_forward.1} parent=0 // pred_region
    _
  $region85: #{gpt2_forward.1} parent=0 // pred_fallthru
    _
  // Predicated region
  $region86: #{gpt2_forward.1} parent=0 // pred_check
    _
  $region87: #{gpt2_forward.1} parent=0 // pred_check_branch
    %109 = sbr.rel (0) target = $region89
  $region88: #{gpt2_forward.1} parent=0 // pred_region
    _
  $region89: #{gpt2_forward.1} parent=0 // pred_fallthru
    _
  // Predicated region
  $region90: #{gpt2_forward.1} parent=0 // pred_check
    _
  $region91: #{gpt2_forward.1} parent=0 // pred_check_branch
    %111 = sbr.rel (0) target = $region93
  $region92: #{gpt2_forward.1} parent=0 // pred_region
    _
  $region93: #{gpt2_forward.1} parent=0 // pred_fallthru
    _
  // Predicated region
  $region94: #{gpt2_forward.1} parent=0 // pred_check
    _
  $region95: #{gpt2_forward.1} parent=0 // pred_check_branch
    %113 = sbr.rel (0) target = $region97
  $region96: #{gpt2_forward.1} parent=0 // pred_region
    _
  $region97: #{gpt2_forward.1} parent=0 // pred_fallthru
    _
  // Predicated region
  $region98: #{gpt2_forward.1} parent=0 // pred_check
    _
  $region99: #{gpt2_forward.1} parent=0 // pred_check_branch
    %115 = sbr.rel (0) target = $region101
  $region100: #{gpt2_forward.1} parent=0 // pred_region
    _
  $region101: #{gpt2_forward.1} parent=0 // pred_fallthru
    _
  // Predicated region
  $region102: #{gpt2_forward.1} parent=0 // pred_check
    _
  $region103: #{gpt2_forward.1} parent=0 // pred_check_branch
    %117 = sbr.rel (0) target = $region105
  $region104: #{gpt2_forward.1} parent=0 // pred_region
    _
  $region105: #{gpt2_forward.1} parent=0 // pred_fallthru
    _
  // Predicated region
  $region106: #{gpt2_forward.1} parent=0 // pred_check
    _
  $region107: #{gpt2_forward.1} parent=0 // pred_check_branch
    %119 = sbr.rel (0) target = $region109
  $region108: #{gpt2_forward.1} parent=0 // pred_region
    _
  $region109: #{gpt2_forward.1} parent=0 // pred_fallthru
    _
  // Predicated region
  $region110: #{gpt2_forward.1} parent=0 // pred_check
    _
  $region111: #{gpt2_forward.1} parent=0 // pred_check_branch
    %121 = sbr.rel (0) target = $region113
  $region112: #{gpt2_forward.1} parent=0 // pred_region
    _
  $region113: #{gpt2_forward.1} parent=0 // pred_fallthru
    _
  // Predicated region
  $region114: #{gpt2_forward.1} parent=0 // pred_check
    _
  $region115: #{gpt2_forward.1} parent=0 // pred_check_branch
    %123 = sbr.rel (0) target = $region117
  $region116: #{gpt2_forward.1} parent=0 // pred_region
    _
  $region117: #{gpt2_forward.1} parent=0 // pred_fallthru
    _
  // Predicated region
  $region118: #{gpt2_forward.1} parent=0 // pred_check
    _
  $region119: #{gpt2_forward.1} parent=0 // pred_check_branch
    %125 = sbr.rel (0) target = $region121
  $region120: #{gpt2_forward.1} parent=0 // pred_region
    _
  $region121: #{gpt2_forward.1} parent=0 // pred_fallthru
    _
  %v127 = vld [vmem:[%s1] sm:$0xff]
  %v128 = vld [vmem:[%s1 + $0x8] sm:$0xff]
  %v129 = vlaneseq
  %v130 = vand.u32 %v129, 127
  %131 = vset.pattern.permute.xlu0 0
  %132 = vperm.xlu0 %131, %v127
  %v133 = vpop.permute.xlu0 %132
  %134 = vset.pattern.permute.xlu0 0
  %135 = vperm.xlu0 %134, %v128
  %v136 = vpop.permute.xlu0 %135
  %vm137 = vcmp.eq.s32.totalorder %v130, %v133
  %vm138 = vcmp.eq.s32.totalorder %v130, %v136
  %v139 = vsel %vm137, 1, 0
  %v140 = vsel %vm138, 1, 0
  %v141 = vcvt.s32.f32 %v139
  %v142 = vcvt.s32.f32 %v140
  %v143 = vld [vmem:[%s3] sm:$0xff]
  %v144 = vld [vmem:[%s3 + $0x8] sm:$0xff]
  %v145 = vld [vmem:[%s3 + $0x10] sm:$0xff]
  %v146 = vld [vmem:[%s3 + $0x18] sm:$0xff]
  %v147 = vld [vmem:[%s3 + $0x20] sm:$0xff]
  %v148 = vld [vmem:[%s3 + $0x28] sm:$0xff]
  %v149 = vld [vmem:[%s3 + $0x30] sm:$0xff]
  %v150 = vld [vmem:[%s3 + $0x38] sm:$0xff]
  %v151 = vld [vmem:[%s3 + $0x40] sm:$0xff]
  %v152 = vld [vmem:[%s3 + $0x48] sm:$0xff]
  %v153 = vld [vmem:[%s3 + $0x50] sm:$0xff]
  %v154 = vld [vmem:[%s3 + $0x58] sm:$0xff]
  %v155 = vld [vmem:[%s3 + $0x60] sm:$0xff]
  %v156 = vld [vmem:[%s3 + $0x68] sm:$0xff]
  %v157 = vld [vmem:[%s3 + $0x70] sm:$0xff]
  %v158 = vld [vmem:[%s3 + $0x78] sm:$0xff]
  %v159 = vld [vmem:[%s7] sm:$0xff]
  %160 = vmatprep.subr.mxu0 0.0
  %161 = vmatpush1.msra.mxu0 %v143
  %162 = vmatprep.subr.mxu0 0.0
  %163 = vmatpush1.msra.mxu0 %v144
  %164 = vmatprep.subr.mxu0 0.0
  %165 = vmatpush1.msra.mxu0 %v145
  %166 = vmatprep.subr.mxu0 0.0
  %167 = vmatpush1.msra.mxu0 %v146
  %168 = vmatprep.subr.mxu0 0.0
  %169 = vmatpush1.msra.mxu0 %v147
  %170 = vmatprep.subr.mxu0 0.0
  %171 = vmatpush1.msra.mxu0 %v148
  %172 = vmatprep.subr.mxu0 0.0
  %173 = vmatpush1.msra.mxu0 %v149
  %174 = vmatprep.subr.mxu0 0.0
  %175 = vmatpush1.msra.mxu0 %v150
  %176 = vmatprep.subr.mxu0 0.0
  %177 = vmatpush1.msra.mxu0 %v151
  %178 = vmatprep.subr.mxu0 0.0
  %179 = vmatpush1.msra.mxu0 %v152
  %180 = vmatprep.subr.mxu0 0.0
  %181 = vmatpush1.msra.mxu0 %v153
  %182 = vmatprep.subr.mxu0 0.0
  %183 = vmatpush1.msra.mxu0 %v154
  %184 = vmatprep.subr.mxu0 0.0
  %185 = vmatpush1.msra.mxu0 %v155
  %186 = vmatprep.subr.mxu0 0.0
  %187 = vmatpush1.msra.mxu0 %v156
  %188 = vmatprep.subr.mxu0 0.0
  %189 = vmatpush1.msra.mxu0 %v157
  %190 = vmatprep.subr.mxu0 0.0
  %191 = vmatpush1.msra.mxu0 %v158
  %192 = vmatprep.subr.mxu0 0.0
  %193 = vmatpush1.msra.mxu0 0.0
  %194 = vmatprep.subr.mxu0 0.0
  %195 = vmatpush1.msra.mxu0 0.0
  %196 = vmatprep.subr.mxu0 0.0
  %197 = vmatpush1.msra.mxu0 0.0
  %198 = vmatprep.subr.mxu0 0.0
  %199 = vmatpush1.msra.mxu0 0.0
  %200 = vmatprep.subr.mxu0 0.0
  %201 = vmatpush1.msra.mxu0 0.0
  %202 = vmatprep.subr.mxu0 0.0
  %203 = vmatpush1.msra.mxu0 0.0
  %204 = vmatprep.subr.mxu0 0.0
  %205 = vmatpush1.msra.mxu0 0.0
  %206 = vmatprep.subr.mxu0 0.0
  %207 = vmatpush1.msra.mxu0 0.0
  %208 = vmatprep.subr.mxu0 0.0
  %209 = vmatpush1.msra.mxu0 0.0
  %210 = vmatprep.subr.mxu0 0.0
  %211 = vmatpush1.msra.mxu0 0.0
  %212 = vmatprep.subr.mxu0 0.0
  %213 = vmatpush1.msra.mxu0 0.0
  %214 = vmatprep.subr.mxu0 0.0
  %215 = vmatpush1.msra.mxu0 0.0
  %216 = vmatprep.subr.mxu0 0.0
  %217 = vmatpush1.msra.mxu0 0.0
  %218 = vmatprep.subr.mxu0 0.0
  %219 = vmatpush1.msra.mxu0 0.0
  %220 = vmatprep.subr.mxu0 0.0
  %221 = vmatpush1.msra.mxu0 0.0
  %222 = vmatprep.subr.mxu0 0.0
  %223 = vmatpush1.msra.mxu0 0.0
  %224 = vmatprep.mubr.f32.mxu0 0.0
  %225 = vmatmul.mubr.f32.gmra.mrb[0].mxu0 %v141
  %v226 = vpop.f32.mrb[0].mxu0
  %v227 = vadd.f32 %v159, %v226
  %v228 = vpop.f32.mrb[0].mxu0
  %229 = vmatprep.mubr.f32.mxu0 0.0
  %230 = vmatmul.mubr.f32.gmra.mrb[0].mxu0 %v142
  %v231 = vpop.f32.mrb[0].mxu0
  %v232 = vadd.f32 %v159, %v231
  %v233 = vpop.f32.mrb[0].mxu0
  %234 = vdwg.mxu0
  %v235 = vlaneseq
  %v236 = vshrl.u32 %v235, 7
  %vm237 = vcmp.le.s32.totalorder %v130, %v236
  %vm238 = vcmask 261120
  %v239 = vsel %vm238, %v227, 0.0
  %240 = vadd.xlane.f32.xlu0 %v239
  %v241 = vpop.xlane.xlu0 %240
  %v242 = vsel %vm238, %v232, 0.0
  %243 = vadd.xlane.f32.xlu0 %v242
  %v244 = vpop.xlane.xlu0 %243
  %v245 = vrcp.pop 32.0
  %v246 = vmul.f32 %v241, %v245
  %v247 = vmul.f32 %v244, %v245
  %v248 = vsub.f32 %v227, %v246
  %v249 = vsub.f32 %v232, %v247
  %v250 = vmul.f32 %v248, %v248
  %v251 = vmul.f32 %v249, %v249
  %v252 = vsel %vm238, %v250, 0.0
  %253 = vadd.xlane.f32.xlu0 %v252
  %v254 = vpop.xlane.xlu0 %253
  %v255 = vsel %vm238, %v251, 0.0
  %256 = vadd.xlane.f32.xlu0 %v255
  %v257 = vpop.xlane.xlu0 %256
  %v258 = vmul.f32 %v254, %v245
  %v259 = vmul.f32 %v257, %v245
  %v260 = vadd.f32 %v258, 1e-05
  %v261 = vadd.f32 %v259, 1e-05
  %v262 = vrsqrt.pop %v260
  %v263 = vrsqrt.pop %v261
  %v264 = vmul.f32 %v248, %v262
  %v265 = vmul.f32 %v249, %v263
  %v266 = vld [vmem:[%s13] sm:$0x1]
  %v268 = vlaneseq
  %v269 = vshrl.u32 %v268, 7
  %v270 = vsub.s32 0, %v269
  %v271 = vrot.slane %v266, %v270
  %v273 = vmul.f32 %v264, %v271
  %v274 = vmul.f32 %v265, %v271
  %v275 = vld [vmem:[%s15] sm:$0x1]
  %v277 = vlaneseq
  %v278 = vshrl.u32 %v277, 7
  %v279 = vsub.s32 0, %v278
  %v280 = vrot.slane %v275, %v279
  %v282 = vadd.f32 %v273, %v280
  %v283 = vadd.f32 %v274, %v280
  %v284 = vpack.c.bf16 %v283, %v282
  %v285 = vld [vmem:[%s17] sm:$0xf]
  %v286 = vld [vmem:[%s17 + $0x4] sm:$0xf]
  %v287 = vld [vmem:[%s17 + $0x8] sm:$0xf]
  %v288 = vld [vmem:[%s17 + $0xc] sm:$0xf]
  %v289 = vld [vmem:[%s19] sm:$0x1]
  %v291 = vlaneseq
  %v292 = vshrl.u32 %v291, 7
  %v293 = vsub.s32 0, %v292
  %v294 = vrot.slane %v289, %v293
  %v300 = vunpack.c.l.b16 %v285
  %v301 = vunpack.c.l.b16 %v286
  %v302 = vunpack.c.l.b16 %v287
  %v303 = vunpack.c.l.b16 %v288
  %v304 = vpack.c.b16 %v301, %v300
  %v305 = vpack.c.b16 %v303, %v302
  %v309 = vsel %vm238, %v284, 0
  %311 = vmatprep.subr.bf16.mxu0 0
  %312 = vmatpush1.bf16.msra.mxu0 %v304
  %313 = vmatprep.subr.bf16.mxu0 0
  %314 = vmatpush1.bf16.msra.mxu0 %v305
  %315 = vmatprep.subr.bf16.mxu0 0
  %316 = vmatpush1.bf16.msra.mxu0 0
  %317 = vmatprep.subr.bf16.mxu0 0
  %318 = vmatpush1.bf16.msra.mxu0 0
  %319 = vmatprep.subr.bf16.mxu0 0
  %320 = vmatpush1.bf16.msra.mxu0 0
  %321 = vmatprep.subr.bf16.mxu0 0
  %322 = vmatpush1.bf16.msra.mxu0 0
  %323 = vmatprep.subr.bf16.mxu0 0
  %324 = vmatpush1.bf16.msra.mxu0 0
  %325 = vmatprep.subr.bf16.mxu0 0
  %326 = vmatpush1.bf16.msra.mxu0 0
  %327 = vmatprep.subr.bf16.mxu0 0
  %328 = vmatpush1.bf16.msra.mxu0 0
  %329 = vmatprep.subr.bf16.mxu0 0
  %330 = vmatpush1.bf16.msra.mxu0 0
  %331 = vmatprep.subr.bf16.mxu0 0
  %332 = vmatpush1.bf16.msra.mxu0 0
  %333 = vmatprep.subr.bf16.mxu0 0
  %334 = vmatpush1.bf16.msra.mxu0 0
  %335 = vmatprep.subr.bf16.mxu0 0
  %336 = vmatpush1.bf16.msra.mxu0 0
  %337 = vmatprep.subr.bf16.mxu0 0
  %338 = vmatpush1.bf16.msra.mxu0 0
  %339 = vmatprep.subr.bf16.mxu0 0
  %340 = vmatpush1.bf16.msra.mxu0 0
  %341 = vmatprep.subr.bf16.mxu0 0
  %342 = vmatpush1.bf16.msra.mxu0 0
  %343 = vmatprep.mubr.bf16.mxu0 0
  %344 = vmatmul.mubr.bf16.gmra.mrb[0].mxu0 %v309
  %v345 = vpop.f32.mrb[0].mxu0
  %v346 = vadd.f32 %v294, %v345
  %v347 = vpop.f32.mrb[0].mxu0
  %v348 = vpop.f32.mrb[0].mxu0
  %v349 = vadd.f32 %v294, %v348
  %v350 = vpop.f32.mrb[0].mxu0
  %351 = vdwg.mxu0
  %v352 = vmul.f32 %v346, 0.35355338
  %v353 = vpack.c.bf16 %v352, %v352
  %v354 = vpack.c.bf16 %v346, %v346
  %356 = vrot.lane.b32.xlu0 %v354, 96
  %v357 = vpop.permute.xlu0 %356
  %vm358 = vcmask 64512
  %v360 = vsel %vm358, %v353, 0
  %v363 = vsel %vm358, %v357, 0
  %365 = vmatprep.subr.bf16.mxu0 0
  %366 = vmatpush1.bf16.xpose.msra.mxu0 %v363
  %367 = vmatprep.subr.bf16.mxu0 0
  %368 = vmatpush1.bf16.xpose.msra.mxu0 0
  %369 = vmatprep.subr.bf16.mxu0 0
  %370 = vmatpush1.bf16.xpose.msra.mxu0 0
  %371 = vmatprep.subr.bf16.mxu0 0
  %372 = vmatpush1.bf16.xpose.msra.mxu0 0
  %373 = vmatprep.subr.bf16.mxu0 0
  %374 = vmatpush1.bf16.xpose.msra.mxu0 0
  %375 = vmatprep.subr.bf16.mxu0 0
  %376 = vmatpush1.bf16.xpose.msra.mxu0 0
  %377 = vmatprep.subr.bf16.mxu0 0
  %378 = vmatpush1.bf16.xpose.msra.mxu0 0
  %379 = vmatprep.subr.bf16.mxu0 0
  %380 = vmatpush1.bf16.xpose.msra.mxu0 0
  %381 = vmatprep.subr.bf16.mxu0 0
  %382 = vmatpush1.bf16.xpose.msra.mxu0 0
  %383 = vmatprep.subr.bf16.mxu0 0
  %384 = vmatpush1.bf16.xpose.msra.mxu0 0
  %385 = vmatprep.subr.bf16.mxu0 0
  %386 = vmatpush1.bf16.xpose.msra.mxu0 0
  %387 = vmatprep.subr.bf16.mxu0 0
  %388 = vmatpush1.bf16.xpose.msra.mxu0 0
  %389 = vmatprep.subr.bf16.mxu0 0
  %390 = vmatpush1.bf16.xpose.msra.mxu0 0
  %391 = vmatprep.subr.bf16.mxu0 0
  %392 = vmatpush1.bf16.xpose.msra.mxu0 0
  %393 = vmatprep.subr.bf16.mxu0 0
  %394 = vmatpush1.bf16.xpose.msra.mxu0 0
  %395 = vmatprep.subr.bf16.mxu0 0
  %396 = vmatpush1.bf16.xpose.msra.mxu0 0
  %397 = vmatprep.mubr.bf16.mxu0 0
  %398 = vmatmul.mubr.bf16.gmra.mrb[0].mxu0 %v360
  %v399 = vpop.f32.mrb[0].mxu0
  %v400 = vadd.f32 0.0, %v399
  %v401 = vpop.f32.mrb[0].mxu0
  %v402 = vpop.f32.mrb[0].mxu0
  %v403 = vpop.f32.mrb[0].mxu0
  %404 = vdwg.mxu0
  %v405 = vsel %vm237, %v400, -1e+09
  %v406 = vsel %vm358, %v405, -inf
  %407 = vmax.xlane.f32.xlu0 %v406
  %v408 = vpop.xlane.xlu0 %407
  %v409 = vsub.f32 %v405, %v408
  %v410 = vmul.f32 %v409, 1.442695
  %v411 = vpow.pop %v410
  %v412 = vsel %vm358, %v411, 0.0
  %413 = vadd.xlane.f32.xlu0 %v412
  %v414 = vpop.xlane.xlu0 %413
  %v415 = vrcp.pop %v414
  %v416 = vmul.f32 %v411, %v415
  %v417 = vpack.c.bf16 %v416, %v416
  %418 = vrot.lane.b32.xlu0 %v354, 64
  %v419 = vpop.permute.xlu0 %418
  %v421 = vsel %vm358, %v417, 0
  %vm423 = vcmask 1043456
  %v425 = vsel %vm423, %v419, 0
  %427 = vmatprep.subr.bf16.mxu0 0
  %428 = vmatpush1.bf16.msra.mxu0 %v425
  %429 = vmatprep.subr.bf16.mxu0 0
  %430 = vmatpush1.bf16.msra.mxu0 0
  %431 = vmatprep.subr.bf16.mxu0 0
  %432 = vmatpush1.bf16.msra.mxu0 0
  %433 = vmatprep.subr.bf16.mxu0 0
  %434 = vmatpush1.bf16.msra.mxu0 0
  %435 = vmatprep.subr.bf16.mxu0 0
  %436 = vmatpush1.bf16.msra.mxu0 0
  %437 = vmatprep.subr.bf16.mxu0 0
  %438 = vmatpush1.bf16.msra.mxu0 0
  %439 = vmatprep.subr.bf16.mxu0 0
  %440 = vmatpush1.bf16.msra.mxu0 0
  %441 = vmatprep.subr.bf16.mxu0 0
  %442 = vmatpush1.bf16.msra.mxu0 0
  %443 = vmatprep.subr.bf16.mxu0 0
  %444 = vmatpush1.bf16.msra.mxu0 0
  %445 = vmatprep.subr.bf16.mxu0 0
  %446 = vmatpush1.bf16.msra.mxu0 0
  %447 = vmatprep.subr.bf16.mxu0 0
  %448 = vmatpush1.bf16.msra.mxu0 0
  %449 = vmatprep.subr.bf16.mxu0 0
  %450 = vmatpush1.bf16.msra.mxu0 0
  %451 = vmatprep.subr.bf16.mxu0 0
  %452 = vmatpush1.bf16.msra.mxu0 0
  %453 = vmatprep.subr.bf16.mxu0 0
  %454 = vmatpush1.bf16.msra.mxu0 0
  %455 = vmatprep.subr.bf16.mxu0 0
  %456 = vmatpush1.bf16.msra.mxu0 0
  %457 = vmatprep.subr.bf16.mxu0 0
  %458 = vmatpush1.bf16.msra.mxu0 0
  %459 = vmatprep.mubr.bf16.mxu0 0
  %460 = vmatmul.mubr.bf16.gmra.mrb[0].mxu0 %v421
  %v461 = vpop.f32.mrb[0].mxu0
  %v462 = vadd.f32 0.0, %v461
  %v463 = vpop.f32.mrb[0].mxu0
  %v464 = vpop.f32.mrb[0].mxu0
  %v465 = vpop.f32.mrb[0].mxu0
  %466 = vdwg.mxu0
  %468 = vrot.lane.b32.xlu0 %v353, 120
  %v469 = vpop.permute.xlu0 %468
  %470 = vrot.lane.b32.xlu0 %v354, 88
  %v471 = vpop.permute.xlu0 %470
  %v473 = vsel %vm358, %v469, 0
  %v476 = vsel %vm358, %v471, 0
  %478 = vmatprep.subr.bf16.mxu0 0
  %479 = vmatpush1.bf16.xpose.msra.mxu0 %v476
  %480 = vmatprep.subr.bf16.mxu0 0
  %481 = vmatpush1.bf16.xpose.msra.mxu0 0
  %482 = vmatprep.subr.bf16.mxu0 0
  %483 = vmatpush1.bf16.xpose.msra.mxu0 0
  %484 = vmatprep.subr.bf16.mxu0 0
  %485 = vmatpush1.bf16.xpose.msra.mxu0 0
  %486 = vmatprep.subr.bf16.mxu0 0
  %487 = vmatpush1.bf16.xpose.msra.mxu0 0
  %488 = vmatprep.subr.bf16.mxu0 0
  %489 = vmatpush1.bf16.xpose.msra.mxu0 0
  %490 = vmatprep.subr.bf16.mxu0 0
  %491 = vmatpush1.bf16.xpose.msra.mxu0 0
  %492 = vmatprep.subr.bf16.mxu0 0
  %493 = vmatpush1.bf16.xpose.msra.mxu0 0
  %494 = vmatprep.subr.bf16.mxu0 0
  %495 = vmatpush1.bf16.xpose.msra.mxu0 0
  %496 = vmatprep.subr.bf16.mxu0 0
  %497 = vmatpush1.bf16.xpose.msra.mxu0 0
  %498 = vmatprep.subr.bf16.mxu0 0
  %499 = vmatpush1.bf16.xpose.msra.mxu0 0
  %500 = vmatprep.subr.bf16.mxu0 0
  %501 = vmatpush1.bf16.xpose.msra.mxu0 0
  %502 = vmatprep.subr.bf16.mxu0 0
  %503 = vmatpush1.bf16.xpose.msra.mxu0 0
  %504 = vmatprep.subr.bf16.mxu0 0
  %505 = vmatpush1.bf16.xpose.msra.mxu0 0
  %506 = vmatprep.subr.bf16.mxu0 0
  %507 = vmatpush1.bf16.xpose.msra.mxu0 0
  %508 = vmatprep.subr.bf16.mxu0 0
  %509 = vmatpush1.bf16.xpose.msra.mxu0 0
  %510 = vmatprep.mubr.bf16.mxu0 0
  %511 = vmatmul.mubr.bf16.gmra.mrb[0].mxu0 %v473
  %v512 = vpop.f32.mrb[0].mxu0
  %v513 = vadd.f32 0.0, %v512
  %v514 = vpop.f32.mrb[0].mxu0
  %v515 = vpop.f32.mrb[0].mxu0
  %v516 = vpop.f32.mrb[0].mxu0
  %517 = vdwg.mxu0
  %v518 = vsel %vm237, %v513, -1e+09
  %v519 = vsel %vm358, %v518, -inf
  %520 = vmax.xlane.f32.xlu0 %v519
  %v521 = vpop.xlane.xlu0 %520
  %v522 = vsub.f32 %v518, %v521
  %v523 = vmul.f32 %v522, 1.442695
  %v524 = vpow.pop %v523
  %v525 = vsel %vm358, %v524, 0.0
  %526 = vadd.xlane.f32.xlu0 %v525
  %v527 = vpop.xlane.xlu0 %526
  %v528 = vrcp.pop %v527
  %v529 = vmul.f32 %v524, %v528
  %v530 = vpack.c.bf16 %v529, %v529
  %531 = vrot.lane.b32.xlu0 %v354, 56
  %v532 = vpop.permute.xlu0 %531
  %v534 = vsel %vm358, %v530, 0
  %v537 = vsel %vm423, %v532, 0
  %539 = vmatprep.subr.bf16.mxu0 0
  %540 = vmatpush1.bf16.msra.mxu0 %v537
  %541 = vmatprep.subr.bf16.mxu0 0
  %542 = vmatpush1.bf16.msra.mxu0 0
  %543 = vmatprep.subr.bf16.mxu0 0
  %544 = vmatpush1.bf16.msra.mxu0 0
  %545 = vmatprep.subr.bf16.mxu0 0
  %546 = vmatpush1.bf16.msra.mxu0 0
  %547 = vmatprep.subr.bf16.mxu0 0
  %548 = vmatpush1.bf16.msra.mxu0 0
  %549 = vmatprep.subr.bf16.mxu0 0
  %550 = vmatpush1.bf16.msra.mxu0 0
  %551 = vmatprep.subr.bf16.mxu0 0
  %552 = vmatpush1.bf16.msra.mxu0 0
  %553 = vmatprep.subr.bf16.mxu0 0
  %554 = vmatpush1.bf16.msra.mxu0 0
  %555 = vmatprep.subr.bf16.mxu0 0
  %556 = vmatpush1.bf16.msra.mxu0 0
  %557 = vmatprep.subr.bf16.mxu0 0
  %558 = vmatpush1.bf16.msra.mxu0 0
  %559 = vmatprep.subr.bf16.mxu0 0
  %560 = vmatpush1.bf16.msra.mxu0 0
  %561 = vmatprep.subr.bf16.mxu0 0
  %562 = vmatpush1.bf16.msra.mxu0 0
  %563 = vmatprep.subr.bf16.mxu0 0
  %564 = vmatpush1.bf16.msra.mxu0 0
  %565 = vmatprep.subr.bf16.mxu0 0
  %566 = vmatpush1.bf16.msra.mxu0 0
  %567 = vmatprep.subr.bf16.mxu0 0
  %568 = vmatpush1.bf16.msra.mxu0 0
  %569 = vmatprep.subr.bf16.mxu0 0
  %570 = vmatpush1.bf16.msra.mxu0 0
  %571 = vmatprep.mubr.bf16.mxu0 0
  %572 = vmatmul.mubr.bf16.gmra.mrb[0].mxu0 %v534
  %v573 = vpop.f32.mrb[0].mxu0
  %v574 = vadd.f32 0.0, %v573
  %v575 = vpop.f32.mrb[0].mxu0
  %v576 = vpop.f32.mrb[0].mxu0
  %v577 = vpop.f32.mrb[0].mxu0
  %578 = vdwg.mxu0
  %579 = vrot.lane.b32.xlu0 %v353, 112
  %v580 = vpop.permute.xlu0 %579
  %581 = vrot.lane.b32.xlu0 %v354, 80
  %v582 = vpop.permute.xlu0 %581
  %v584 = vsel %vm358, %v580, 0
  %v587 = vsel %vm358, %v582, 0
  %589 = vmatprep.subr.bf16.mxu0 0
  %590 = vmatpush1.bf16.xpose.msra.mxu0 %v587
  %591 = vmatprep.subr.bf16.mxu0 0
  %592 = vmatpush1.bf16.xpose.msra.mxu0 0
  %593 = vmatprep.subr.bf16.mxu0 0
  %594 = vmatpush1.bf16.xpose.msra.mxu0 0
  %595 = vmatprep.subr.bf16.mxu0 0
  %596 = vmatpush1.bf16.xpose.msra.mxu0 0
  %597 = vmatprep.subr.bf16.mxu0 0
  %598 = vmatpush1.bf16.xpose.msra.mxu0 0
  %599 = vmatprep.subr.bf16.mxu0 0
  %600 = vmatpush1.bf16.xpose.msra.mxu0 0
  %601 = vmatprep.subr.bf16.mxu0 0
  %602 = vmatpush1.bf16.xpose.msra.mxu0 0
  %603 = vmatprep.subr.bf16.mxu0 0
  %604 = vmatpush1.bf16.xpose.msra.mxu0 0
  %605 = vmatprep.subr.bf16.mxu0 0
  %606 = vmatpush1.bf16.xpose.msra.mxu0 0
  %607 = vmatprep.subr.bf16.mxu0 0
  %608 = vmatpush1.bf16.xpose.msra.mxu0 0
  %609 = vmatprep.subr.bf16.mxu0 0
  %610 = vmatpush1.bf16.xpose.msra.mxu0 0
  %611 = vmatprep.subr.bf16.mxu0 0
  %612 = vmatpush1.bf16.xpose.msra.mxu0 0
  %613 = vmatprep.subr.bf16.mxu0 0
  %614 = vmatpush1.bf16.xpose.msra.mxu0 0
  %615 = vmatprep.subr.bf16.mxu0 0
  %616 = vmatpush1.bf16.xpose.msra.mxu0 0
  %617 = vmatprep.subr.bf16.mxu0 0
  %618 = vmatpush1.bf16.xpose.msra.mxu0 0
  %619 = vmatprep.subr.bf16.mxu0 0
  %620 = vmatpush1.bf16.xpose.msra.mxu0 0
  %621 = vmatprep.mubr.bf16.mxu0 0
  %622 = vmatmul.mubr.bf16.gmra.mrb[0].mxu0 %v584
  %v623 = vpop.f32.mrb[0].mxu0
  %v624 = vadd.f32 0.0, %v623
  %v625 = vpop.f32.mrb[0].mxu0
  %v626 = vpop.f32.mrb[0].mxu0
  %v627 = vpop.f32.mrb[0].mxu0
  %628 = vdwg.mxu0
  %v629 = vsel %vm237, %v624, -1e+09
  %v630 = vsel %vm358, %v629, -inf
  %631 = vmax.xlane.f32.xlu0 %v630
  %v632 = vpop.xlane.xlu0 %631
  %v633 = vsub.f32 %v629, %v632
  %v634 = vmul.f32 %v633, 1.442695
  %v635 = vpow.pop %v634
  %v636 = vsel %vm358, %v635, 0.0
  %637 = vadd.xlane.f32.xlu0 %v636
  %v638 = vpop.xlane.xlu0 %637
  %v639 = vrcp.pop %v638
  %v640 = vmul.f32 %v635, %v639
  %v641 = vpack.c.bf16 %v640, %v640
  %642 = vrot.lane.b32.xlu0 %v354, 48
  %v643 = vpop.permute.xlu0 %642
  %v645 = vsel %vm358, %v641, 0
  %v648 = vsel %vm423, %v643, 0
  %650 = vmatprep.subr.bf16.mxu0 0
  %651 = vmatpush1.bf16.msra.mxu0 %v648
  %652 = vmatprep.subr.bf16.mxu0 0
  %653 = vmatpush1.bf16.msra.mxu0 0
  %654 = vmatprep.subr.bf16.mxu0 0
  %655 = vmatpush1.bf16.msra.mxu0 0
  %656 = vmatprep.subr.bf16.mxu0 0
  %657 = vmatpush1.bf16.msra.mxu0 0
  %658 = vmatprep.subr.bf16.mxu0 0
  %659 = vmatpush1.bf16.msra.mxu0 0
  %660 = vmatprep.subr.bf16.mxu0 0
  %661 = vmatpush1.bf16.msra.mxu0 0
  %662 = vmatprep.subr.bf16.mxu0 0
  %663 = vmatpush1.bf16.msra.mxu0 0
  %664 = vmatprep.subr.bf16.mxu0 0
  %665 = vmatpush1.bf16.msra.mxu0 0
  %666 = vmatprep.subr.bf16.mxu0 0
  %667 = vmatpush1.bf16.msra.mxu0 0
  %668 = vmatprep.subr.bf16.mxu0 0
  %669 = vmatpush1.bf16.msra.mxu0 0
  %670 = vmatprep.subr.bf16.mxu0 0
  %671 = vmatpush1.bf16.msra.mxu0 0
  %672 = vmatprep.subr.bf16.mxu0 0
  %673 = vmatpush1.bf16.msra.mxu0 0
  %674 = vmatprep.subr.bf16.mxu0 0
  %675 = vmatpush1.bf16.msra.mxu0 0
  %676 = vmatprep.subr.bf16.mxu0 0
  %677 = vmatpush1.bf16.msra.mxu0 0
  %678 = vmatprep.subr.bf16.mxu0 0
  %679 = vmatpush1.bf16.msra.mxu0 0
  %680 = vmatprep.subr.bf16.mxu0 0
  %681 = vmatpush1.bf16.msra.mxu0 0
  %682 = vmatprep.mubr.bf16.mxu0 0
  %683 = vmatmul.mubr.bf16.gmra.mrb[0].mxu0 %v645
  %v684 = vpop.f32.mrb[0].mxu0
  %v685 = vadd.f32 0.0, %v684
  %v686 = vpop.f32.mrb[0].mxu0
  %v687 = vpop.f32.mrb[0].mxu0
  %v688 = vpop.f32.mrb[0].mxu0
  %689 = vdwg.mxu0
  %690 = vrot.lane.b32.xlu0 %v353, 104
  %v691 = vpop.permute.xlu0 %690
  %692 = vrot.lane.b32.xlu0 %v354, 72
  %v693 = vpop.permute.xlu0 %692
  %v695 = vsel %vm358, %v691, 0
  %v698 = vsel %vm358, %v693, 0
  %700 = vmatprep.subr.bf16.mxu0 0
  %701 = vmatpush1.bf16.xpose.msra.mxu0 %v698
  %702 = vmatprep.subr.bf16.mxu0 0
  %703 = vmatpush1.bf16.xpose.msra.mxu0 0
  %704 = vmatprep.subr.bf16.mxu0 0
  %705 = vmatpush1.bf16.xpose.msra.mxu0 0
  %706 = vmatprep.subr.bf16.mxu0 0
  %707 = vmatpush1.bf16.xpose.msra.mxu0 0
  %708 = vmatprep.subr.bf16.mxu0 0
  %709 = vmatpush1.bf16.xpose.msra.mxu0 0
  %710 = vmatprep.subr.bf16.mxu0 0
  %711 = vmatpush1.bf16.xpose.msra.mxu0 0
  %712 = vmatprep.subr.bf16.mxu0 0
  %713 = vmatpush1.bf16.xpose.msra.mxu0 0
  %714 = vmatprep.subr.bf16.mxu0 0
  %715 = vmatpush1.bf16.xpose.msra.mxu0 0
  %716 = vmatprep.subr.bf16.mxu0 0
  %717 = vmatpush1.bf16.xpose.msra.mxu0 0
  %718 = vmatprep.subr.bf16.mxu0 0
  %719 = vmatpush1.bf16.xpose.msra.mxu0 0
  %720 = vmatprep.subr.bf16.mxu0 0
  %721 = vmatpush1.bf16.xpose.msra.mxu0 0
  %722 = vmatprep.subr.bf16.mxu0 0
  %723 = vmatpush1.bf16.xpose.msra.mxu0 0
  %724 = vmatprep.subr.bf16.mxu0 0
  %725 = vmatpush1.bf16.xpose.msra.mxu0 0
  %726 = vmatprep.subr.bf16.mxu0 0
  %727 = vmatpush1.bf16.xpose.msra.mxu0 0
  %728 = vmatprep.subr.bf16.mxu0 0
  %729 = vmatpush1.bf16.xpose.msra.mxu0 0
  %730 = vmatprep.subr.bf16.mxu0 0
  %731 = vmatpush1.bf16.xpose.msra.mxu0 0
  %732 = vmatprep.mubr.bf16.mxu0 0
  %733 = vmatmul.mubr.bf16.gmra.mrb[0].mxu0 %v695
  %v734 = vpop.f32.mrb[0].mxu0
  %v735 = vadd.f32 0.0, %v734
  %v736 = vpop.f32.mrb[0].mxu0
  %v737 = vpop.f32.mrb[0].mxu0
  %v738 = vpop.f32.mrb[0].mxu0
  %739 = vdwg.mxu0
  %v740 = vsel %vm237, %v735, -1e+09
  %v741 = vsel %vm358, %v740, -inf
  %742 = vmax.xlane.f32.xlu0 %v741
  %v743 = vpop.xlane.xlu0 %742
  %v744 = vsub.f32 %v740, %v743
  %v745 = vmul.f32 %v744, 1.442695
  %v746 = vpow.pop %v745
  %v747 = vsel %vm358, %v746, 0.0
  %748 = vadd.xlane.f32.xlu0 %v747
  %v749 = vpop.xlane.xlu0 %748
  %v750 = vrcp.pop %v749
  %v751 = vmul.f32 %v746, %v750
  %v752 = vpack.c.bf16 %v751, %v751
  %753 = vrot.lane.b32.xlu0 %v354, 40
  %v754 = vpop.permute.xlu0 %753
  %v756 = vsel %vm358, %v752, 0
  %v759 = vsel %vm423, %v754, 0
  %761 = vmatprep.subr.bf16.mxu0 0
  %762 = vmatpush1.bf16.msra.mxu0 %v759
  %763 = vmatprep.subr.bf16.mxu0 0
  %764 = vmatpush1.bf16.msra.mxu0 0
  %765 = vmatprep.subr.bf16.mxu0 0
  %766 = vmatpush1.bf16.msra.mxu0 0
  %767 = vmatprep.subr.bf16.mxu0 0
  %768 = vmatpush1.bf16.msra.mxu0 0
  %769 = vmatprep.subr.bf16.mxu0 0
  %770 = vmatpush1.bf16.msra.mxu0 0
  %771 = vmatprep.subr.bf16.mxu0 0
  %772 = vmatpush1.bf16.msra.mxu0 0
  %773 = vmatprep.subr.bf16.mxu0 0
  %774 = vmatpush1.bf16.msra.mxu0 0
  %775 = vmatprep.subr.bf16.mxu0 0
  %776 = vmatpush1.bf16.msra.mxu0 0
  %777 = vmatprep.subr.bf16.mxu0 0
  %778 = vmatpush1.bf16.msra.mxu0 0
  %779 = vmatprep.subr.bf16.mxu0 0
  %780 = vmatpush1.bf16.msra.mxu0 0
  %781 = vmatprep.subr.bf16.mxu0 0
  %782 = vmatpush1.bf16.msra.mxu0 0
  %783 = vmatprep.subr.bf16.mxu0 0
  %784 = vmatpush1.bf16.msra.mxu0 0
  %785 = vmatprep.subr.bf16.mxu0 0
  %786 = vmatpush1.bf16.msra.mxu0 0
  %787 = vmatprep.subr.bf16.mxu0 0
  %788 = vmatpush1.bf16.msra.mxu0 0
  %789 = vmatprep.subr.bf16.mxu0 0
  %790 = vmatpush1.bf16.msra.mxu0 0
  %791 = vmatprep.subr.bf16.mxu0 0
  %792 = vmatpush1.bf16.msra.mxu0 0
  %793 = vmatprep.mubr.bf16.mxu0 0
  %794 = vmatmul.mubr.bf16.gmra.mrb[0].mxu0 %v756
  %v795 = vpop.f32.mrb[0].mxu0
  %v796 = vadd.f32 0.0, %v795
  %v797 = vpop.f32.mrb[0].mxu0
  %v798 = vpop.f32.mrb[0].mxu0
  %v799 = vpop.f32.mrb[0].mxu0
  %800 = vdwg.mxu0
  %802 = vrot.lane.b32.xlu0 %v574, 8
  %v803 = vpop.permute.xlu0 %802
  %806 = vrot.lane.b32.xlu0 %v685, 16
  %v807 = vpop.permute.xlu0 %806
  %810 = vrot.lane.b32.xlu0 %v796, 24
  %v811 = vpop.permute.xlu0 %810
  %v813 = vsel %vm358, %v462, %v803
  %vm814 = vcmask 130048
  %v815 = vsel %vm814, %v813, %v807
  %vm816 = vcmask 195584
  %v817 = vsel %vm816, %v815, %v811
  %v818 = vmul.f32 %v349, 0.35355338
  %v819 = vpack.c.bf16 %v818, %v818
  %v820 = vpack.c.bf16 %v349, %v349
  %822 = vrot.lane.b32.xlu0 %v820, 96
  %v823 = vpop.permute.xlu0 %822
  %v825 = vsel %vm358, %v819, 0
  %v828 = vsel %vm358, %v823, 0
  %830 = vmatprep.subr.bf16.mxu0 0
  %831 = vmatpush1.bf16.xpose.msra.mxu0 %v828
  %832 = vmatprep.subr.bf16.mxu0 0
  %833 = vmatpush1.bf16.xpose.msra.mxu0 0
  %834 = vmatprep.subr.bf16.mxu0 0
  %835 = vmatpush1.bf16.xpose.msra.mxu0 0
  %836 = vmatprep.subr.bf16.mxu0 0
  %837 = vmatpush1.bf16.xpose.msra.mxu0 0
  %838 = vmatprep.subr.bf16.mxu0 0
  %839 = vmatpush1.bf16.xpose.msra.mxu0 0
  %840 = vmatprep.subr.bf16.mxu0 0
  %841 = vmatpush1.bf16.xpose.msra.mxu0 0
  %842 = vmatprep.subr.bf16.mxu0 0
  %843 = vmatpush1.bf16.xpose.msra.mxu0 0
  %844 = vmatprep.subr.bf16.mxu0 0
  %845 = vmatpush1.bf16.xpose.msra.mxu0 0
  %846 = vmatprep.subr.bf16.mxu0 0
  %847 = vmatpush1.bf16.xpose.msra.mxu0 0
  %848 = vmatprep.subr.bf16.mxu0 0
  %849 = vmatpush1.bf16.xpose.msra.mxu0 0
  %850 = vmatprep.subr.bf16.mxu0 0
  %851 = vmatpush1.bf16.xpose.msra.mxu0 0
  %852 = vmatprep.subr.bf16.mxu0 0
  %853 = vmatpush1.bf16.xpose.msra.mxu0 0
  %854 = vmatprep.subr.bf16.mxu0 0
  %855 = vmatpush1.bf16.xpose.msra.mxu0 0
  %856 = vmatprep.subr.bf16.mxu0 0
  %857 = vmatpush1.bf16.xpose.msra.mxu0 0
  %858 = vmatprep.subr.bf16.mxu0 0
  %859 = vmatpush1.bf16.xpose.msra.mxu0 0
  %860 = vmatprep.subr.bf16.mxu0 0
  %861 = vmatpush1.bf16.xpose.msra.mxu0 0
  %862 = vmatprep.mubr.bf16.mxu0 0
  %863 = vmatmul.mubr.bf16.gmra.mrb[0].mxu0 %v825
  %v864 = vpop.f32.mrb[0].mxu0
  %v865 = vadd.f32 0.0, %v864
  %v866 = vpop.f32.mrb[0].mxu0
  %v867 = vpop.f32.mrb[0].mxu0
  %v868 = vpop.f32.mrb[0].mxu0
  %869 = vdwg.mxu0
  %v870 = vsel %vm237, %v865, -1e+09
  %v871 = vsel %vm358, %v870, -inf
  %872 = vmax.xlane.f32.xlu0 %v871
  %v873 = vpop.xlane.xlu0 %872
  %v874 = vsub.f32 %v870, %v873
  %v875 = vmul.f32 %v874, 1.442695
  %v876 = vpow.pop %v875
  %v877 = vsel %vm358, %v876, 0.0
  %878 = vadd.xlane.f32.xlu0 %v877
  %v879 = vpop.xlane.xlu0 %878
  %v880 = vrcp.pop %v879
  %v881 = vmul.f32 %v876, %v880
  %v882 = vpack.c.bf16 %v881, %v881
  %883 = vrot.lane.b32.xlu0 %v820, 64
  %v884 = vpop.permute.xlu0 %883
  %v886 = vsel %vm358, %v882, 0
  %v889 = vsel %vm423, %v884, 0
  %891 = vmatprep.subr.bf16.mxu0 0
  %892 = vmatpush1.bf16.msra.mxu0 %v889
  %893 = vmatprep.subr.bf16.mxu0 0
  %894 = vmatpush1.bf16.msra.mxu0 0
  %895 = vmatprep.subr.bf16.mxu0 0
  %896 = vmatpush1.bf16.msra.mxu0 0
  %897 = vmatprep.subr.bf16.mxu0 0
  %898 = vmatpush1.bf16.msra.mxu0 0
  %899 = vmatprep.subr.bf16.mxu0 0
  %900 = vmatpush1.bf16.msra.mxu0 0
  %901 = vmatprep.subr.bf16.mxu0 0
  %902 = vmatpush1.bf16.msra.mxu0 0
  %903 = vmatprep.subr.bf16.mxu0 0
  %904 = vmatpush1.bf16.msra.mxu0 0
  %905 = vmatprep.subr.bf16.mxu0 0
  %906 = vmatpush1.bf16.msra.mxu0 0
  %907 = vmatprep.subr.bf16.mxu0 0
  %908 = vmatpush1.bf16.msra.mxu0 0
  %909 = vmatprep.subr.bf16.mxu0 0
  %910 = vmatpush1.bf16.msra.mxu0 0
  %911 = vmatprep.subr.bf16.mxu0 0
  %912 = vmatpush1.bf16.msra.mxu0 0
  %913 = vmatprep.subr.bf16.mxu0 0
  %914 = vmatpush1.bf16.msra.mxu0 0
  %915 = vmatprep.subr.bf16.mxu0 0
  %916 = vmatpush1.bf16.msra.mxu0 0
  %917 = vmatprep.subr.bf16.mxu0 0
  %918 = vmatpush1.bf16.msra.mxu0 0
  %919 = vmatprep.subr.bf16.mxu0 0
  %920 = vmatpush1.bf16.msra.mxu0 0
  %921 = vmatprep.subr.bf16.mxu0 0
  %922 = vmatpush1.bf16.msra.mxu0 0
  %923 = vmatprep.mubr.bf16.mxu0 0
  %924 = vmatmul.mubr.bf16.gmra.mrb[0].mxu0 %v886
  %v925 = vpop.f32.mrb[0].mxu0
  %v926 = vadd.f32 0.0, %v925
  %v927 = vpop.f32.mrb[0].mxu0
  %v928 = vpop.f32.mrb[0].mxu0
  %v929 = vpop.f32.mrb[0].mxu0
  %930 = vdwg.mxu0
  %932 = vrot.lane.b32.xlu0 %v819, 120
  %v933 = vpop.permute.xlu0 %932
  %934 = vrot.lane.b32.xlu0 %v820, 88
  %v935 = vpop.permute.xlu0 %934
  %v937 = vsel %vm358, %v933, 0
  %v940 = vsel %vm358, %v935, 0
  %942 = vmatprep.subr.bf16.mxu0 0
  %943 = vmatpush1.bf16.xpose.msra.mxu0 %v940
  %944 = vmatprep.subr.bf16.mxu0 0
  %945 = vmatpush1.bf16.xpose.msra.mxu0 0
  %946 = vmatprep.subr.bf16.mxu0 0
  %947 = vmatpush1.bf16.xpose.msra.mxu0 0
  %948 = vmatprep.subr.bf16.mxu0 0
  %949 = vmatpush1.bf16.xpose.msra.mxu0 0
  %950 = vmatprep.subr.bf16.mxu0 0
  %951 = vmatpush1.bf16.xpose.msra.mxu0 0
  %952 = vmatprep.subr.bf16.mxu0 0
  %953 = vmatpush1.bf16.xpose.msra.mxu0 0
  %954 = vmatprep.subr.bf16.mxu0 0
  %955 = vmatpush1.bf16.xpose.msra.mxu0 0
  %956 = vmatprep.subr.bf16.mxu0 0
  %957 = vmatpush1.bf16.xpose.msra.mxu0 0
  %958 = vmatprep.subr.bf16.mxu0 0
  %959 = vmatpush1.bf16.xpose.msra.mxu0 0
  %960 = vmatprep.subr.bf16.mxu0 0
  %961 = vmatpush1.bf16.xpose.msra.mxu0 0
  %962 = vmatprep.subr.bf16.mxu0 0
  %963 = vmatpush1.bf16.xpose.msra.mxu0 0
  %964 = vmatprep.subr.bf16.mxu0 0
  %965 = vmatpush1.bf16.xpose.msra.mxu0 0
  %966 = vmatprep.subr.bf16.mxu0 0
  %967 = vmatpush1.bf16.xpose.msra.mxu0 0
  %968 = vmatprep.subr.bf16.mxu0 0
  %969 = vmatpush1.bf16.xpose.msra.mxu0 0
  %970 = vmatprep.subr.bf16.mxu0 0
  %971 = vmatpush1.bf16.xpose.msra.mxu0 0
  %972 = vmatprep.subr.bf16.mxu0 0
  %973 = vmatpush1.bf16.xpose.msra.mxu0 0
  %974 = vmatprep.mubr.bf16.mxu0 0
  %975 = vmatmul.mubr.bf16.gmra.mrb[0].mxu0 %v937
  %v976 = vpop.f32.mrb[0].mxu0
  %v977 = vadd.f32 0.0, %v976
  %v978 = vpop.f32.mrb[0].mxu0
  %v979 = vpop.f32.mrb[0].mxu0
  %v980 = vpop.f32.mrb[0].mxu0
  %981 = vdwg.mxu0
  %v982 = vsel %vm237, %v977, -1e+09
  %v983 = vsel %vm358, %v982, -inf
  %984 = vmax.xlane.f32.xlu0 %v983
  %v985 = vpop.xlane.xlu0 %984
  %v986 = vsub.f32 %v982, %v985
  %v987 = vmul.f32 %v986, 1.442695
  %v988 = vpow.pop %v987
  %v989 = vsel %vm358, %v988, 0.0
  %990 = vadd.xlane.f32.xlu0 %v989
  %v991 = vpop.xlane.xlu0 %990
  %v992 = vrcp.pop %v991
  %v993 = vmul.f32 %v988, %v992
  %v994 = vpack.c.bf16 %v993, %v993
  %995 = vrot.lane.b32.xlu0 %v820, 56
  %v996 = vpop.permute.xlu0 %995
  %v998 = vsel %vm358, %v994, 0
  %v1001 = vsel %vm423, %v996, 0
  %1003 = vmatprep.subr.bf16.mxu0 0
  %1004 = vmatpush1.bf16.msra.mxu0 %v1001
  %1005 = vmatprep.subr.bf16.mxu0 0
  %1006 = vmatpush1.bf16.msra.mxu0 0
  %1007 = vmatprep.subr.bf16.mxu0 0
  %1008 = vmatpush1.bf16.msra.mxu0 0
  %1009 = vmatprep.subr.bf16.mxu0 0
  %1010 = vmatpush1.bf16.msra.mxu0 0
  %1011 = vmatprep.subr.bf16.mxu0 0
  %1012 = vmatpush1.bf16.msra.mxu0 0
  %1013 = vmatprep.subr.bf16.mxu0 0
  %1014 = vmatpush1.bf16.msra.mxu0 0
  %1015 = vmatprep.subr.bf16.mxu0 0
  %1016 = vmatpush1.bf16.msra.mxu0 0
  %1017 = vmatprep.subr.bf16.mxu0 0
  %1018 = vmatpush1.bf16.msra.mxu0 0
  %1019 = vmatprep.subr.bf16.mxu0 0
  %1020 = vmatpush1.bf16.msra.mxu0 0
  %1021 = vmatprep.subr.bf16.mxu0 0
  %1022 = vmatpush1.bf16.msra.mxu0 0
  %1023 = vmatprep.subr.bf16.mxu0 0
  %1024 = vmatpush1.bf16.msra.mxu0 0
  %1025 = vmatprep.subr.bf16.mxu0 0
  %1026 = vmatpush1.bf16.msra.mxu0 0
  %1027 = vmatprep.subr.bf16.mxu0 0
  %1028 = vmatpush1.bf16.msra.mxu0 0
  %1029 = vmatprep.subr.bf16.mxu0 0
  %1030 = vmatpush1.bf16.msra.mxu0 0
  %1031 = vmatprep.subr.bf16.mxu0 0
  %1032 = vmatpush1.bf16.msra.mxu0 0
  %1033 = vmatprep.subr.bf16.mxu0 0
  %1034 = vmatpush1.bf16.msra.mxu0 0
  %1035 = vmatprep.mubr.bf16.mxu0 0
  %1036 = vmatmul.mubr.bf16.gmra.mrb[0].mxu0 %v998
  %v1037 = vpop.f32.mrb[0].mxu0
  %v1038 = vadd.f32 0.0, %v1037
  %v1039 = vpop.f32.mrb[0].mxu0
  %v1040 = vpop.f32.mrb[0].mxu0
  %v1041 = vpop.f32.mrb[0].mxu0
  %1042 = vdwg.mxu0
  %1043 = vrot.lane.b32.xlu0 %v819, 112
  %v1044 = vpop.permute.xlu0 %1043
  %1045 = vrot.lane.b32.xlu0 %v820, 80
  %v1046 = vpop.permute.xlu0 %1045
  %v1048 = vsel %vm358, %v1044, 0
  %v1051 = vsel %vm358, %v1046, 0
  %1053 = vmatprep.subr.bf16.mxu0 0
  %1054 = vmatpush1.bf16.xpose.msra.mxu0 %v1051
  %1055 = vmatprep.subr.bf16.mxu0 0
  %1056 = vmatpush1.bf16.xpose.msra.mxu0 0
  %1057 = vmatprep.subr.bf16.mxu0 0
  %1058 = vmatpush1.bf16.xpose.msra.mxu0 0
  %1059 = vmatprep.subr.bf16.mxu0 0
  %1060 = vmatpush1.bf16.xpose.msra.mxu0 0
  %1061 = vmatprep.subr.bf16.mxu0 0
  %1062 = vmatpush1.bf16.xpose.msra.mxu0 0
  %1063 = vmatprep.subr.bf16.mxu0 0
  %1064 = vmatpush1.bf16.xpose.msra.mxu0 0
  %1065 = vmatprep.subr.bf16.mxu0 0
  %1066 = vmatpush1.bf16.xpose.msra.mxu0 0
  %1067 = vmatprep.subr.bf16.mxu0 0
  %1068 = vmatpush1.bf16.xpose.msra.mxu0 0
  %1069 = vmatprep.subr.bf16.mxu0 0
  %1070 = vmatpush1.bf16.xpose.msra.mxu0 0
  %1071 = vmatprep.subr.bf16.mxu0 0
  %1072 = vmatpush1.bf16.xpose.msra.mxu0 0
  %1073 = vmatprep.subr.bf16.mxu0 0
  %1074 = vmatpush1.bf16.xpose.msra.mxu0 0
  %1075 = vmatprep.subr.bf16.mxu0 0
  %1076 = vmatpush1.bf16.xpose.msra.mxu0 0
  %1077 = vmatprep.subr.bf16.mxu0 0
  %1078 = vmatpush1.bf16.xpose.msra.mxu0 0
  %1079 = vmatprep.subr.bf16.mxu0 0
  %1080 = vmatpush1.bf16.xpose.msra.mxu0 0
  %1081 = vmatprep.subr.bf16.mxu0 0
  %1082 = vmatpush1.bf16.xpose.msra.mxu0 0
  %1083 = vmatprep.subr.bf16.mxu0 0
  %1084 = vmatpush1.bf16.xpose.msra.mxu0 0
  %1085 = vmatprep.mubr.bf16.mxu0 0
  %1086 = vmatmul.mubr.bf16.gmra.mrb[0].mxu0 %v1048
  %v1087 = vpop.f32.mrb[0].mxu0
  %v1088 = vadd.f32 0.0, %v1087
  %v1089 = vpop.f32.mrb[0].mxu0
  %v1090 = vpop.f32.mrb[0].mxu0
  %v1091 = vpop.f32.mrb[0].mxu0
  %1092 = vdwg.mxu0
  %v1093 = vsel %vm237, %v1088, -1e+09
  %v1094 = vsel %vm358, %v1093, -inf
  %1095 = vmax.xlane.f32.xlu0 %v1094
  %v1096 = vpop.xlane.xlu0 %1095
  %v1097 = vsub.f32 %v1093, %v1096
  %v1098 = vmul.f32 %v1097, 1.442695
  %v1099 = vpow.pop %v1098
  %v1100 = vsel %vm358, %v1099, 0.0
  %1101 = vadd.xlane.f32.xlu0 %v1100
  %v1102 = vpop.xlane.xlu0 %1101
  %v1103 = vrcp.pop %v1102
  %v1104 = vmul.f32 %v1099, %v1103
  %v1105 = vpack.c.bf16 %v1104, %v1104
  %1106 = vrot.lane.b32.xlu0 %v820, 48
  %v1107 = vpop.permute.xlu0 %1106
  %v1109 = vsel %vm358, %v1105, 0
  %v1112 = vsel %vm423, %v1107, 0
  %1114 = vmatprep.subr.bf16.mxu0 0
  %1115 = vmatpush1.bf16.msra.mxu0 %v1112
  %1116 = vmatprep.subr.bf16.mxu0 0
  %1117 = vmatpush1.bf16.msra.mxu0 0
  %1118 = vmatprep.subr.bf16.mxu0 0
  %1119 = vmatpush1.bf16.msra.mxu0 0
  %1120 = vmatprep.subr.bf16.mxu0 0
  %1121 = vmatpush1.bf16.msra.mxu0 0
  %1122 = vmatprep.subr.bf16.mxu0 0
  %1123 = vmatpush1.bf16.msra.mxu0 0
  %1124 = vmatprep.subr.bf16.mxu0 0
  %1125 = vmatpush1.bf16.msra.mxu0 0
  %1126 = vmatprep.subr.bf16.mxu0 0
  %1127 = vmatpush1.bf16.msra.mxu0 0
  %1128 = vmatprep.subr.bf16.mxu0 0
  %1129 = vmatpush1.bf16.msra.mxu0 0
  %1130 = vmatprep.subr.bf16.mxu0 0
  %1131 = vmatpush1.bf16.msra.mxu0 0
  %1132 = vmatprep.subr.bf16.mxu0 0
  %1133 = vmatpush1.bf16.msra.mxu0 0
  %1134 = vmatprep.subr.bf16.mxu0 0
  %1135 = vmatpush1.bf16.msra.mxu0 0
  %1136 = vmatprep.subr.bf16.mxu0 0
  %1137 = vmatpush1.bf16.msra.mxu0 0
  %1138 = vmatprep.subr.bf16.mxu0 0
  %1139 = vmatpush1.bf16.msra.mxu0 0
  %1140 = vmatprep.subr.bf16.mxu0 0
  %1141 = vmatpush1.bf16.msra.mxu0 0
  %1142 = vmatprep.subr.bf16.mxu0 0
  %1143 = vmatpush1.bf16.msra.mxu0 0
  %1144 = vmatprep.subr.bf16.mxu0 0
  %1145 = vmatpush1.bf16.msra.mxu0 0
  %1146 = vmatprep.mubr.bf16.mxu0 0
  %1147 = vmatmul.mubr.bf16.gmra.mrb[0].mxu0 %v1109
  %v1148 = vpop.f32.mrb[0].mxu0
  %v1149 = vadd.f32 0.0, %v1148
  %v1150 = vpop.f32.mrb[0].mxu0
  %v1151 = vpop.f32.mrb[0].mxu0
  %v1152 = vpop.f32.mrb[0].mxu0
  %1153 = vdwg.mxu0
  %1154 = vrot.lane.b32.xlu0 %v819, 104
  %v1155 = vpop.permute.xlu0 %1154
  %1156 = vrot.lane.b32.xlu0 %v820, 72
  %v1157 = vpop.permute.xlu0 %1156
  %v1159 = vsel %vm358, %v1155, 0
  %v1162 = vsel %vm358, %v1157, 0
  %1164 = vmatprep.subr.bf16.mxu0 0
  %1165 = vmatpush1.bf16.xpose.msra.mxu0 %v1162
  %1166 = vmatprep.subr.bf16.mxu0 0
  %1167 = vmatpush1.bf16.xpose.msra.mxu0 0
  %1168 = vmatprep.subr.bf16.mxu0 0
  %1169 = vmatpush1.bf16.xpose.msra.mxu0 0
  %1170 = vmatprep.subr.bf16.mxu0 0
  %1171 = vmatpush1.bf16.xpose.msra.mxu0 0
  %1172 = vmatprep.subr.bf16.mxu0 0
  %1173 = vmatpush1.bf16.xpose.msra.mxu0 0
  %1174 = vmatprep.subr.bf16.mxu0 0
  %1175 = vmatpush1.bf16.xpose.msra.mxu0 0
  %1176 = vmatprep.subr.bf16.mxu0 0
  %1177 = vmatpush1.bf16.xpose.msra.mxu0 0
  %1178 = vmatprep.subr.bf16.mxu0 0
  %1179 = vmatpush1.bf16.xpose.msra.mxu0 0
  %1180 = vmatprep.subr.bf16.mxu0 0
  %1181 = vmatpush1.bf16.xpose.msra.mxu0 0
  %1182 = vmatprep.subr.bf16.mxu0 0
  %1183 = vmatpush1.bf16.xpose.msra.mxu0 0
  %1184 = vmatprep.subr.bf16.mxu0 0
  %1185 = vmatpush1.bf16.xpose.msra.mxu0 0
  %1186 = vmatprep.subr.bf16.mxu0 0
  %1187 = vmatpush1.bf16.xpose.msra.mxu0 0
  %1188 = vmatprep.subr.bf16.mxu0 0
  %1189 = vmatpush1.bf16.xpose.msra.mxu0 0
  %1190 = vmatprep.subr.bf16.mxu0 0
  %1191 = vmatpush1.bf16.xpose.msra.mxu0 0
  %1192 = vmatprep.subr.bf16.mxu0 0
  %1193 = vmatpush1.bf16.xpose.msra.mxu0 0
  %1194 = vmatprep.subr.bf16.mxu0 0
  %1195 = vmatpush1.bf16.xpose.msra.mxu0 0
  %1196 = vmatprep.mubr.bf16.mxu0 0
  %1197 = vmatmul.mubr.bf16.gmra.mrb[0].mxu0 %v1159
  %v1198 = vpop.f32.mrb[0].mxu0
  %v1199 = vadd.f32 0.0, %v1198
  %v1200 = vpop.f32.mrb[0].mxu0
  %v1201 = vpop.f32.mrb[0].mxu0
  %v1202 = vpop.f32.mrb[0].mxu0
  %1203 = vdwg.mxu0
  %v1204 = vsel %vm237, %v1199, -1e+09
  %v1205 = vsel %vm358, %v1204, -inf
  %1206 = vmax.xlane.f32.xlu0 %v1205
  %v1207 = vpop.xlane.xlu0 %1206
  %v1208 = vsub.f32 %v1204, %v1207
  %v1209 = vmul.f32 %v1208, 1.442695
  %v1210 = vpow.pop %v1209
  %v1211 = vsel %vm358, %v1210, 0.0
  %1212 = vadd.xlane.f32.xlu0 %v1211
  %v1213 = vpop.xlane.xlu0 %1212
  %v1214 = vrcp.pop %v1213
  %v1215 = vmul.f32 %v1210, %v1214
  %v1216 = vpack.c.bf16 %v1215, %v1215
  %1217 = vrot.lane.b32.xlu0 %v820, 40
  %v1218 = vpop.permute.xlu0 %1217
  %v1220 = vsel %vm358, %v1216, 0
  %v1223 = vsel %vm423, %v1218, 0
  %1225 = vmatprep.subr.bf16.mxu0 0
  %1226 = vmatpush1.bf16.msra.mxu0 %v1223
  %1227 = vmatprep.subr.bf16.mxu0 0
  %1228 = vmatpush1.bf16.msra.mxu0 0
  %1229 = vmatprep.subr.bf16.mxu0 0
  %1230 = vmatpush1.bf16.msra.mxu0 0
  %1231 = vmatprep.subr.bf16.mxu0 0
  %1232 = vmatpush1.bf16.msra.mxu0 0
  %1233 = vmatprep.subr.bf16.mxu0 0
  %1234 = vmatpush1.bf16.msra.mxu0 0
  %1235 = vmatprep.subr.bf16.mxu0 0
  %1236 = vmatpush1.bf16.msra.mxu0 0
  %1237 = vmatprep.subr.bf16.mxu0 0
  %1238 = vmatpush1.bf16.msra.mxu0 0
  %1239 = vmatprep.subr.bf16.mxu0 0
  %1240 = vmatpush1.bf16.msra.mxu0 0
  %1241 = vmatprep.subr.bf16.mxu0 0
  %1242 = vmatpush1.bf16.msra.mxu0 0
  %1243 = vmatprep.subr.bf16.mxu0 0
  %1244 = vmatpush1.bf16.msra.mxu0 0
  %1245 = vmatprep.subr.bf16.mxu0 0
  %1246 = vmatpush1.bf16.msra.mxu0 0
  %1247 = vmatprep.subr.bf16.mxu0 0
  %1248 = vmatpush1.bf16.msra.mxu0 0
  %1249 = vmatprep.subr.bf16.mxu0 0
  %1250 = vmatpush1.bf16.msra.mxu0 0
  %1251 = vmatprep.subr.bf16.mxu0 0
  %1252 = vmatpush1.bf16.msra.mxu0 0
  %1253 = vmatprep.subr.bf16.mxu0 0
  %1254 = vmatpush1.bf16.msra.mxu0 0
  %1255 = vmatprep.subr.bf16.mxu0 0
  %1256 = vmatpush1.bf16.msra.mxu0 0
  %1257 = vmatprep.mubr.bf16.mxu0 0
  %1258 = vmatmul.mubr.bf16.gmra.mrb[0].mxu0 %v1220
  %v1259 = vpop.f32.mrb[0].mxu0
  %v1260 = vadd.f32 0.0, %v1259
  %v1261 = vpop.f32.mrb[0].mxu0
  %v1262 = vpop.f32.mrb[0].mxu0
  %v1263 = vpop.f32.mrb[0].mxu0
  %1264 = vdwg.mxu0
  %1266 = vrot.lane.b32.xlu0 %v1038, 8
  %v1267 = vpop.permute.xlu0 %1266
  %1270 = vrot.lane.b32.xlu0 %v1149, 16
  %v1271 = vpop.permute.xlu0 %1270
  %1274 = vrot.lane.b32.xlu0 %v1260, 24
  %v1275 = vpop.permute.xlu0 %1274
  %v1277 = vsel %vm358, %v926, %v1267
  %v1278 = vsel %vm814, %v1277, %v1271
  %v1279 = vsel %vm816, %v1278, %v1275
  %v1280 = vpack.c.bf16 %v1279, %v817
  %v1281 = vld [vmem:[%s21] sm:$0xf]
  %v1282 = vld [vmem:[%s21 + $0x4] sm:$0xf]
  %v1283 = vld [vmem:[%s21 + $0x8] sm:$0xf]
  %v1284 = vld [vmem:[%s21 + $0xc] sm:$0xf]
  %v1285 = vld [vmem:[%s23] sm:$0x1]
  %v1287 = vlaneseq
  %v1288 = vshrl.u32 %v1287, 7
  %v1289 = vsub.s32 0, %v1288
  %v1290 = vrot.slane %v1285, %v1289
  %v1296 = vunpack.c.l.b16 %v1281
  %v1297 = vunpack.c.l.b16 %v1282
  %v1298 = vunpack.c.l.b16 %v1283
  %v1299 = vunpack.c.l.b16 %v1284
  %v1300 = vpack.c.b16 %v1297, %v1296
  %v1301 = vpack.c.b16 %v1299, %v1298
  %v1305 = vsel %vm238, %v1280, 0
  %1307 = vmatprep.subr.bf16.mxu0 0
  %1308 = vmatpush1.bf16.msra.mxu0 %v1300
  %1309 = vmatprep.subr.bf16.mxu0 0
  %1310 = vmatpush1.bf16.msra.mxu0 %v1301
  %1311 = vmatprep.subr.bf16.mxu0 0
  %1312 = vmatpush1.bf16.msra.mxu0 0
  %1313 = vmatprep.subr.bf16.mxu0 0
  %1314 = vmatpush1.bf16.msra.mxu0 0
  %1315 = vmatprep.subr.bf16.mxu0 0
  %1316 = vmatpush1.bf16.msra.mxu0 0
  %1317 = vmatprep.subr.bf16.mxu0 0
  %1318 = vmatpush1.bf16.msra.mxu0 0
  %1319 = vmatprep.subr.bf16.mxu0 0
  %1320 = vmatpush1.bf16.msra.mxu0 0
  %1321 = vmatprep.subr.bf16.mxu0 0
  %1322 = vmatpush1.bf16.msra.mxu0 0
  %1323 = vmatprep.subr.bf16.mxu0 0
  %1324 = vmatpush1.bf16.msra.mxu0 0
  %1325 = vmatprep.subr.bf16.mxu0 0
  %1326 = vmatpush1.bf16.msra.mxu0 0
  %1327 = vmatprep.subr.bf16.mxu0 0
  %1328 = vmatpush1.bf16.msra.mxu0 0
  %1329 = vmatprep.subr.bf16.mxu0 0
  %1330 = vmatpush1.bf16.msra.mxu0 0
  %1331 = vmatprep.subr.bf16.mxu0 0
  %1332 = vmatpush1.bf16.msra.mxu0 0
  %1333 = vmatprep.subr.bf16.mxu0 0
  %1334 = vmatpush1.bf16.msra.mxu0 0
  %1335 = vmatprep.subr.bf16.mxu0 0
  %1336 = vmatpush1.bf16.msra.mxu0 0
  %1337 = vmatprep.subr.bf16.mxu0 0
  %1338 = vmatpush1.bf16.msra.mxu0 0
  %1339 = vmatprep.mubr.bf16.mxu0 0
  %1340 = vmatmul.mubr.bf16.gmra.mrb[0].mxu0 %v1305
  %v1341 = vpop.f32.mrb[0].mxu0
  %v1342 = vadd.f32 %v1290, %v1341
  %v1343 = vpop.f32.mrb[0].mxu0
  %v1344 = vpop.f32.mrb[0].mxu0
  %v1345 = vadd.f32 %v1290, %v1344
  %v1346 = vpop.f32.mrb[0].mxu0
  %1347 = vdwg.mxu0
  %v1348 = vadd.f32 %v227, %v1342
  %v1349 = vadd.f32 %v232, %v1345
  %v1350 = vsel %vm238, %v1348, 0.0
  %1351 = vadd.xlane.f32.xlu0 %v1350
  %v1352 = vpop.xlane.xlu0 %1351
  %v1353 = vsel %vm238, %v1349, 0.0
  %1354 = vadd.xlane.f32.xlu0 %v1353
  %v1355 = vpop.xlane.xlu0 %1354
  %v1356 = vmul.f32 %v1352, %v245
  %v1357 = vmul.f32 %v1355, %v245
  %v1358 = vsub.f32 %v1348, %v1356
  %v1359 = vsub.f32 %v1349, %v1357
  %v1360 = vmul.f32 %v1358, %v1358
  %v1361 = vmul.f32 %v1359, %v1359
  %v1362 = vsel %vm238, %v1360, 0.0
  %1363 = vadd.xlane.f32.xlu0 %v1362
  %v1364 = vpop.xlane.xlu0 %1363
  %v1365 = vsel %vm238, %v1361, 0.0
  %1366 = vadd.xlane.f32.xlu0 %v1365
  %v1367 = vpop.xlane.xlu0 %1366
  %v1368 = vmul.f32 %v1364, %v245
  %v1369 = vmul.f32 %v1367, %v245
  %v1370 = vadd.f32 %v1368, 1e-05
  %v1371 = vadd.f32 %v1369, 1e-05
  %v1372 = vrsqrt.pop %v1370
  %v1373 = vrsqrt.pop %v1371
  %v1374 = vmul.f32 %v1358, %v1372
  %v1375 = vmul.f32 %v1359, %v1373
  %v1376 = vld [vmem:[%s25] sm:$0x1]
  %v1378 = vlaneseq
  %v1379 = vshrl.u32 %v1378, 7
  %v1380 = vsub.s32 0, %v1379
  %v1381 = vrot.slane %v1376, %v1380
  %v1383 = vmul.f32 %v1374, %v1381
  %v1384 = vmul.f32 %v1375, %v1381
  %v1385 = vld [vmem:[%s27] sm:$0x1]
  %v1387 = vlaneseq
  %v1388 = vshrl.u32 %v1387, 7
  %v1389 = vsub.s32 0, %v1388
  %v1390 = vrot.slane %v1385, %v1389
  %v1392 = vadd.f32 %v1383, %v1390
  %v1393 = vadd.f32 %v1384, %v1390
  %v1394 = vpack.c.bf16 %v1393, %v1392
  %v1395 = vld [vmem:[%s29] sm:$0xf]
  %v1396 = vld [vmem:[%s29 + $0x4] sm:$0xf]
  %v1397 = vld [vmem:[%s29 + $0x8] sm:$0xf]
  %v1398 = vld [vmem:[%s29 + $0xc] sm:$0xf]
  %v1399 = vld [vmem:[%s31] sm:$0x1]
  %v1401 = vlaneseq
  %v1402 = vshrl.u32 %v1401, 7
  %v1403 = vsub.s32 0, %v1402
  %v1404 = vrot.slane %v1399, %v1403
  %v1410 = vunpack.c.l.b16 %v1395
  %v1411 = vunpack.c.l.b16 %v1396
  %v1412 = vunpack.c.l.b16 %v1397
  %v1413 = vunpack.c.l.b16 %v1398
  %v1414 = vpack.c.b16 %v1411, %v1410
  %v1415 = vpack.c.b16 %v1413, %v1412
  %v1419 = vsel %vm238, %v1394, 0
  %1421 = vmatprep.subr.bf16.mxu0 0
  %1422 = vmatpush1.bf16.msra.mxu0 %v1414
  %1423 = vmatprep.subr.bf16.mxu0 0
  %1424 = vmatpush1.bf16.msra.mxu0 %v1415
  %1425 = vmatprep.subr.bf16.mxu0 0
  %1426 = vmatpush1.bf16.msra.mxu0 0
  %1427 = vmatprep.subr.bf16.mxu0 0
  %1428 = vmatpush1.bf16.msra.mxu0 0
  %1429 = vmatprep.subr.bf16.mxu0 0
  %1430 = vmatpush1.bf16.msra.mxu0 0
  %1431 = vmatprep.subr.bf16.mxu0 0
  %1432 = vmatpush1.bf16.msra.mxu0 0
  %1433 = vmatprep.subr.bf16.mxu0 0
  %1434 = vmatpush1.bf16.msra.mxu0 0
  %1435 = vmatprep.subr.bf16.mxu0 0
  %1436 = vmatpush1.bf16.msra.mxu0 0
  %1437 = vmatprep.subr.bf16.mxu0 0
  %1438 = vmatpush1.bf16.msra.mxu0 0
  %1439 = vmatprep.subr.bf16.mxu0 0
  %1440 = vmatpush1.bf16.msra.mxu0 0
  %1441 = vmatprep.subr.bf16.mxu0 0
  %1442 = vmatpush1.bf16.msra.mxu0 0
  %1443 = vmatprep.subr.bf16.mxu0 0
  %1444 = vmatpush1.bf16.msra.mxu0 0
  %1445 = vmatprep.subr.bf16.mxu0 0
  %1446 = vmatpush1.bf16.msra.mxu0 0
  %1447 = vmatprep.subr.bf16.mxu0 0
  %1448 = vmatpush1.bf16.msra.mxu0 0
  %1449 = vmatprep.subr.bf16.mxu0 0
  %1450 = vmatpush1.bf16.msra.mxu0 0
  %1451 = vmatprep.subr.bf16.mxu0 0
  %1452 = vmatpush1.bf16.msra.mxu0 0
  %1453 = vmatprep.mubr.bf16.mxu0 0
  %1454 = vmatmul.mubr.bf16.gmra.mrb[0].mxu0 %v1419
  %v1455 = vpop.f32.mrb[0].mxu0
  %v1456 = vadd.f32 %v1404, %v1455
  %v1457 = vpop.f32.mrb[0].mxu0
  %v1458 = vpop.f32.mrb[0].mxu0
  %v1459 = vadd.f32 %v1404, %v1458
  %v1460 = vpop.f32.mrb[0].mxu0
  %1461 = vdwg.mxu0
  %v1462 = vmul.f32 %v1456, 0.5
  %v1463 = vmul.f32 %v1459, 0.5
  %v1464 = vmul.f32 %v1456, 0.044715
  %v1465 = vmul.f32 %v1459, 0.044715
  %v1466 = vmul.f32 %v1464, %v1456
  %v1467 = vmul.f32 %v1465, %v1459
  %v1468 = vmul.f32 %v1466, %v1456
  %v1469 = vmul.f32 %v1467, %v1459
  %v1470 = vadd.f32 %v1456, %v1468
  %v1471 = vadd.f32 %v1459, %v1469
  %v1472 = vmul.f32 %v1470, 0.7978846
  %v1473 = vmul.f32 %v1471, 0.7978846
  %v1474 = vtanh.pop %v1472
  %v1475 = vtanh.pop %v1473
  %v1476 = vadd.f32 %v1474, 1.0
  %v1477 = vadd.f32 %v1475, 1.0
  %v1478 = vmul.f32 %v1462, %v1476
  %v1479 = vmul.f32 %v1463, %v1477
  %v1480 = vpack.c.bf16 %v1479, %v1478
  %v1481 = vld [vmem:[%s33] sm:$0xf]
  %v1482 = vld [vmem:[%s33 + $0x4] sm:$0xf]
  %v1483 = vld [vmem:[%s33 + $0x8] sm:$0xf]
  %v1484 = vld [vmem:[%s33 + $0xc] sm:$0xf]
  %v1485 = vld [vmem:[%s33 + $0x10] sm:$0xf]
  %v1486 = vld [vmem:[%s33 + $0x14] sm:$0xf]
  %v1487 = vld [vmem:[%s33 + $0x18] sm:$0xf]
  %v1488 = vld [vmem:[%s33 + $0x1c] sm:$0xf]
  %v1489 = vld [vmem:[%s33 + $0x20] sm:$0xf]
  %v1490 = vld [vmem:[%s33 + $0x24] sm:$0xf]
  %v1491 = vld [vmem:[%s33 + $0x28] sm:$0xf]
  %v1492 = vld [vmem:[%s33 + $0x2c] sm:$0xf]
  %v1493 = vld [vmem:[%s33 + $0x30] sm:$0xf]
  %v1494 = vld [vmem:[%s33 + $0x34] sm:$0xf]
  %v1495 = vld [vmem:[%s33 + $0x38] sm:$0xf]
  %v1496 = vld [vmem:[%s33 + $0x3c] sm:$0xf]
  %v1497 = vld [vmem:[%s35] sm:$0x1]
  %v1499 = vlaneseq
  %v1500 = vshrl.u32 %v1499, 7
  %v1501 = vsub.s32 0, %v1500
  %v1502 = vrot.slane %v1497, %v1501
  %v1520 = vunpack.c.l.b16 %v1481
  %v1521 = vunpack.c.l.b16 %v1482
  %v1522 = vunpack.c.l.b16 %v1483
  %v1523 = vunpack.c.l.b16 %v1484
  %v1524 = vunpack.c.l.b16 %v1485
  %v1525 = vunpack.c.l.b16 %v1486
  %v1526 = vunpack.c.l.b16 %v1487
  %v1527 = vunpack.c.l.b16 %v1488
  %v1528 = vunpack.c.l.b16 %v1489
  %v1529 = vunpack.c.l.b16 %v1490
  %v1530 = vunpack.c.l.b16 %v1491
  %v1531 = vunpack.c.l.b16 %v1492
  %v1532 = vunpack.c.l.b16 %v1493
  %v1533 = vunpack.c.l.b16 %v1494
  %v1534 = vunpack.c.l.b16 %v1495
  %v1535 = vunpack.c.l.b16 %v1496
  %v1536 = vpack.c.b16 %v1521, %v1520
  %v1537 = vpack.c.b16 %v1523, %v1522
  %v1538 = vpack.c.b16 %v1525, %v1524
  %v1539 = vpack.c.b16 %v1527, %v1526
  %v1540 = vpack.c.b16 %v1529, %v1528
  %v1541 = vpack.c.b16 %v1531, %v1530
  %v1542 = vpack.c.b16 %v1533, %v1532
  %v1543 = vpack.c.b16 %v1535, %v1534
  %1552 = vmatprep.subr.bf16.mxu0 0
  %1553 = vmatpush1.bf16.msra.mxu0 %v1536
  %1554 = vmatprep.subr.bf16.mxu0 0
  %1555 = vmatpush1.bf16.msra.mxu0 %v1537
  %1556 = vmatprep.subr.bf16.mxu0 0
  %1557 = vmatpush1.bf16.msra.mxu0 %v1538
  %1558 = vmatprep.subr.bf16.mxu0 0
  %1559 = vmatpush1.bf16.msra.mxu0 %v1539
  %1560 = vmatprep.subr.bf16.mxu0 0
  %1561 = vmatpush1.bf16.msra.mxu0 %v1540
  %1562 = vmatprep.subr.bf16.mxu0 0
  %1563 = vmatpush1.bf16.msra.mxu0 %v1541
  %1564 = vmatprep.subr.bf16.mxu0 0
  %1565 = vmatpush1.bf16.msra.mxu0 %v1542
  %1566 = vmatprep.subr.bf16.mxu0 0
  %1567 = vmatpush1.bf16.msra.mxu0 %v1543
  %1568 = vmatprep.subr.bf16.mxu0 0
  %1569 = vmatpush1.bf16.msra.mxu0 0
  %1570 = vmatprep.subr.bf16.mxu0 0
  %1571 = vmatpush1.bf16.msra.mxu0 0
  %1572 = vmatprep.subr.bf16.mxu0 0
  %1573 = vmatpush1.bf16.msra.mxu0 0
  %1574 = vmatprep.subr.bf16.mxu0 0
  %1575 = vmatpush1.bf16.msra.mxu0 0
  %1576 = vmatprep.subr.bf16.mxu0 0
  %1577 = vmatpush1.bf16.msra.mxu0 0
  %1578 = vmatprep.subr.bf16.mxu0 0
  %1579 = vmatpush1.bf16.msra.mxu0 0
  %1580 = vmatprep.subr.bf16.mxu0 0
  %1581 = vmatpush1.bf16.msra.mxu0 0
  %1582 = vmatprep.subr.bf16.mxu0 0
  %1583 = vmatpush1.bf16.msra.mxu0 0
  %1584 = vmatprep.mubr.bf16.mxu0 0
  %1585 = vmatmul.mubr.bf16.gmra.mrb[0].mxu0 %v1480
  %v1586 = vpop.f32.mrb[0].mxu0
  %v1587 = vadd.f32 %v1502, %v1586
  %v1588 = vpop.f32.mrb[0].mxu0
  %v1589 = vpop.f32.mrb[0].mxu0
  %v1590 = vadd.f32 %v1502, %v1589
  %v1591 = vpop.f32.mrb[0].mxu0
  %1592 = vdwg.mxu0
  %v1593 = vadd.f32 %v1348, %v1587
  %v1594 = vadd.f32 %v1349, %v1590
  %v1595 = vsel %vm238, %v1593, 0.0
  %1596 = vadd.xlane.f32.xlu0 %v1595
  %v1597 = vpop.xlane.xlu0 %1596
  %v1598 = vsel %vm238, %v1594, 0.0
  %1599 = vadd.xlane.f32.xlu0 %v1598
  %v1600 = vpop.xlane.xlu0 %1599
  %v1601 = vmul.f32 %v1597, %v245
  %v1602 = vmul.f32 %v1600, %v245
  %v1603 = vsub.f32 %v1593, %v1601
  %v1604 = vsub.f32 %v1594, %v1602
  %v1605 = vmul.f32 %v1603, %v1603
  %v1606 = vmul.f32 %v1604, %v1604
  %v1607 = vsel %vm238, %v1605, 0.0
  %1608 = vadd.xlane.f32.xlu0 %v1607
  %v1609 = vpop.xlane.xlu0 %1608
  %v1610 = vsel %vm238, %v1606, 0.0
  %1611 = vadd.xlane.f32.xlu0 %v1610
  %v1612 = vpop.xlane.xlu0 %1611
  %v1613 = vmul.f32 %v1609, %v245
  %v1614 = vmul.f32 %v1612, %v245
  %v1615 = vadd.f32 %v1613, 1e-05
  %v1616 = vadd.f32 %v1614, 1e-05
  %v1617 = vrsqrt.pop %v1615
  %v1618 = vrsqrt.pop %v1616
  %v1619 = vmul.f32 %v1603, %v1617
  %v1620 = vmul.f32 %v1604, %v1618
  %v1621 = vld [vmem:[%s37] sm:$0x1]
  %v1623 = vlaneseq
  %v1624 = vshrl.u32 %v1623, 7
  %v1625 = vsub.s32 0, %v1624
  %v1626 = vrot.slane %v1621, %v1625
  %v1628 = vmul.f32 %v1619, %v1626
  %v1629 = vmul.f32 %v1620, %v1626
  %v1630 = vld [vmem:[%s39] sm:$0x1]
  %v1632 = vlaneseq
  %v1633 = vshrl.u32 %v1632, 7
  %v1634 = vsub.s32 0, %v1633
  %v1635 = vrot.slane %v1630, %v1634
  %v1637 = vadd.f32 %v1628, %v1635
  %v1638 = vadd.f32 %v1629, %v1635
  %v1639 = vpack.c.bf16 %v1638, %v1637
  %v1640 = vld [vmem:[%s41] sm:$0xf]
  %v1641 = vld [vmem:[%s41 + $0x4] sm:$0xf]
  %v1642 = vld [vmem:[%s41 + $0x8] sm:$0xf]
  %v1643 = vld [vmem:[%s41 + $0xc] sm:$0xf]
  %v1644 = vld [vmem:[%s43] sm:$0x1]
  %v1646 = vlaneseq
  %v1647 = vshrl.u32 %v1646, 7
  %v1648 = vsub.s32 0, %v1647
  %v1649 = vrot.slane %v1644, %v1648
  %v1655 = vunpack.c.l.b16 %v1640
  %v1656 = vunpack.c.l.b16 %v1641
  %v1657 = vunpack.c.l.b16 %v1642
  %v1658 = vunpack.c.l.b16 %v1643
  %v1659 = vpack.c.b16 %v1656, %v1655
  %v1660 = vpack.c.b16 %v1658, %v1657
  %v1664 = vsel %vm238, %v1639, 0
  %1666 = vmatprep.subr.bf16.mxu0 0
  %1667 = vmatpush1.bf16.msra.mxu0 %v1659
  %1668 = vmatprep.subr.bf16.mxu0 0
  %1669 = vmatpush1.bf16.msra.mxu0 %v1660
  %1670 = vmatprep.subr.bf16.mxu0 0
  %1671 = vmatpush1.bf16.msra.mxu0 0
  %1672 = vmatprep.subr.bf16.mxu0 0
  %1673 = vmatpush1.bf16.msra.mxu0 0
  %1674 = vmatprep.subr.bf16.mxu0 0
  %1675 = vmatpush1.bf16.msra.mxu0 0
  %1676 = vmatprep.subr.bf16.mxu0 0
  %1677 = vmatpush1.bf16.msra.mxu0 0
  %1678 = vmatprep.subr.bf16.mxu0 0
  %1679 = vmatpush1.bf16.msra.mxu0 0
  %1680 = vmatprep.subr.bf16.mxu0 0
  %1681 = vmatpush1.bf16.msra.mxu0 0
  %1682 = vmatprep.subr.bf16.mxu0 0
  %1683 = vmatpush1.bf16.msra.mxu0 0
  %1684 = vmatprep.subr.bf16.mxu0 0
  %1685 = vmatpush1.bf16.msra.mxu0 0
  %1686 = vmatprep.subr.bf16.mxu0 0
  %1687 = vmatpush1.bf16.msra.mxu0 0
  %1688 = vmatprep.subr.bf16.mxu0 0
  %1689 = vmatpush1.bf16.msra.mxu0 0
  %1690 = vmatprep.subr.bf16.mxu0 0
  %1691 = vmatpush1.bf16.msra.mxu0 0
  %1692 = vmatprep.subr.bf16.mxu0 0
  %1693 = vmatpush1.bf16.msra.mxu0 0
  %1694 = vmatprep.subr.bf16.mxu0 0
  %1695 = vmatpush1.bf16.msra.mxu0 0
  %1696 = vmatprep.subr.bf16.mxu0 0
  %1697 = vmatpush1.bf16.msra.mxu0 0
  %1698 = vmatprep.mubr.bf16.mxu0 0
  %1699 = vmatmul.mubr.bf16.gmra.mrb[0].mxu0 %v1664
  %v1700 = vpop.f32.mrb[0].mxu0
  %v1701 = vadd.f32 %v1649, %v1700
  %v1702 = vpop.f32.mrb[0].mxu0
  %v1703 = vpop.f32.mrb[0].mxu0
  %v1704 = vadd.f32 %v1649, %v1703
  %v1705 = vpop.f32.mrb[0].mxu0
  %1706 = vdwg.mxu0
  %v1707 = vmul.f32 %v1701, 0.35355338
  %v1708 = vpack.c.bf16 %v1707, %v1707
  %v1709 = vpack.c.bf16 %v1701, %v1701
  %1711 = vrot.lane.b32.xlu0 %v1709, 96
  %v1712 = vpop.permute.xlu0 %1711
  %v1714 = vsel %vm358, %v1708, 0
  %v1717 = vsel %vm358, %v1712, 0
  %1719 = vmatprep.subr.bf16.mxu0 0
  %1720 = vmatpush1.bf16.xpose.msra.mxu0 %v1717
  %1721 = vmatprep.subr.bf16.mxu0 0
  %1722 = vmatpush1.bf16.xpose.msra.mxu0 0
  %1723 = vmatprep.subr.bf16.mxu0 0
  %1724 = vmatpush1.bf16.xpose.msra.mxu0 0
  %1725 = vmatprep.subr.bf16.mxu0 0
  %1726 = vmatpush1.bf16.xpose.msra.mxu0 0
  %1727 = vmatprep.subr.bf16.mxu0 0
  %1728 = vmatpush1.bf16.xpose.msra.mxu0 0
  %1729 = vmatprep.subr.bf16.mxu0 0
  %1730 = vmatpush1.bf16.xpose.msra.mxu0 0
  %1731 = vmatprep.subr.bf16.mxu0 0
  %1732 = vmatpush1.bf16.xpose.msra.mxu0 0
  %1733 = vmatprep.subr.bf16.mxu0 0
  %1734 = vmatpush1.bf16.xpose.msra.mxu0 0
  %1735 = vmatprep.subr.bf16.mxu0 0
  %1736 = vmatpush1.bf16.xpose.msra.mxu0 0
  %1737 = vmatprep.subr.bf16.mxu0 0
  %1738 = vmatpush1.bf16.xpose.msra.mxu0 0
  %1739 = vmatprep.subr.bf16.mxu0 0
  %1740 = vmatpush1.bf16.xpose.msra.mxu0 0
  %1741 = vmatprep.subr.bf16.mxu0 0
  %1742 = vmatpush1.bf16.xpose.msra.mxu0 0
  %1743 = vmatprep.subr.bf16.mxu0 0
  %1744 = vmatpush1.bf16.xpose.msra.mxu0 0
  %1745 = vmatprep.subr.bf16.mxu0 0
  %1746 = vmatpush1.bf16.xpose.msra.mxu0 0
  %1747 = vmatprep.subr.bf16.mxu0 0
  %1748 = vmatpush1.bf16.xpose.msra.mxu0 0
  %1749 = vmatprep.subr.bf16.mxu0 0
  %1750 = vmatpush1.bf16.xpose.msra.mxu0 0
  %1751 = vmatprep.mubr.bf16.mxu0 0
  %1752 = vmatmul.mubr.bf16.gmra.mrb[0].mxu0 %v1714
  %v1753 = vpop.f32.mrb[0].mxu0
  %v1754 = vadd.f32 0.0, %v1753
  %v1755 = vpop.f32.mrb[0].mxu0
  %v1756 = vpop.f32.mrb[0].mxu0
  %v1757 = vpop.f32.mrb[0].mxu0
  %1758 = vdwg.mxu0
  %v1759 = vsel %vm237, %v1754, -1e+09
  %v1760 = vsel %vm358, %v1759, -inf
  %1761 = vmax.xlane.f32.xlu0 %v1760
  %v1762 = vpop.xlane.xlu0 %1761
  %v1763 = vsub.f32 %v1759, %v1762
  %v1764 = vmul.f32 %v1763, 1.442695
  %v1765 = vpow.pop %v1764
  %v1766 = vsel %vm358, %v1765, 0.0
  %1767 = vadd.xlane.f32.xlu0 %v1766
  %v1768 = vpop.xlane.xlu0 %1767
  %v1769 = vrcp.pop %v1768
  %v1770 = vmul.f32 %v1765, %v1769
  %v1771 = vpack.c.bf16 %v1770, %v1770
  %1772 = vrot.lane.b32.xlu0 %v1709, 64
  %v1773 = vpop.permute.xlu0 %1772
  %v1775 = vsel %vm358, %v1771, 0
  %v1778 = vsel %vm423, %v1773, 0
  %1780 = vmatprep.subr.bf16.mxu0 0
  %1781 = vmatpush1.bf16.msra.mxu0 %v1778
  %1782 = vmatprep.subr.bf16.mxu0 0
  %1783 = vmatpush1.bf16.msra.mxu0 0
  %1784 = vmatprep.subr.bf16.mxu0 0
  %1785 = vmatpush1.bf16.msra.mxu0 0
  %1786 = vmatprep.subr.bf16.mxu0 0
  %1787 = vmatpush1.bf16.msra.mxu0 0
  %1788 = vmatprep.subr.bf16.mxu0 0
  %1789 = vmatpush1.bf16.msra.mxu0 0
  %1790 = vmatprep.subr.bf16.mxu0 0
  %1791 = vmatpush1.bf16.msra.mxu0 0
  %1792 = vmatprep.subr.bf16.mxu0 0
  %1793 = vmatpush1.bf16.msra.mxu0 0
  %1794 = vmatprep.subr.bf16.mxu0 0
  %1795 = vmatpush1.bf16.msra.mxu0 0
  %1796 = vmatprep.subr.bf16.mxu0 0
  %1797 = vmatpush1.bf16.msra.mxu0 0
  %1798 = vmatprep.subr.bf16.mxu0 0
  %1799 = vmatpush1.bf16.msra.mxu0 0
  %1800 = vmatprep.subr.bf16.mxu0 0
  %1801 = vmatpush1.bf16.msra.mxu0 0
  %1802 = vmatprep.subr.bf16.mxu0 0
  %1803 = vmatpush1.bf16.msra.mxu0 0
  %1804 = vmatprep.subr.bf16.mxu0 0
  %1805 = vmatpush1.bf16.msra.mxu0 0
  %1806 = vmatprep.subr.bf16.mxu0 0
  %1807 = vmatpush1.bf16.msra.mxu0 0
  %1808 = vmatprep.subr.bf16.mxu0 0
  %1809 = vmatpush1.bf16.msra.mxu0 0
  %1810 = vmatprep.subr.bf16.mxu0 0
  %1811 = vmatpush1.bf16.msra.mxu0 0
  %1812 = vmatprep.mubr.bf16.mxu0 0
  %1813 = vmatmul.mubr.bf16.gmra.mrb[0].mxu0 %v1775
  %v1814 = vpop.f32.mrb[0].mxu0
  %v1815 = vadd.f32 0.0, %v1814
  %v1816 = vpop.f32.mrb[0].mxu0
  %v1817 = vpop.f32.mrb[0].mxu0
  %v1818 = vpop.f32.mrb[0].mxu0
  %1819 = vdwg.mxu0
  %1821 = vrot.lane.b32.xlu0 %v1708, 120
  %v1822 = vpop.permute.xlu0 %1821
  %1823 = vrot.lane.b32.xlu0 %v1709, 88
  %v1824 = vpop.permute.xlu0 %1823
  %v1826 = vsel %vm358, %v1822, 0
  %v1829 = vsel %vm358, %v1824, 0
  %1831 = vmatprep.subr.bf16.mxu0 0
  %1832 = vmatpush1.bf16.xpose.msra.mxu0 %v1829
  %1833 = vmatprep.subr.bf16.mxu0 0
  %1834 = vmatpush1.bf16.xpose.msra.mxu0 0
  %1835 = vmatprep.subr.bf16.mxu0 0
  %1836 = vmatpush1.bf16.xpose.msra.mxu0 0
  %1837 = vmatprep.subr.bf16.mxu0 0
  %1838 = vmatpush1.bf16.xpose.msra.mxu0 0
  %1839 = vmatprep.subr.bf16.mxu0 0
  %1840 = vmatpush1.bf16.xpose.msra.mxu0 0
  %1841 = vmatprep.subr.bf16.mxu0 0
  %1842 = vmatpush1.bf16.xpose.msra.mxu0 0
  %1843 = vmatprep.subr.bf16.mxu0 0
  %1844 = vmatpush1.bf16.xpose.msra.mxu0 0
  %1845 = vmatprep.subr.bf16.mxu0 0
  %1846 = vmatpush1.bf16.xpose.msra.mxu0 0
  %1847 = vmatprep.subr.bf16.mxu0 0
  %1848 = vmatpush1.bf16.xpose.msra.mxu0 0
  %1849 = vmatprep.subr.bf16.mxu0 0
  %1850 = vmatpush1.bf16.xpose.msra.mxu0 0
  %1851 = vmatprep.subr.bf16.mxu0 0
  %1852 = vmatpush1.bf16.xpose.msra.mxu0 0
  %1853 = vmatprep.subr.bf16.mxu0 0
  %1854 = vmatpush1.bf16.xpose.msra.mxu0 0
  %1855 = vmatprep.subr.bf16.mxu0 0
  %1856 = vmatpush1.bf16.xpose.msra.mxu0 0
  %1857 = vmatprep.subr.bf16.mxu0 0
  %1858 = vmatpush1.bf16.xpose.msra.mxu0 0
  %1859 = vmatprep.subr.bf16.mxu0 0
  %1860 = vmatpush1.bf16.xpose.msra.mxu0 0
  %1861 = vmatprep.subr.bf16.mxu0 0
  %1862 = vmatpush1.bf16.xpose.msra.mxu0 0
  %1863 = vmatprep.mubr.bf16.mxu0 0
  %1864 = vmatmul.mubr.bf16.gmra.mrb[0].mxu0 %v1826
  %v1865 = vpop.f32.mrb[0].mxu0
  %v1866 = vadd.f32 0.0, %v1865
  %v1867 = vpop.f32.mrb[0].mxu0
  %v1868 = vpop.f32.mrb[0].mxu0
  %v1869 = vpop.f32.mrb[0].mxu0
  %1870 = vdwg.mxu0
  %v1871 = vsel %vm237, %v1866, -1e+09
  %v1872 = vsel %vm358, %v1871, -inf
  %1873 = vmax.xlane.f32.xlu0 %v1872
  %v1874 = vpop.xlane.xlu0 %1873
  %v1875 = vsub.f32 %v1871, %v1874
  %v1876 = vmul.f32 %v1875, 1.442695
  %v1877 = vpow.pop %v1876
  %v1878 = vsel %vm358, %v1877, 0.0
  %1879 = vadd.xlane.f32.xlu0 %v1878
  %v1880 = vpop.xlane.xlu0 %1879
  %v1881 = vrcp.pop %v1880
  %v1882 = vmul.f32 %v1877, %v1881
  %v1883 = vpack.c.bf16 %v1882, %v1882
  %1884 = vrot.lane.b32.xlu0 %v1709, 56
  %v1885 = vpop.permute.xlu0 %1884
  %v1887 = vsel %vm358, %v1883, 0
  %v1890 = vsel %vm423, %v1885, 0
  %1892 = vmatprep.subr.bf16.mxu0 0
  %1893 = vmatpush1.bf16.msra.mxu0 %v1890
  %1894 = vmatprep.subr.bf16.mxu0 0
  %1895 = vmatpush1.bf16.msra.mxu0 0
  %1896 = vmatprep.subr.bf16.mxu0 0
  %1897 = vmatpush1.bf16.msra.mxu0 0
  %1898 = vmatprep.subr.bf16.mxu0 0
  %1899 = vmatpush1.bf16.msra.mxu0 0
  %1900 = vmatprep.subr.bf16.mxu0 0
  %1901 = vmatpush1.bf16.msra.mxu0 0
  %1902 = vmatprep.subr.bf16.mxu0 0
  %1903 = vmatpush1.bf16.msra.mxu0 0
  %1904 = vmatprep.subr.bf16.mxu0 0
  %1905 = vmatpush1.bf16.msra.mxu0 0
  %1906 = vmatprep.subr.bf16.mxu0 0
  %1907 = vmatpush1.bf16.msra.mxu0 0
  %1908 = vmatprep.subr.bf16.mxu0 0
  %1909 = vmatpush1.bf16.msra.mxu0 0
  %1910 = vmatprep.subr.bf16.mxu0 0
  %1911 = vmatpush1.bf16.msra.mxu0 0
  %1912 = vmatprep.subr.bf16.mxu0 0
  %1913 = vmatpush1.bf16.msra.mxu0 0
  %1914 = vmatprep.subr.bf16.mxu0 0
  %1915 = vmatpush1.bf16.msra.mxu0 0
  %1916 = vmatprep.subr.bf16.mxu0 0
  %1917 = vmatpush1.bf16.msra.mxu0 0
  %1918 = vmatprep.subr.bf16.mxu0 0
  %1919 = vmatpush1.bf16.msra.mxu0 0
  %1920 = vmatprep.subr.bf16.mxu0 0
  %1921 = vmatpush1.bf16.msra.mxu0 0
  %1922 = vmatprep.subr.bf16.mxu0 0
  %1923 = vmatpush1.bf16.msra.mxu0 0
  %1924 = vmatprep.mubr.bf16.mxu0 0
  %1925 = vmatmul.mubr.bf16.gmra.mrb[0].mxu0 %v1887
  %v1926 = vpop.f32.mrb[0].mxu0
  %v1927 = vadd.f32 0.0, %v1926
  %v1928 = vpop.f32.mrb[0].mxu0
  %v1929 = vpop.f32.mrb[0].mxu0
  %v1930 = vpop.f32.mrb[0].mxu0
  %1931 = vdwg.mxu0
  %1932 = vrot.lane.b32.xlu0 %v1708, 112
  %v1933 = vpop.permute.xlu0 %1932
  %1934 = vrot.lane.b32.xlu0 %v1709, 80
  %v1935 = vpop.permute.xlu0 %1934
  %v1937 = vsel %vm358, %v1933, 0
  %v1940 = vsel %vm358, %v1935, 0
  %1942 = vmatprep.subr.bf16.mxu0 0
  %1943 = vmatpush1.bf16.xpose.msra.mxu0 %v1940
  %1944 = vmatprep.subr.bf16.mxu0 0
  %1945 = vmatpush1.bf16.xpose.msra.mxu0 0
  %1946 = vmatprep.subr.bf16.mxu0 0
  %1947 = vmatpush1.bf16.xpose.msra.mxu0 0
  %1948 = vmatprep.subr.bf16.mxu0 0
  %1949 = vmatpush1.bf16.xpose.msra.mxu0 0
  %1950 = vmatprep.subr.bf16.mxu0 0
  %1951 = vmatpush1.bf16.xpose.msra.mxu0 0
  %1952 = vmatprep.subr.bf16.mxu0 0
  %1953 = vmatpush1.bf16.xpose.msra.mxu0 0
  %1954 = vmatprep.subr.bf16.mxu0 0
  %1955 = vmatpush1.bf16.xpose.msra.mxu0 0
  %1956 = vmatprep.subr.bf16.mxu0 0
  %1957 = vmatpush1.bf16.xpose.msra.mxu0 0
  %1958 = vmatprep.subr.bf16.mxu0 0
  %1959 = vmatpush1.bf16.xpose.msra.mxu0 0
  %1960 = vmatprep.subr.bf16.mxu0 0
  %1961 = vmatpush1.bf16.xpose.msra.mxu0 0
  %1962 = vmatprep.subr.bf16.mxu0 0
  %1963 = vmatpush1.bf16.xpose.msra.mxu0 0
  %1964 = vmatprep.subr.bf16.mxu0 0
  %1965 = vmatpush1.bf16.xpose.msra.mxu0 0
  %1966 = vmatprep.subr.bf16.mxu0 0
  %1967 = vmatpush1.bf16.xpose.msra.mxu0 0
  %1968 = vmatprep.subr.bf16.mxu0 0
  %1969 = vmatpush1.bf16.xpose.msra.mxu0 0
  %1970 = vmatprep.subr.bf16.mxu0 0
  %1971 = vmatpush1.bf16.xpose.msra.mxu0 0
  %1972 = vmatprep.subr.bf16.mxu0 0
  %1973 = vmatpush1.bf16.xpose.msra.mxu0 0
  %1974 = vmatprep.mubr.bf16.mxu0 0
  %1975 = vmatmul.mubr.bf16.gmra.mrb[0].mxu0 %v1937
  %v1976 = vpop.f32.mrb[0].mxu0
  %v1977 = vadd.f32 0.0, %v1976
  %v1978 = vpop.f32.mrb[0].mxu0
  %v1979 = vpop.f32.mrb[0].mxu0
  %v1980 = vpop.f32.mrb[0].mxu0
  %1981 = vdwg.mxu0
  %v1982 = vsel %vm237, %v1977, -1e+09
  %v1983 = vsel %vm358, %v1982, -inf
  %1984 = vmax.xlane.f32.xlu0 %v1983
  %v1985 = vpop.xlane.xlu0 %1984
  %v1986 = vsub.f32 %v1982, %v1985
  %v1987 = vmul.f32 %v1986, 1.442695
  %v1988 = vpow.pop %v1987
  %v1989 = vsel %vm358, %v1988, 0.0
  %1990 = vadd.xlane.f32.xlu0 %v1989
  %v1991 = vpop.xlane.xlu0 %1990
  %v1992 = vrcp.pop %v1991
  %v1993 = vmul.f32 %v1988, %v1992
  %v1994 = vpack.c.bf16 %v1993, %v1993
  %1995 = vrot.lane.b32.xlu0 %v1709, 48
  %v1996 = vpop.permute.xlu0 %1995
  %v1998 = vsel %vm358, %v1994, 0
  %v2001 = vsel %vm423, %v1996, 0
  %2003 = vmatprep.subr.bf16.mxu0 0
  %2004 = vmatpush1.bf16.msra.mxu0 %v2001
  %2005 = vmatprep.subr.bf16.mxu0 0
  %2006 = vmatpush1.bf16.msra.mxu0 0
  %2007 = vmatprep.subr.bf16.mxu0 0
  %2008 = vmatpush1.bf16.msra.mxu0 0
  %2009 = vmatprep.subr.bf16.mxu0 0
  %2010 = vmatpush1.bf16.msra.mxu0 0
  %2011 = vmatprep.subr.bf16.mxu0 0
  %2012 = vmatpush1.bf16.msra.mxu0 0
  %2013 = vmatprep.subr.bf16.mxu0 0
  %2014 = vmatpush1.bf16.msra.mxu0 0
  %2015 = vmatprep.subr.bf16.mxu0 0
  %2016 = vmatpush1.bf16.msra.mxu0 0
  %2017 = vmatprep.subr.bf16.mxu0 0
  %2018 = vmatpush1.bf16.msra.mxu0 0
  %2019 = vmatprep.subr.bf16.mxu0 0
  %2020 = vmatpush1.bf16.msra.mxu0 0
  %2021 = vmatprep.subr.bf16.mxu0 0
  %2022 = vmatpush1.bf16.msra.mxu0 0
  %2023 = vmatprep.subr.bf16.mxu0 0
  %2024 = vmatpush1.bf16.msra.mxu0 0
  %2025 = vmatprep.subr.bf16.mxu0 0
  %2026 = vmatpush1.bf16.msra.mxu0 0
  %2027 = vmatprep.subr.bf16.mxu0 0
  %2028 = vmatpush1.bf16.msra.mxu0 0
  %2029 = vmatprep.subr.bf16.mxu0 0
  %2030 = vmatpush1.bf16.msra.mxu0 0
  %2031 = vmatprep.subr.bf16.mxu0 0
  %2032 = vmatpush1.bf16.msra.mxu0 0
  %2033 = vmatprep.subr.bf16.mxu0 0
  %2034 = vmatpush1.bf16.msra.mxu0 0
  %2035 = vmatprep.mubr.bf16.mxu0 0
  %2036 = vmatmul.mubr.bf16.gmra.mrb[0].mxu0 %v1998
  %v2037 = vpop.f32.mrb[0].mxu0
  %v2038 = vadd.f32 0.0, %v2037
  %v2039 = vpop.f32.mrb[0].mxu0
  %v2040 = vpop.f32.mrb[0].mxu0
  %v2041 = vpop.f32.mrb[0].mxu0
  %2042 = vdwg.mxu0
  %2043 = vrot.lane.b32.xlu0 %v1708, 104
  %v2044 = vpop.permute.xlu0 %2043
  %2045 = vrot.lane.b32.xlu0 %v1709, 72
  %v2046 = vpop.permute.xlu0 %2045
  %v2048 = vsel %vm358, %v2044, 0
  %v2051 = vsel %vm358, %v2046, 0
  %2053 = vmatprep.subr.bf16.mxu0 0
  %2054 = vmatpush1.bf16.xpose.msra.mxu0 %v2051
  %2055 = vmatprep.subr.bf16.mxu0 0
  %2056 = vmatpush1.bf16.xpose.msra.mxu0 0
  %2057 = vmatprep.subr.bf16.mxu0 0
  %2058 = vmatpush1.bf16.xpose.msra.mxu0 0
  %2059 = vmatprep.subr.bf16.mxu0 0
  %2060 = vmatpush1.bf16.xpose.msra.mxu0 0
  %2061 = vmatprep.subr.bf16.mxu0 0
  %2062 = vmatpush1.bf16.xpose.msra.mxu0 0
  %2063 = vmatprep.subr.bf16.mxu0 0
  %2064 = vmatpush1.bf16.xpose.msra.mxu0 0
  %2065 = vmatprep.subr.bf16.mxu0 0
  %2066 = vmatpush1.bf16.xpose.msra.mxu0 0
  %2067 = vmatprep.subr.bf16.mxu0 0
  %2068 = vmatpush1.bf16.xpose.msra.mxu0 0
  %2069 = vmatprep.subr.bf16.mxu0 0
  %2070 = vmatpush1.bf16.xpose.msra.mxu0 0
  %2071 = vmatprep.subr.bf16.mxu0 0
  %2072 = vmatpush1.bf16.xpose.msra.mxu0 0
  %2073 = vmatprep.subr.bf16.mxu0 0
  %2074 = vmatpush1.bf16.xpose.msra.mxu0 0
  %2075 = vmatprep.subr.bf16.mxu0 0
  %2076 = vmatpush1.bf16.xpose.msra.mxu0 0
  %2077 = vmatprep.subr.bf16.mxu0 0
  %2078 = vmatpush1.bf16.xpose.msra.mxu0 0
  %2079 = vmatprep.subr.bf16.mxu0 0
  %2080 = vmatpush1.bf16.xpose.msra.mxu0 0
  %2081 = vmatprep.subr.bf16.mxu0 0
  %2082 = vmatpush1.bf16.xpose.msra.mxu0 0
  %2083 = vmatprep.subr.bf16.mxu0 0
  %2084 = vmatpush1.bf16.xpose.msra.mxu0 0
  %2085 = vmatprep.mubr.bf16.mxu0 0
  %2086 = vmatmul.mubr.bf16.gmra.mrb[0].mxu0 %v2048
  %v2087 = vpop.f32.mrb[0].mxu0
  %v2088 = vadd.f32 0.0, %v2087
  %v2089 = vpop.f32.mrb[0].mxu0
  %v2090 = vpop.f32.mrb[0].mxu0
  %v2091 = vpop.f32.mrb[0].mxu0
  %2092 = vdwg.mxu0
  %v2093 = vsel %vm237, %v2088, -1e+09
  %v2094 = vsel %vm358, %v2093, -inf
  %2095 = vmax.xlane.f32.xlu0 %v2094
  %v2096 = vpop.xlane.xlu0 %2095
  %v2097 = vsub.f32 %v2093, %v2096
  %v2098 = vmul.f32 %v2097, 1.442695
  %v2099 = vpow.pop %v2098
  %v2100 = vsel %vm358, %v2099, 0.0
  %2101 = vadd.xlane.f32.xlu0 %v2100
  %v2102 = vpop.xlane.xlu0 %2101
  %v2103 = vrcp.pop %v2102
  %v2104 = vmul.f32 %v2099, %v2103
  %v2105 = vpack.c.bf16 %v2104, %v2104
  %2106 = vrot.lane.b32.xlu0 %v1709, 40
  %v2107 = vpop.permute.xlu0 %2106
  %v2109 = vsel %vm358, %v2105, 0
  %v2112 = vsel %vm423, %v2107, 0
  %2114 = vmatprep.subr.bf16.mxu0 0
  %2115 = vmatpush1.bf16.msra.mxu0 %v2112
  %2116 = vmatprep.subr.bf16.mxu0 0
  %2117 = vmatpush1.bf16.msra.mxu0 0
  %2118 = vmatprep.subr.bf16.mxu0 0
  %2119 = vmatpush1.bf16.msra.mxu0 0
  %2120 = vmatprep.subr.bf16.mxu0 0
  %2121 = vmatpush1.bf16.msra.mxu0 0
  %2122 = vmatprep.subr.bf16.mxu0 0
  %2123 = vmatpush1.bf16.msra.mxu0 0
  %2124 = vmatprep.subr.bf16.mxu0 0
  %2125 = vmatpush1.bf16.msra.mxu0 0
  %2126 = vmatprep.subr.bf16.mxu0 0
  %2127 = vmatpush1.bf16.msra.mxu0 0
  %2128 = vmatprep.subr.bf16.mxu0 0
  %2129 = vmatpush1.bf16.msra.mxu0 0
  %2130 = vmatprep.subr.bf16.mxu0 0
  %2131 = vmatpush1.bf16.msra.mxu0 0
  %2132 = vmatprep.subr.bf16.mxu0 0
  %2133 = vmatpush1.bf16.msra.mxu0 0
  %2134 = vmatprep.subr.bf16.mxu0 0
  %2135 = vmatpush1.bf16.msra.mxu0 0
  %2136 = vmatprep.subr.bf16.mxu0 0
  %2137 = vmatpush1.bf16.msra.mxu0 0
  %2138 = vmatprep.subr.bf16.mxu0 0
  %2139 = vmatpush1.bf16.msra.mxu0 0
  %2140 = vmatprep.subr.bf16.mxu0 0
  %2141 = vmatpush1.bf16.msra.mxu0 0
  %2142 = vmatprep.subr.bf16.mxu0 0
  %2143 = vmatpush1.bf16.msra.mxu0 0
  %2144 = vmatprep.subr.bf16.mxu0 0
  %2145 = vmatpush1.bf16.msra.mxu0 0
  %2146 = vmatprep.mubr.bf16.mxu0 0
  %2147 = vmatmul.mubr.bf16.gmra.mrb[0].mxu0 %v2109
  %v2148 = vpop.f32.mrb[0].mxu0
  %v2149 = vadd.f32 0.0, %v2148
  %v2150 = vpop.f32.mrb[0].mxu0
  %v2151 = vpop.f32.mrb[0].mxu0
  %v2152 = vpop.f32.mrb[0].mxu0
  %2153 = vdwg.mxu0
  %2155 = vrot.lane.b32.xlu0 %v1927, 8
  %v2156 = vpop.permute.xlu0 %2155
  %2159 = vrot.lane.b32.xlu0 %v2038, 16
  %v2160 = vpop.permute.xlu0 %2159
  %2163 = vrot.lane.b32.xlu0 %v2149, 24
  %v2164 = vpop.permute.xlu0 %2163
  %v2166 = vsel %vm358, %v1815, %v2156
  %v2167 = vsel %vm814, %v2166, %v2160
  %v2168 = vsel %vm816, %v2167, %v2164
  %v2169 = vmul.f32 %v1704, 0.35355338
  %v2170 = vpack.c.bf16 %v2169, %v2169
  %v2171 = vpack.c.bf16 %v1704, %v1704
  %2173 = vrot.lane.b32.xlu0 %v2171, 96
  %v2174 = vpop.permute.xlu0 %2173
  %v2176 = vsel %vm358, %v2170, 0
  %v2179 = vsel %vm358, %v2174, 0
  %2181 = vmatprep.subr.bf16.mxu0 0
  %2182 = vmatpush1.bf16.xpose.msra.mxu0 %v2179
  %2183 = vmatprep.subr.bf16.mxu0 0
  %2184 = vmatpush1.bf16.xpose.msra.mxu0 0
  %2185 = vmatprep.subr.bf16.mxu0 0
  %2186 = vmatpush1.bf16.xpose.msra.mxu0 0
  %2187 = vmatprep.subr.bf16.mxu0 0
  %2188 = vmatpush1.bf16.xpose.msra.mxu0 0
  %2189 = vmatprep.subr.bf16.mxu0 0
  %2190 = vmatpush1.bf16.xpose.msra.mxu0 0
  %2191 = vmatprep.subr.bf16.mxu0 0
  %2192 = vmatpush1.bf16.xpose.msra.mxu0 0
  %2193 = vmatprep.subr.bf16.mxu0 0
  %2194 = vmatpush1.bf16.xpose.msra.mxu0 0
  %2195 = vmatprep.subr.bf16.mxu0 0
  %2196 = vmatpush1.bf16.xpose.msra.mxu0 0
  %2197 = vmatprep.subr.bf16.mxu0 0
  %2198 = vmatpush1.bf16.xpose.msra.mxu0 0
  %2199 = vmatprep.subr.bf16.mxu0 0
  %2200 = vmatpush1.bf16.xpose.msra.mxu0 0
  %2201 = vmatprep.subr.bf16.mxu0 0
  %2202 = vmatpush1.bf16.xpose.msra.mxu0 0
  %2203 = vmatprep.subr.bf16.mxu0 0
  %2204 = vmatpush1.bf16.xpose.msra.mxu0 0
  %2205 = vmatprep.subr.bf16.mxu0 0
  %2206 = vmatpush1.bf16.xpose.msra.mxu0 0
  %2207 = vmatprep.subr.bf16.mxu0 0
  %2208 = vmatpush1.bf16.xpose.msra.mxu0 0
  %2209 = vmatprep.subr.bf16.mxu0 0
  %2210 = vmatpush1.bf16.xpose.msra.mxu0 0
  %2211 = vmatprep.subr.bf16.mxu0 0
  %2212 = vmatpush1.bf16.xpose.msra.mxu0 0
  %2213 = vmatprep.mubr.bf16.mxu0 0
  %2214 = vmatmul.mubr.bf16.gmra.mrb[0].mxu0 %v2176
  %v2215 = vpop.f32.mrb[0].mxu0
  %v2216 = vadd.f32 0.0, %v2215
  %v2217 = vpop.f32.mrb[0].mxu0
  %v2218 = vpop.f32.mrb[0].mxu0
  %v2219 = vpop.f32.mrb[0].mxu0
  %2220 = vdwg.mxu0
  %v2221 = vsel %vm237, %v2216, -1e+09
  %v2222 = vsel %vm358, %v2221, -inf
  %2223 = vmax.xlane.f32.xlu0 %v2222
  %v2224 = vpop.xlane.xlu0 %2223
  %v2225 = vsub.f32 %v2221, %v2224
  %v2226 = vmul.f32 %v2225, 1.442695
  %v2227 = vpow.pop %v2226
  %v2228 = vsel %vm358, %v2227, 0.0
  %2229 = vadd.xlane.f32.xlu0 %v2228
  %v2230 = vpop.xlane.xlu0 %2229
  %v2231 = vrcp.pop %v2230
  %v2232 = vmul.f32 %v2227, %v2231
  %v2233 = vpack.c.bf16 %v2232, %v2232
  %2234 = vrot.lane.b32.xlu0 %v2171, 64
  %v2235 = vpop.permute.xlu0 %2234
  %v2237 = vsel %vm358, %v2233, 0
  %v2240 = vsel %vm423, %v2235, 0
  %2242 = vmatprep.subr.bf16.mxu0 0
  %2243 = vmatpush1.bf16.msra.mxu0 %v2240
  %2244 = vmatprep.subr.bf16.mxu0 0
  %2245 = vmatpush1.bf16.msra.mxu0 0
  %2246 = vmatprep.subr.bf16.mxu0 0
  %2247 = vmatpush1.bf16.msra.mxu0 0
  %2248 = vmatprep.subr.bf16.mxu0 0
  %2249 = vmatpush1.bf16.msra.mxu0 0
  %2250 = vmatprep.subr.bf16.mxu0 0
  %2251 = vmatpush1.bf16.msra.mxu0 0
  %2252 = vmatprep.subr.bf16.mxu0 0
  %2253 = vmatpush1.bf16.msra.mxu0 0
  %2254 = vmatprep.subr.bf16.mxu0 0
  %2255 = vmatpush1.bf16.msra.mxu0 0
  %2256 = vmatprep.subr.bf16.mxu0 0
  %2257 = vmatpush1.bf16.msra.mxu0 0
  %2258 = vmatprep.subr.bf16.mxu0 0
  %2259 = vmatpush1.bf16.msra.mxu0 0
  %2260 = vmatprep.subr.bf16.mxu0 0
  %2261 = vmatpush1.bf16.msra.mxu0 0
  %2262 = vmatprep.subr.bf16.mxu0 0
  %2263 = vmatpush1.bf16.msra.mxu0 0
  %2264 = vmatprep.subr.bf16.mxu0 0
  %2265 = vmatpush1.bf16.msra.mxu0 0
  %2266 = vmatprep.subr.bf16.mxu0 0
  %2267 = vmatpush1.bf16.msra.mxu0 0
  %2268 = vmatprep.subr.bf16.mxu0 0
  %2269 = vmatpush1.bf16.msra.mxu0 0
  %2270 = vmatprep.subr.bf16.mxu0 0
  %2271 = vmatpush1.bf16.msra.mxu0 0
  %2272 = vmatprep.subr.bf16.mxu0 0
  %2273 = vmatpush1.bf16.msra.mxu0 0
  %2274 = vmatprep.mubr.bf16.mxu0 0
  %2275 = vmatmul.mubr.bf16.gmra.mrb[0].mxu0 %v2237
  %v2276 = vpop.f32.mrb[0].mxu0
  %v2277 = vadd.f32 0.0, %v2276
  %v2278 = vpop.f32.mrb[0].mxu0
  %v2279 = vpop.f32.mrb[0].mxu0
  %v2280 = vpop.f32.mrb[0].mxu0
  %2281 = vdwg.mxu0
  %2283 = vrot.lane.b32.xlu0 %v2170, 120
  %v2284 = vpop.permute.xlu0 %2283
  %2285 = vrot.lane.b32.xlu0 %v2171, 88
  %v2286 = vpop.permute.xlu0 %2285
  %v2288 = vsel %vm358, %v2284, 0
  %v2291 = vsel %vm358, %v2286, 0
  %2293 = vmatprep.subr.bf16.mxu0 0
  %2294 = vmatpush1.bf16.xpose.msra.mxu0 %v2291
  %2295 = vmatprep.subr.bf16.mxu0 0
  %2296 = vmatpush1.bf16.xpose.msra.mxu0 0
  %2297 = vmatprep.subr.bf16.mxu0 0
  %2298 = vmatpush1.bf16.xpose.msra.mxu0 0
  %2299 = vmatprep.subr.bf16.mxu0 0
  %2300 = vmatpush1.bf16.xpose.msra.mxu0 0
  %2301 = vmatprep.subr.bf16.mxu0 0
  %2302 = vmatpush1.bf16.xpose.msra.mxu0 0
  %2303 = vmatprep.subr.bf16.mxu0 0
  %2304 = vmatpush1.bf16.xpose.msra.mxu0 0
  %2305 = vmatprep.subr.bf16.mxu0 0
  %2306 = vmatpush1.bf16.xpose.msra.mxu0 0
  %2307 = vmatprep.subr.bf16.mxu0 0
  %2308 = vmatpush1.bf16.xpose.msra.mxu0 0
  %2309 = vmatprep.subr.bf16.mxu0 0
  %2310 = vmatpush1.bf16.xpose.msra.mxu0 0
  %2311 = vmatprep.subr.bf16.mxu0 0
  %2312 = vmatpush1.bf16.xpose.msra.mxu0 0
  %2313 = vmatprep.subr.bf16.mxu0 0
  %2314 = vmatpush1.bf16.xpose.msra.mxu0 0
  %2315 = vmatprep.subr.bf16.mxu0 0
  %2316 = vmatpush1.bf16.xpose.msra.mxu0 0
  %2317 = vmatprep.subr.bf16.mxu0 0
  %2318 = vmatpush1.bf16.xpose.msra.mxu0 0
  %2319 = vmatprep.subr.bf16.mxu0 0
  %2320 = vmatpush1.bf16.xpose.msra.mxu0 0
  %2321 = vmatprep.subr.bf16.mxu0 0
  %2322 = vmatpush1.bf16.xpose.msra.mxu0 0
  %2323 = vmatprep.subr.bf16.mxu0 0
  %2324 = vmatpush1.bf16.xpose.msra.mxu0 0
  %2325 = vmatprep.mubr.bf16.mxu0 0
  %2326 = vmatmul.mubr.bf16.gmra.mrb[0].mxu0 %v2288
  %v2327 = vpop.f32.mrb[0].mxu0
  %v2328 = vadd.f32 0.0, %v2327
  %v2329 = vpop.f32.mrb[0].mxu0
  %v2330 = vpop.f32.mrb[0].mxu0
  %v2331 = vpop.f32.mrb[0].mxu0
  %2332 = vdwg.mxu0
  %v2333 = vsel %vm237, %v2328, -1e+09
  %v2334 = vsel %vm358, %v2333, -inf
  %2335 = vmax.xlane.f32.xlu0 %v2334
  %v2336 = vpop.xlane.xlu0 %2335
  %v2337 = vsub.f32 %v2333, %v2336
  %v2338 = vmul.f32 %v2337, 1.442695
  %v2339 = vpow.pop %v2338
  %v2340 = vsel %vm358, %v2339, 0.0
  %2341 = vadd.xlane.f32.xlu0 %v2340
  %v2342 = vpop.xlane.xlu0 %2341
  %v2343 = vrcp.pop %v2342
  %v2344 = vmul.f32 %v2339, %v2343
  %v2345 = vpack.c.bf16 %v2344, %v2344
  %2346 = vrot.lane.b32.xlu0 %v2171, 56
  %v2347 = vpop.permute.xlu0 %2346
  %v2349 = vsel %vm358, %v2345, 0
  %v2352 = vsel %vm423, %v2347, 0
  %2354 = vmatprep.subr.bf16.mxu0 0
  %2355 = vmatpush1.bf16.msra.mxu0 %v2352
  %2356 = vmatprep.subr.bf16.mxu0 0
  %2357 = vmatpush1.bf16.msra.mxu0 0
  %2358 = vmatprep.subr.bf16.mxu0 0
  %2359 = vmatpush1.bf16.msra.mxu0 0
  %2360 = vmatprep.subr.bf16.mxu0 0
  %2361 = vmatpush1.bf16.msra.mxu0 0
  %2362 = vmatprep.subr.bf16.mxu0 0
  %2363 = vmatpush1.bf16.msra.mxu0 0
  %2364 = vmatprep.subr.bf16.mxu0 0
  %2365 = vmatpush1.bf16.msra.mxu0 0
  %2366 = vmatprep.subr.bf16.mxu0 0
  %2367 = vmatpush1.bf16.msra.mxu0 0
  %2368 = vmatprep.subr.bf16.mxu0 0
  %2369 = vmatpush1.bf16.msra.mxu0 0
  %2370 = vmatprep.subr.bf16.mxu0 0
  %2371 = vmatpush1.bf16.msra.mxu0 0
  %2372 = vmatprep.subr.bf16.mxu0 0
  %2373 = vmatpush1.bf16.msra.mxu0 0
  %2374 = vmatprep.subr.bf16.mxu0 0
  %2375 = vmatpush1.bf16.msra.mxu0 0
  %2376 = vmatprep.subr.bf16.mxu0 0
  %2377 = vmatpush1.bf16.msra.mxu0 0
  %2378 = vmatprep.subr.bf16.mxu0 0
  %2379 = vmatpush1.bf16.msra.mxu0 0
  %2380 = vmatprep.subr.bf16.mxu0 0
  %2381 = vmatpush1.bf16.msra.mxu0 0
  %2382 = vmatprep.subr.bf16.mxu0 0
  %2383 = vmatpush1.bf16.msra.mxu0 0
  %2384 = vmatprep.subr.bf16.mxu0 0
  %2385 = vmatpush1.bf16.msra.mxu0 0
  %2386 = vmatprep.mubr.bf16.mxu0 0
  %2387 = vmatmul.mubr.bf16.gmra.mrb[0].mxu0 %v2349
  %v2388 = vpop.f32.mrb[0].mxu0
  %v2389 = vadd.f32 0.0, %v2388
  %v2390 = vpop.f32.mrb[0].mxu0
  %v2391 = vpop.f32.mrb[0].mxu0
  %v2392 = vpop.f32.mrb[0].mxu0
  %2393 = vdwg.mxu0
  %2394 = vrot.lane.b32.xlu0 %v2170, 112
  %v2395 = vpop.permute.xlu0 %2394
  %2396 = vrot.lane.b32.xlu0 %v2171, 80
  %v2397 = vpop.permute.xlu0 %2396
  %v2399 = vsel %vm358, %v2395, 0
  %v2402 = vsel %vm358, %v2397, 0
  %2404 = vmatprep.subr.bf16.mxu0 0
  %2405 = vmatpush1.bf16.xpose.msra.mxu0 %v2402
  %2406 = vmatprep.subr.bf16.mxu0 0
  %2407 = vmatpush1.bf16.xpose.msra.mxu0 0
  %2408 = vmatprep.subr.bf16.mxu0 0
  %2409 = vmatpush1.bf16.xpose.msra.mxu0 0
  %2410 = vmatprep.subr.bf16.mxu0 0
  %2411 = vmatpush1.bf16.xpose.msra.mxu0 0
  %2412 = vmatprep.subr.bf16.mxu0 0
  %2413 = vmatpush1.bf16.xpose.msra.mxu0 0
  %2414 = vmatprep.subr.bf16.mxu0 0
  %2415 = vmatpush1.bf16.xpose.msra.mxu0 0
  %2416 = vmatprep.subr.bf16.mxu0 0
  %2417 = vmatpush1.bf16.xpose.msra.mxu0 0
  %2418 = vmatprep.subr.bf16.mxu0 0
  %2419 = vmatpush1.bf16.xpose.msra.mxu0 0
  %2420 = vmatprep.subr.bf16.mxu0 0
  %2421 = vmatpush1.bf16.xpose.msra.mxu0 0
  %2422 = vmatprep.subr.bf16.mxu0 0
  %2423 = vmatpush1.bf16.xpose.msra.mxu0 0
  %2424 = vmatprep.subr.bf16.mxu0 0
  %2425 = vmatpush1.bf16.xpose.msra.mxu0 0
  %2426 = vmatprep.subr.bf16.mxu0 0
  %2427 = vmatpush1.bf16.xpose.msra.mxu0 0
  %2428 = vmatprep.subr.bf16.mxu0 0
  %2429 = vmatpush1.bf16.xpose.msra.mxu0 0
  %2430 = vmatprep.subr.bf16.mxu0 0
  %2431 = vmatpush1.bf16.xpose.msra.mxu0 0
  %2432 = vmatprep.subr.bf16.mxu0 0
  %2433 = vmatpush1.bf16.xpose.msra.mxu0 0
  %2434 = vmatprep.subr.bf16.mxu0 0
  %2435 = vmatpush1.bf16.xpose.msra.mxu0 0
  %2436 = vmatprep.mubr.bf16.mxu0 0
  %2437 = vmatmul.mubr.bf16.gmra.mrb[0].mxu0 %v2399
  %v2438 = vpop.f32.mrb[0].mxu0
  %v2439 = vadd.f32 0.0, %v2438
  %v2440 = vpop.f32.mrb[0].mxu0
  %v2441 = vpop.f32.mrb[0].mxu0
  %v2442 = vpop.f32.mrb[0].mxu0
  %2443 = vdwg.mxu0
  %v2444 = vsel %vm237, %v2439, -1e+09
  %v2445 = vsel %vm358, %v2444, -inf
  %2446 = vmax.xlane.f32.xlu0 %v2445
  %v2447 = vpop.xlane.xlu0 %2446
  %v2448 = vsub.f32 %v2444, %v2447
  %v2449 = vmul.f32 %v2448, 1.442695
  %v2450 = vpow.pop %v2449
  %v2451 = vsel %vm358, %v2450, 0.0
  %2452 = vadd.xlane.f32.xlu0 %v2451
  %v2453 = vpop.xlane.xlu0 %2452
  %v2454 = vrcp.pop %v2453
  %v2455 = vmul.f32 %v2450, %v2454
  %v2456 = vpack.c.bf16 %v2455, %v2455
  %2457 = vrot.lane.b32.xlu0 %v2171, 48
  %v2458 = vpop.permute.xlu0 %2457
  %v2460 = vsel %vm358, %v2456, 0
  %v2463 = vsel %vm423, %v2458, 0
  %2465 = vmatprep.subr.bf16.mxu0 0
  %2466 = vmatpush1.bf16.msra.mxu0 %v2463
  %2467 = vmatprep.subr.bf16.mxu0 0
  %2468 = vmatpush1.bf16.msra.mxu0 0
  %2469 = vmatprep.subr.bf16.mxu0 0
  %2470 = vmatpush1.bf16.msra.mxu0 0
  %2471 = vmatprep.subr.bf16.mxu0 0
  %2472 = vmatpush1.bf16.msra.mxu0 0
  %2473 = vmatprep.subr.bf16.mxu0 0
  %2474 = vmatpush1.bf16.msra.mxu0 0
  %2475 = vmatprep.subr.bf16.mxu0 0
  %2476 = vmatpush1.bf16.msra.mxu0 0
  %2477 = vmatprep.subr.bf16.mxu0 0
  %2478 = vmatpush1.bf16.msra.mxu0 0
  %2479 = vmatprep.subr.bf16.mxu0 0
  %2480 = vmatpush1.bf16.msra.mxu0 0
  %2481 = vmatprep.subr.bf16.mxu0 0
  %2482 = vmatpush1.bf16.msra.mxu0 0
  %2483 = vmatprep.subr.bf16.mxu0 0
  %2484 = vmatpush1.bf16.msra.mxu0 0
  %2485 = vmatprep.subr.bf16.mxu0 0
  %2486 = vmatpush1.bf16.msra.mxu0 0
  %2487 = vmatprep.subr.bf16.mxu0 0
  %2488 = vmatpush1.bf16.msra.mxu0 0
  %2489 = vmatprep.subr.bf16.mxu0 0
  %2490 = vmatpush1.bf16.msra.mxu0 0
  %2491 = vmatprep.subr.bf16.mxu0 0
  %2492 = vmatpush1.bf16.msra.mxu0 0
  %2493 = vmatprep.subr.bf16.mxu0 0
  %2494 = vmatpush1.bf16.msra.mxu0 0
  %2495 = vmatprep.subr.bf16.mxu0 0
  %2496 = vmatpush1.bf16.msra.mxu0 0
  %2497 = vmatprep.mubr.bf16.mxu0 0
  %2498 = vmatmul.mubr.bf16.gmra.mrb[0].mxu0 %v2460
  %v2499 = vpop.f32.mrb[0].mxu0
  %v2500 = vadd.f32 0.0, %v2499
  %v2501 = vpop.f32.mrb[0].mxu0
  %v2502 = vpop.f32.mrb[0].mxu0
  %v2503 = vpop.f32.mrb[0].mxu0
  %2504 = vdwg.mxu0
  %2505 = vrot.lane.b32.xlu0 %v2170, 104
  %v2506 = vpop.permute.xlu0 %2505
  %2507 = vrot.lane.b32.xlu0 %v2171, 72
  %v2508 = vpop.permute.xlu0 %2507
  %v2510 = vsel %vm358, %v2506, 0
  %v2513 = vsel %vm358, %v2508, 0
  %2515 = vmatprep.subr.bf16.mxu0 0
  %2516 = vmatpush1.bf16.xpose.msra.mxu0 %v2513
  %2517 = vmatprep.subr.bf16.mxu0 0
  %2518 = vmatpush1.bf16.xpose.msra.mxu0 0
  %2519 = vmatprep.subr.bf16.mxu0 0
  %2520 = vmatpush1.bf16.xpose.msra.mxu0 0
  %2521 = vmatprep.subr.bf16.mxu0 0
  %2522 = vmatpush1.bf16.xpose.msra.mxu0 0
  %2523 = vmatprep.subr.bf16.mxu0 0
  %2524 = vmatpush1.bf16.xpose.msra.mxu0 0
  %2525 = vmatprep.subr.bf16.mxu0 0
  %2526 = vmatpush1.bf16.xpose.msra.mxu0 0
  %2527 = vmatprep.subr.bf16.mxu0 0
  %2528 = vmatpush1.bf16.xpose.msra.mxu0 0
  %2529 = vmatprep.subr.bf16.mxu0 0
  %2530 = vmatpush1.bf16.xpose.msra.mxu0 0
  %2531 = vmatprep.subr.bf16.mxu0 0
  %2532 = vmatpush1.bf16.xpose.msra.mxu0 0
  %2533 = vmatprep.subr.bf16.mxu0 0
  %2534 = vmatpush1.bf16.xpose.msra.mxu0 0
  %2535 = vmatprep.subr.bf16.mxu0 0
  %2536 = vmatpush1.bf16.xpose.msra.mxu0 0
  %2537 = vmatprep.subr.bf16.mxu0 0
  %2538 = vmatpush1.bf16.xpose.msra.mxu0 0
  %2539 = vmatprep.subr.bf16.mxu0 0
  %2540 = vmatpush1.bf16.xpose.msra.mxu0 0
  %2541 = vmatprep.subr.bf16.mxu0 0
  %2542 = vmatpush1.bf16.xpose.msra.mxu0 0
  %2543 = vmatprep.subr.bf16.mxu0 0
  %2544 = vmatpush1.bf16.xpose.msra.mxu0 0
  %2545 = vmatprep.subr.bf16.mxu0 0
  %2546 = vmatpush1.bf16.xpose.msra.mxu0 0
  %2547 = vmatprep.mubr.bf16.mxu0 0
  %2548 = vmatmul.mubr.bf16.gmra.mrb[0].mxu0 %v2510
  %v2549 = vpop.f32.mrb[0].mxu0
  %v2550 = vadd.f32 0.0, %v2549
  %v2551 = vpop.f32.mrb[0].mxu0
  %v2552 = vpop.f32.mrb[0].mxu0
  %v2553 = vpop.f32.mrb[0].mxu0
  %2554 = vdwg.mxu0
  %v2555 = vsel %vm237, %v2550, -1e+09
  %v2556 = vsel %vm358, %v2555, -inf
  %2557 = vmax.xlane.f32.xlu0 %v2556
  %v2558 = vpop.xlane.xlu0 %2557
  %v2559 = vsub.f32 %v2555, %v2558
  %v2560 = vmul.f32 %v2559, 1.442695
  %v2561 = vpow.pop %v2560
  %v2562 = vsel %vm358, %v2561, 0.0
  %2563 = vadd.xlane.f32.xlu0 %v2562
  %v2564 = vpop.xlane.xlu0 %2563
  %v2565 = vrcp.pop %v2564
  %v2566 = vmul.f32 %v2561, %v2565
  %v2567 = vpack.c.bf16 %v2566, %v2566
  %2568 = vrot.lane.b32.xlu0 %v2171, 40
  %v2569 = vpop.permute.xlu0 %2568
  %v2571 = vsel %vm358, %v2567, 0
  %v2574 = vsel %vm423, %v2569, 0
  %2576 = vmatprep.subr.bf16.mxu0 0
  %2577 = vmatpush1.bf16.msra.mxu0 %v2574
  %2578 = vmatprep.subr.bf16.mxu0 0
  %2579 = vmatpush1.bf16.msra.mxu0 0
  %2580 = vmatprep.subr.bf16.mxu0 0
  %2581 = vmatpush1.bf16.msra.mxu0 0
  %2582 = vmatprep.subr.bf16.mxu0 0
  %2583 = vmatpush1.bf16.msra.mxu0 0
  %2584 = vmatprep.subr.bf16.mxu0 0
  %2585 = vmatpush1.bf16.msra.mxu0 0
  %2586 = vmatprep.subr.bf16.mxu0 0
  %2587 = vmatpush1.bf16.msra.mxu0 0
  %2588 = vmatprep.subr.bf16.mxu0 0
  %2589 = vmatpush1.bf16.msra.mxu0 0
  %2590 = vmatprep.subr.bf16.mxu0 0
  %2591 = vmatpush1.bf16.msra.mxu0 0
  %2592 = vmatprep.subr.bf16.mxu0 0
  %2593 = vmatpush1.bf16.msra.mxu0 0
  %2594 = vmatprep.subr.bf16.mxu0 0
  %2595 = vmatpush1.bf16.msra.mxu0 0
  %2596 = vmatprep.subr.bf16.mxu0 0
  %2597 = vmatpush1.bf16.msra.mxu0 0
  %2598 = vmatprep.subr.bf16.mxu0 0
  %2599 = vmatpush1.bf16.msra.mxu0 0
  %2600 = vmatprep.subr.bf16.mxu0 0
  %2601 = vmatpush1.bf16.msra.mxu0 0
  %2602 = vmatprep.subr.bf16.mxu0 0
  %2603 = vmatpush1.bf16.msra.mxu0 0
  %2604 = vmatprep.subr.bf16.mxu0 0
  %2605 = vmatpush1.bf16.msra.mxu0 0
  %2606 = vmatprep.subr.bf16.mxu0 0
  %2607 = vmatpush1.bf16.msra.mxu0 0
  %2608 = vmatprep.mubr.bf16.mxu0 0
  %2609 = vmatmul.mubr.bf16.gmra.mrb[0].mxu0 %v2571
  %v2610 = vpop.f32.mrb[0].mxu0
  %v2611 = vadd.f32 0.0, %v2610
  %v2612 = vpop.f32.mrb[0].mxu0
  %v2613 = vpop.f32.mrb[0].mxu0
  %v2614 = vpop.f32.mrb[0].mxu0
  %2615 = vdwg.mxu0
  %2617 = vrot.lane.b32.xlu0 %v2389, 8
  %v2618 = vpop.permute.xlu0 %2617
  %2621 = vrot.lane.b32.xlu0 %v2500, 16
  %v2622 = vpop.permute.xlu0 %2621
  %2625 = vrot.lane.b32.xlu0 %v2611, 24
  %v2626 = vpop.permute.xlu0 %2625
  %v2628 = vsel %vm358, %v2277, %v2618
  %v2629 = vsel %vm814, %v2628, %v2622
  %v2630 = vsel %vm816, %v2629, %v2626
  %v2631 = vpack.c.bf16 %v2630, %v2168
  %v2632 = vld [vmem:[%s45] sm:$0xf]
  %v2633 = vld [vmem:[%s45 + $0x4] sm:$0xf]
  %v2634 = vld [vmem:[%s45 + $0x8] sm:$0xf]
  %v2635 = vld [vmem:[%s45 + $0xc] sm:$0xf]
  %v2636 = vld [vmem:[%s47] sm:$0x1]
  %v2638 = vlaneseq
  %v2639 = vshrl.u32 %v2638, 7
  %v2640 = vsub.s32 0, %v2639
  %v2641 = vrot.slane %v2636, %v2640
  %v2647 = vunpack.c.l.b16 %v2632
  %v2648 = vunpack.c.l.b16 %v2633
  %v2649 = vunpack.c.l.b16 %v2634
  %v2650 = vunpack.c.l.b16 %v2635
  %v2651 = vpack.c.b16 %v2648, %v2647
  %v2652 = vpack.c.b16 %v2650, %v2649
  %v2656 = vsel %vm238, %v2631, 0
  %2658 = vmatprep.subr.bf16.mxu0 0
  %2659 = vmatpush1.bf16.msra.mxu0 %v2651
  %2660 = vmatprep.subr.bf16.mxu0 0
  %2661 = vmatpush1.bf16.msra.mxu0 %v2652
  %2662 = vmatprep.subr.bf16.mxu0 0
  %2663 = vmatpush1.bf16.msra.mxu0 0
  %2664 = vmatprep.subr.bf16.mxu0 0
  %2665 = vmatpush1.bf16.msra.mxu0 0
  %2666 = vmatprep.subr.bf16.mxu0 0
  %2667 = vmatpush1.bf16.msra.mxu0 0
  %2668 = vmatprep.subr.bf16.mxu0 0
  %2669 = vmatpush1.bf16.msra.mxu0 0
  %2670 = vmatprep.subr.bf16.mxu0 0
  %2671 = vmatpush1.bf16.msra.mxu0 0
  %2672 = vmatprep.subr.bf16.mxu0 0
  %2673 = vmatpush1.bf16.msra.mxu0 0
  %2674 = vmatprep.subr.bf16.mxu0 0
  %2675 = vmatpush1.bf16.msra.mxu0 0
  %2676 = vmatprep.subr.bf16.mxu0 0
  %2677 = vmatpush1.bf16.msra.mxu0 0
  %2678 = vmatprep.subr.bf16.mxu0 0
  %2679 = vmatpush1.bf16.msra.mxu0 0
  %2680 = vmatprep.subr.bf16.mxu0 0
  %2681 = vmatpush1.bf16.msra.mxu0 0
  %2682 = vmatprep.subr.bf16.mxu0 0
  %2683 = vmatpush1.bf16.msra.mxu0 0
  %2684 = vmatprep.subr.bf16.mxu0 0
  %2685 = vmatpush1.bf16.msra.mxu0 0
  %2686 = vmatprep.subr.bf16.mxu0 0
  %2687 = vmatpush1.bf16.msra.mxu0 0
  %2688 = vmatprep.subr.bf16.mxu0 0
  %2689 = vmatpush1.bf16.msra.mxu0 0
  %2690 = vmatprep.mubr.bf16.mxu0 0
  %2691 = vmatmul.mubr.bf16.gmra.mrb[0].mxu0 %v2656
  %v2692 = vpop.f32.mrb[0].mxu0
  %v2693 = vadd.f32 %v2641, %v2692
  %v2694 = vpop.f32.mrb[0].mxu0
  %v2695 = vpop.f32.mrb[0].mxu0
  %v2696 = vadd.f32 %v2641, %v2695
  %v2697 = vpop.f32.mrb[0].mxu0
  %2698 = vdwg.mxu0
  %v2699 = vadd.f32 %v1593, %v2693
  %v2700 = vadd.f32 %v1594, %v2696
  %v2701 = vsel %vm238, %v2699, 0.0
  %2702 = vadd.xlane.f32.xlu0 %v2701
  %v2703 = vpop.xlane.xlu0 %2702
  %v2704 = vsel %vm238, %v2700, 0.0
  %2705 = vadd.xlane.f32.xlu0 %v2704
  %v2706 = vpop.xlane.xlu0 %2705
  %v2707 = vmul.f32 %v2703, %v245
  %v2708 = vmul.f32 %v2706, %v245
  %v2709 = vsub.f32 %v2699, %v2707
  %v2710 = vsub.f32 %v2700, %v2708
  %v2711 = vmul.f32 %v2709, %v2709
  %v2712 = vmul.f32 %v2710, %v2710
  %v2713 = vsel %vm238, %v2711, 0.0
  %2714 = vadd.xlane.f32.xlu0 %v2713
  %v2715 = vpop.xlane.xlu0 %2714
  %v2716 = vsel %vm238, %v2712, 0.0
  %2717 = vadd.xlane.f32.xlu0 %v2716
  %v2718 = vpop.xlane.xlu0 %2717
  %v2719 = vmul.f32 %v2715, %v245
  %v2720 = vmul.f32 %v2718, %v245
  %v2721 = vadd.f32 %v2719, 1e-05
  %v2722 = vadd.f32 %v2720, 1e-05
  %v2723 = vrsqrt.pop %v2721
  %v2724 = vrsqrt.pop %v2722
  %v2725 = vmul.f32 %v2709, %v2723
  %v2726 = vmul.f32 %v2710, %v2724
  %v2727 = vld [vmem:[%s49] sm:$0x1]
  %v2729 = vlaneseq
  %v2730 = vshrl.u32 %v2729, 7
  %v2731 = vsub.s32 0, %v2730
  %v2732 = vrot.slane %v2727, %v2731
  %v2734 = vmul.f32 %v2725, %v2732
  %v2735 = vmul.f32 %v2726, %v2732
  %v2736 = vld [vmem:[%s51] sm:$0x1]
  %v2738 = vlaneseq
  %v2739 = vshrl.u32 %v2738, 7
  %v2740 = vsub.s32 0, %v2739
  %v2741 = vrot.slane %v2736, %v2740
  %v2743 = vadd.f32 %v2734, %v2741
  %v2744 = vadd.f32 %v2735, %v2741
  %v2745 = vpack.c.bf16 %v2744, %v2743
  %v2746 = vld [vmem:[%s53] sm:$0xf]
  %v2747 = vld [vmem:[%s53 + $0x4] sm:$0xf]
  %v2748 = vld [vmem:[%s53 + $0x8] sm:$0xf]
  %v2749 = vld [vmem:[%s53 + $0xc] sm:$0xf]
  %v2750 = vld [vmem:[%s55] sm:$0x1]
  %v2752 = vlaneseq
  %v2753 = vshrl.u32 %v2752, 7
  %v2754 = vsub.s32 0, %v2753
  %v2755 = vrot.slane %v2750, %v2754
  %v2761 = vunpack.c.l.b16 %v2746
  %v2762 = vunpack.c.l.b16 %v2747
  %v2763 = vunpack.c.l.b16 %v2748
  %v2764 = vunpack.c.l.b16 %v2749
  %v2765 = vpack.c.b16 %v2762, %v2761
  %v2766 = vpack.c.b16 %v2764, %v2763
  %v2770 = vsel %vm238, %v2745, 0
  %2772 = vmatprep.subr.bf16.mxu0 0
  %2773 = vmatpush1.bf16.msra.mxu0 %v2765
  %2774 = vmatprep.subr.bf16.mxu0 0
  %2775 = vmatpush1.bf16.msra.mxu0 %v2766
  %2776 = vmatprep.subr.bf16.mxu0 0
  %2777 = vmatpush1.bf16.msra.mxu0 0
  %2778 = vmatprep.subr.bf16.mxu0 0
  %2779 = vmatpush1.bf16.msra.mxu0 0
  %2780 = vmatprep.subr.bf16.mxu0 0
  %2781 = vmatpush1.bf16.msra.mxu0 0
  %2782 = vmatprep.subr.bf16.mxu0 0
  %2783 = vmatpush1.bf16.msra.mxu0 0
  %2784 = vmatprep.subr.bf16.mxu0 0
  %2785 = vmatpush1.bf16.msra.mxu0 0
  %2786 = vmatprep.subr.bf16.mxu0 0
  %2787 = vmatpush1.bf16.msra.mxu0 0
  %2788 = vmatprep.subr.bf16.mxu0 0
  %2789 = vmatpush1.bf16.msra.mxu0 0
  %2790 = vmatprep.subr.bf16.mxu0 0
  %2791 = vmatpush1.bf16.msra.mxu0 0
  %2792 = vmatprep.subr.bf16.mxu0 0
  %2793 = vmatpush1.bf16.msra.mxu0 0
  %2794 = vmatprep.subr.bf16.mxu0 0
  %2795 = vmatpush1.bf16.msra.mxu0 0
  %2796 = vmatprep.subr.bf16.mxu0 0
  %2797 = vmatpush1.bf16.msra.mxu0 0
  %2798 = vmatprep.subr.bf16.mxu0 0
  %2799 = vmatpush1.bf16.msra.mxu0 0
  %2800 = vmatprep.subr.bf16.mxu0 0
  %2801 = vmatpush1.bf16.msra.mxu0 0
  %2802 = vmatprep.subr.bf16.mxu0 0
  %2803 = vmatpush1.bf16.msra.mxu0 0
  %2804 = vmatprep.mubr.bf16.mxu0 0
  %2805 = vmatmul.mubr.bf16.gmra.mrb[0].mxu0 %v2770
  %v2806 = vpop.f32.mrb[0].mxu0
  %v2807 = vadd.f32 %v2755, %v2806
  %v2808 = vpop.f32.mrb[0].mxu0
  %v2809 = vpop.f32.mrb[0].mxu0
  %v2810 = vadd.f32 %v2755, %v2809
  %v2811 = vpop.f32.mrb[0].mxu0
  %2812 = vdwg.mxu0
  %v2813 = vmul.f32 %v2807, 0.5
  %v2814 = vmul.f32 %v2810, 0.5
  %v2815 = vmul.f32 %v2807, 0.044715
  %v2816 = vmul.f32 %v2810, 0.044715
  %v2817 = vmul.f32 %v2815, %v2807
  %v2818 = vmul.f32 %v2816, %v2810
  %v2819 = vmul.f32 %v2817, %v2807
  %v2820 = vmul.f32 %v2818, %v2810
  %v2821 = vadd.f32 %v2807, %v2819
  %v2822 = vadd.f32 %v2810, %v2820
  %v2823 = vmul.f32 %v2821, 0.7978846
  %v2824 = vmul.f32 %v2822, 0.7978846
  %v2825 = vtanh.pop %v2823
  %v2826 = vtanh.pop %v2824
  %v2827 = vadd.f32 %v2825, 1.0
  %v2828 = vadd.f32 %v2826, 1.0
  %v2829 = vmul.f32 %v2813, %v2827
  %v2830 = vmul.f32 %v2814, %v2828
  %v2831 = vpack.c.bf16 %v2830, %v2829
  %v2832 = vld [vmem:[%s57] sm:$0xf]
  %v2833 = vld [vmem:[%s57 + $0x4] sm:$0xf]
  %v2834 = vld [vmem:[%s57 + $0x8] sm:$0xf]
  %v2835 = vld [vmem:[%s57 + $0xc] sm:$0xf]
  %v2836 = vld [vmem:[%s57 + $0x10] sm:$0xf]
  %v2837 = vld [vmem:[%s57 + $0x14] sm:$0xf]
  %v2838 = vld [vmem:[%s57 + $0x18] sm:$0xf]
  %v2839 = vld [vmem:[%s57 + $0x1c] sm:$0xf]
  %v2840 = vld [vmem:[%s57 + $0x20] sm:$0xf]
  %v2841 = vld [vmem:[%s57 + $0x24] sm:$0xf]
  %v2842 = vld [vmem:[%s57 + $0x28] sm:$0xf]
  %v2843 = vld [vmem:[%s57 + $0x2c] sm:$0xf]
  %v2844 = vld [vmem:[%s57 + $0x30] sm:$0xf]
  %v2845 = vld [vmem:[%s57 + $0x34] sm:$0xf]
  %v2846 = vld [vmem:[%s57 + $0x38] sm:$0xf]
  %v2847 = vld [vmem:[%s57 + $0x3c] sm:$0xf]
  %v2848 = vld [vmem:[%s59] sm:$0x1]
  %v2850 = vlaneseq
  %v2851 = vshrl.u32 %v2850, 7
  %v2852 = vsub.s32 0, %v2851
  %v2853 = vrot.slane %v2848, %v2852
  %v2871 = vunpack.c.l.b16 %v2832
  %v2872 = vunpack.c.l.b16 %v2833
  %v2873 = vunpack.c.l.b16 %v2834
  %v2874 = vunpack.c.l.b16 %v2835
  %v2875 = vunpack.c.l.b16 %v2836
  %v2876 = vunpack.c.l.b16 %v2837
  %v2877 = vunpack.c.l.b16 %v2838
  %v2878 = vunpack.c.l.b16 %v2839
  %v2879 = vunpack.c.l.b16 %v2840
  %v2880 = vunpack.c.l.b16 %v2841
  %v2881 = vunpack.c.l.b16 %v2842
  %v2882 = vunpack.c.l.b16 %v2843
  %v2883 = vunpack.c.l.b16 %v2844
  %v2884 = vunpack.c.l.b16 %v2845
  %v2885 = vunpack.c.l.b16 %v2846
  %v2886 = vunpack.c.l.b16 %v2847
  %v2887 = vpack.c.b16 %v2872, %v2871
  %v2888 = vpack.c.b16 %v2874, %v2873
  %v2889 = vpack.c.b16 %v2876, %v2875
  %v2890 = vpack.c.b16 %v2878, %v2877
  %v2891 = vpack.c.b16 %v2880, %v2879
  %v2892 = vpack.c.b16 %v2882, %v2881
  %v2893 = vpack.c.b16 %v2884, %v2883
  %v2894 = vpack.c.b16 %v2886, %v2885
  %2903 = vmatprep.subr.bf16.mxu0 0
  %2904 = vmatpush1.bf16.msra.mxu0 %v2887
  %2905 = vmatprep.subr.bf16.mxu0 0
  %2906 = vmatpush1.bf16.msra.mxu0 %v2888
  %2907 = vmatprep.subr.bf16.mxu0 0
  %2908 = vmatpush1.bf16.msra.mxu0 %v2889
  %2909 = vmatprep.subr.bf16.mxu0 0
  %2910 = vmatpush1.bf16.msra.mxu0 %v2890
  %2911 = vmatprep.subr.bf16.mxu0 0
  %2912 = vmatpush1.bf16.msra.mxu0 %v2891
  %2913 = vmatprep.subr.bf16.mxu0 0
  %2914 = vmatpush1.bf16.msra.mxu0 %v2892
  %2915 = vmatprep.subr.bf16.mxu0 0
  %2916 = vmatpush1.bf16.msra.mxu0 %v2893
  %2917 = vmatprep.subr.bf16.mxu0 0
  %2918 = vmatpush1.bf16.msra.mxu0 %v2894
  %2919 = vmatprep.subr.bf16.mxu0 0
  %2920 = vmatpush1.bf16.msra.mxu0 0
  %2921 = vmatprep.subr.bf16.mxu0 0
  %2922 = vmatpush1.bf16.msra.mxu0 0
  %2923 = vmatprep.subr.bf16.mxu0 0
  %2924 = vmatpush1.bf16.msra.mxu0 0
  %2925 = vmatprep.subr.bf16.mxu0 0
  %2926 = vmatpush1.bf16.msra.mxu0 0
  %2927 = vmatprep.subr.bf16.mxu0 0
  %2928 = vmatpush1.bf16.msra.mxu0 0
  %2929 = vmatprep.subr.bf16.mxu0 0
  %2930 = vmatpush1.bf16.msra.mxu0 0
  %2931 = vmatprep.subr.bf16.mxu0 0
  %2932 = vmatpush1.bf16.msra.mxu0 0
  %2933 = vmatprep.subr.bf16.mxu0 0
  %2934 = vmatpush1.bf16.msra.mxu0 0
  %2935 = vmatprep.mubr.bf16.mxu0 0
  %2936 = vmatmul.mubr.bf16.gmra.mrb[0].mxu0 %v2831
  %v2937 = vpop.f32.mrb[0].mxu0
  %v2938 = vadd.f32 %v2853, %v2937
  %v2939 = vpop.f32.mrb[0].mxu0
  %v2940 = vpop.f32.mrb[0].mxu0
  %v2941 = vadd.f32 %v2853, %v2940
  %v2942 = vpop.f32.mrb[0].mxu0
  %2943 = vdwg.mxu0
  %v2944 = vadd.f32 %v2699, %v2938
  %v2945 = vadd.f32 %v2700, %v2941
  %v2946 = vsel %vm238, %v2944, 0.0
  %2947 = vadd.xlane.f32.xlu0 %v2946
  %v2948 = vpop.xlane.xlu0 %2947
  %v2949 = vsel %vm238, %v2945, 0.0
  %2950 = vadd.xlane.f32.xlu0 %v2949
  %v2951 = vpop.xlane.xlu0 %2950
  %v2952 = vmul.f32 %v2948, %v245
  %v2953 = vmul.f32 %v2951, %v245
  %v2954 = vsub.f32 %v2944, %v2952
  %v2955 = vsub.f32 %v2945, %v2953
  %v2956 = vmul.f32 %v2954, %v2954
  %v2957 = vmul.f32 %v2955, %v2955
  %v2958 = vsel %vm238, %v2956, 0.0
  %2959 = vadd.xlane.f32.xlu0 %v2958
  %v2960 = vpop.xlane.xlu0 %2959
  %v2961 = vsel %vm238, %v2957, 0.0
  %2962 = vadd.xlane.f32.xlu0 %v2961
  %v2963 = vpop.xlane.xlu0 %2962
  %v2964 = vmul.f32 %v2960, %v245
  %v2965 = vmul.f32 %v2963, %v245
  %v2966 = vadd.f32 %v2964, 1e-05
  %v2967 = vadd.f32 %v2965, 1e-05
  %v2968 = vrsqrt.pop %v2966
  %v2969 = vrsqrt.pop %v2967
  %v2970 = vmul.f32 %v2954, %v2968
  %v2971 = vmul.f32 %v2955, %v2969
  %v2972 = vld [vmem:[%s9] sm:$0x1]
  %v2974 = vlaneseq
  %v2975 = vshrl.u32 %v2974, 7
  %v2976 = vsub.s32 0, %v2975
  %v2977 = vrot.slane %v2972, %v2976
  %v2979 = vmul.f32 %v2970, %v2977
  %v2980 = vmul.f32 %v2971, %v2977
  %v2981 = vld [vmem:[%s11] sm:$0x1]
  %v2983 = vlaneseq
  %v2984 = vshrl.u32 %v2983, 7
  %v2985 = vsub.s32 0, %v2984
  %v2986 = vrot.slane %v2981, %v2985
  %v2988 = vadd.f32 %v2979, %v2986
  %v2989 = vadd.f32 %v2980, %v2986
  %v2990 = vpack.c.bf16 %v2989, %v2988
  %v2991 = vld [vmem:[%s5] sm:$0xf]
  %v2992 = vld [vmem:[%s5 + $0x4] sm:$0xf]
  %v2993 = vld [vmem:[%s5 + $0x8] sm:$0xf]
  %v2994 = vld [vmem:[%s5 + $0xc] sm:$0xf]
  %v2999 = vunpack.c.l.b16 %v2991
  %v3000 = vunpack.c.l.b16 %v2992
  %v3001 = vunpack.c.l.b16 %v2993
  %v3002 = vunpack.c.l.b16 %v2994
  %v3003 = vpack.c.b16 %v3000, %v2999
  %v3004 = vpack.c.b16 %v3002, %v3001
  %v3008 = vsel %vm238, %v2990, 0
  %3010 = vmatprep.subr.bf16.mxu0 0
  %3011 = vmatpush1.bf16.msra.mxu0 %v3003
  %3012 = vmatprep.subr.bf16.mxu0 0
  %3013 = vmatpush1.bf16.msra.mxu0 %v3004
  %3014 = vmatprep.subr.bf16.mxu0 0
  %3015 = vmatpush1.bf16.msra.mxu0 0
  %3016 = vmatprep.subr.bf16.mxu0 0
  %3017 = vmatpush1.bf16.msra.mxu0 0
  %3018 = vmatprep.subr.bf16.mxu0 0
  %3019 = vmatpush1.bf16.msra.mxu0 0
  %3020 = vmatprep.subr.bf16.mxu0 0
  %3021 = vmatpush1.bf16.msra.mxu0 0
  %3022 = vmatprep.subr.bf16.mxu0 0
  %3023 = vmatpush1.bf16.msra.mxu0 0
  %3024 = vmatprep.subr.bf16.mxu0 0
  %3025 = vmatpush1.bf16.msra.mxu0 0
  %3026 = vmatprep.subr.bf16.mxu0 0
  %3027 = vmatpush1.bf16.msra.mxu0 0
  %3028 = vmatprep.subr.bf16.mxu0 0
  %3029 = vmatpush1.bf16.msra.mxu0 0
  %3030 = vmatprep.subr.bf16.mxu0 0
  %3031 = vmatpush1.bf16.msra.mxu0 0
  %3032 = vmatprep.subr.bf16.mxu0 0
  %3033 = vmatpush1.bf16.msra.mxu0 0
  %3034 = vmatprep.subr.bf16.mxu0 0
  %3035 = vmatpush1.bf16.msra.mxu0 0
  %3036 = vmatprep.subr.bf16.mxu0 0
  %3037 = vmatpush1.bf16.msra.mxu0 0
  %3038 = vmatprep.subr.bf16.mxu0 0
  %3039 = vmatpush1.bf16.msra.mxu0 0
  %3040 = vmatprep.subr.bf16.mxu0 0
  %3041 = vmatpush1.bf16.msra.mxu0 0
  %3042 = vmatprep.mubr.bf16.mxu0 0
  %3043 = vmatmul.mubr.bf16.gmra.mrb[0].mxu0 %v3008
  %v3044 = vpop.f32.mrb[0].mxu0
  %v3045 = vadd.f32 0.0, %v3044
  %v3046 = vpop.f32.mrb[0].mxu0
  %v3047 = vpop.f32.mrb[0].mxu0
  %v3048 = vadd.f32 0.0, %v3047
  %v3049 = vpop.f32.mrb[0].mxu0
  %3050 = vdwg.mxu0
  %3051 = vst [vmem:[%s61] sm:$0xff] %v3045
  %3052 = vst [vmem:[%s61 + $0x8] sm:$0xff] %v3048
  // Predicated region
  $region122: #{gpt2_forward.1} parent=0 // pred_check
    _
  $region123: #{gpt2_forward.1} parent=0 // pred_check_branch
    %3054 = sbr.rel (0) target = $region125
  $region124: #{gpt2_forward.1} parent=0 // pred_region
    _
  $region125: #{gpt2_forward.1} parent=0 // pred_fallthru
    _
  // Predicated region
  $region126: #{gpt2_forward.1} parent=0 // pred_check
    _
  $region127: #{gpt2_forward.1} parent=0 // pred_check_branch
    %3056 = sbr.rel (0) target = $region129
  $region128: #{gpt2_forward.1} parent=0 // pred_region
    _
  $region129: #{gpt2_forward.1} parent=0 // pred_fallthru
    _

</llo_original>
